<compile_context>
chip_gen: v6e
topology: v6e:2x2x1
jax: 0.10.0
libtpu: 0.0.40
codegen_flags: <defaults>
</compile_context>

<pallas_src>
import functools

import jax
import jax.numpy as jnp
from jax.experimental import pallas as pl
from jax.experimental.pallas import tpu as pltpu


def _sir_kernel(x_ref, h_ref, rand_ref, beta_ref, gamma_ref,
                pathogen_ref, state_ref, carry_ref, *, chunk):
    c = pl.program_id(0)
    beta = beta_ref[...]                       # (1, N)
    gamma = gamma_ref[...]                     # (1, N)

    def step(k, carry):
        t = c * chunk + k                      # global timestep

        @pl.when(t == 0)
        def _init():
            x = x_ref[...]                     # (3, N) one-hot initial states
            carry_ref[0:3, :] = x              # rows 0..2: ps, pi, pr
            carry_ref[3:6, :] = x              # rows 3..5: S, I, R one-hot
            pathogen_ref[0] = x
            state_ref[0] = x

        @pl.when(t > 0)
        def _step():
            h_t = h_ref[k]                     # (E, N) bf16, equals H[t-1]
            ps = carry_ref[0:1, :]
            pi = carry_ref[1:2, :]
            pr = carry_ref[2:3, :]
            ss = carry_ref[3:4, :]
            si = carry_ref[4:5, :]             # previous one-hot infected

            # new_cases = beta * (H_t.T @ (H_t @ I_prev))   (row-vector form, MXU)
            i_bf = si.astype(jnp.bfloat16)
            t1 = jax.lax.dot_general(i_bf, h_t, (((1,), (1,)), ((), ())),
                                     preferred_element_type=jnp.float32)   # (1, E)
            t2 = jax.lax.dot_general(t1.astype(jnp.bfloat16), h_t,
                                     (((1,), (0,)), ((), ())),
                                     preferred_element_type=jnp.float32)   # (1, N)
            new_cases = beta * t2
            new_recovery = gamma * si

            ps_n = jnp.clip(ps - new_cases, 0.0, 1.0)
            pi_n = jnp.clip(pi + new_cases - new_recovery, 0.0, 1.0)
            pr_n = jnp.clip(pr + new_recovery, 0.0, 1.0)

            # stochastic state transitions (two iid uniform draws per node/step)
            r = rand_ref[k]                    # (2, N)
            r1 = r[0:1, :]
            r2 = r[1:2, :]
            prev_s = ss > 0.5
            prev_i = si > 0.5
            s_to_i = prev_s & (r1 < pi_n)
            i_rec = prev_i & (r1 < pr_n)
            coin = r2 < 0.5
            i_to_r = i_rec & coin
            i_to_s = i_rec & jnp.logical_not(coin)
            i_stay = prev_i & jnp.logical_not(i_rec)
            new_s = (prev_s & jnp.logical_not(s_to_i)) | i_to_s
            new_i = s_to_i | i_stay
            new_r = i_to_r | (jnp.logical_not(prev_s) & jnp.logical_not(prev_i))

            # carry to next timestep (single merged (8, N) scratch)
            carry_ref[0:1, :] = ps_n
            carry_ref[1:2, :] = pi_n
            carry_ref[2:3, :] = pr_n
            carry_ref[3:4, :] = new_s.astype(jnp.float32)
            carry_ref[4:5, :] = new_i.astype(jnp.float32)
            carry_ref[5:6, :] = new_r.astype(jnp.float32)

            # lane-dense slab stores into the per-chunk output blocks
            pathogen_ref[k] = carry_ref[0:3, :]
            state_ref[k] = carry_ref[3:6, :]

        return carry

    if chunk <= 8:
        # fully unrolled at trace time -> static in-block indices
        for k in range(chunk):
            step(k, 0)
    else:
        jax.lax.fori_loop(0, chunk, step, 0, unroll=8)


def _round_up(v, m):
    return ((v + m - 1) // m) * m


def dynamic_hypernet_sir(x, H, rand_u, beta, gamma, steps):
    """x: (N, 3) one-hot, H: (steps-1, E, N), rand_u: (steps, 2, N),
    beta/gamma: (N,).  Returns (pathogen, state), each of shape (steps, N, 3)."""
    N = x.shape[0]
    E = H.shape[1]

    n_pad = _round_up(max(N, 1), 128)          # lane-dense node axis
    e_pad = _round_up(max(E, 1), 16)           # bf16 sublane tile

    # choose K timesteps per grid iteration against a conservative VMEM budget
    # (double-buffered H/rand/output chunks), safe for v7x's 64 MiB VMEM too.
    vmem_budget = 16 * 1024 * 1024
    per_step = 2 * (e_pad * n_pad * 2          # H chunk (bf16), double-buffered
                    + 2 * n_pad * 4            # rand chunk (f32)
                    + 2 * 3 * n_pad * 4)       # two f32 output chunks
    chunk = int(max(1, min(steps, min(64, vmem_budget // max(per_step, 1)))))
    steps_pad = _round_up(steps, chunk)

    x_t = jnp.zeros((3, n_pad), jnp.float32).at[:, :N].set(x.T.astype(jnp.float32))
    # h_pad[t] == H[t-1] for t >= 1; row 0 and the padded tail are zeros.
    h_pad = jnp.zeros((steps_pad, e_pad, n_pad), jnp.bfloat16)
    h_pad = h_pad.at[1:steps, :E, :N].set(H.astype(jnp.bfloat16))
    rand_p = jnp.zeros((steps_pad, 2, n_pad), jnp.float32)
    rand_p = rand_p.at[:steps, :, :N].set(rand_u.astype(jnp.float32))
    beta2 = jnp.zeros((1, n_pad), jnp.float32).at[0, :N].set(beta.astype(jnp.float32))
    gamma2 = jnp.zeros((1, n_pad), jnp.float32).at[0, :N].set(gamma.astype(jnp.float32))

    grid_spec = pltpu.PrefetchScalarGridSpec(
        num_scalar_prefetch=0,
        grid=(steps_pad // chunk,),
        in_specs=[
            pl.BlockSpec((3, n_pad), lambda c: (0, 0)),                   # x
            pl.BlockSpec((chunk, e_pad, n_pad), lambda c: (c, 0, 0)),     # H chunk
            pl.BlockSpec((chunk, 2, n_pad), lambda c: (c, 0, 0)),         # rand chunk
            pl.BlockSpec((1, n_pad), lambda c: (0, 0)),                   # beta
            pl.BlockSpec((1, n_pad), lambda c: (0, 0)),                   # gamma
        ],
        out_specs=[
            pl.BlockSpec((chunk, 3, n_pad), lambda c: (c, 0, 0)),         # pathogen
            pl.BlockSpec((chunk, 3, n_pad), lambda c: (c, 0, 0)),         # state
        ],
        scratch_shapes=[pltpu.VMEM((8, n_pad), jnp.float32)],             # merged carry
    )

    cost = pl.CostEstimate(
        flops=int(2 * 2 * steps_pad * e_pad * n_pad),
        transcendentals=0,
        bytes_accessed=int(h_pad.size * 2 + rand_p.size * 4
                           + 2 * steps_pad * 3 * n_pad * 4
                           + (3 + 2) * n_pad * 4),
    )

    pathogen_t, state_t = pl.pallas_call(
        functools.partial(_sir_kernel, chunk=chunk),
        out_shape=(jax.ShapeDtypeStruct((steps_pad, 3, n_pad), jnp.float32),
                   jax.ShapeDtypeStruct((steps_pad, 3, n_pad), jnp.float32)),
        grid_spec=grid_spec,
        compiler_params=pltpu.CompilerParams(
            dimension_semantics=("arbitrary",),        # time recurrence is sequential
            vmem_limit_bytes=32 * 1024 * 1024),
        cost_estimate=cost,
    )(x_t, h_pad, rand_p, beta2, gamma2)

    # slice off padding, back to PyTorch convention (steps, num_nodes, 3)
    pathogen = jnp.transpose(pathogen_t[:steps, :, :N], (0, 2, 1))
    state = jnp.transpose(state_t[:steps, :, :N], (0, 2, 1))
    return pathogen, state


if __name__ == "__main__":
    key = jax.random.PRNGKey(0)
    N, E, steps = 16, 8, 8                               # num_nodes, hyperedges, horizon

    k1, k2, k3 = jax.random.split(key, 3)
    infected = jax.random.uniform(k1, (N,)) < 0.25
    x = jnp.where(infected[:, None],
                  jnp.array([0.0, 1.0, 0.0], jnp.float32),
                  jnp.array([1.0, 0.0, 0.0], jnp.float32))          # (N, 3) one-hot
    H = (jax.random.uniform(k2, (steps - 1, E, N)) < 0.3).astype(jnp.float32)
    rand_u = jax.random.uniform(k3, (steps, 2, N), dtype=jnp.float32)

    # deterministic parameters, matching the module's __init__ defaults
    beta = jnp.full((N,), 0.01, dtype=jnp.float32)       # infection_rate
    gamma = jnp.full((N,), 0.038, dtype=jnp.float32)     # recovery_rate

    pathogen, state = dynamic_hypernet_sir(x, H, rand_u, beta, gamma, steps)
    jax.block_until_ready((pathogen, state))

    assert pathogen.shape == (steps, N, 3) and state.shape == (steps, N, 3)
    # every state row must be one-hot (sums to 1), as asserted in the reference
    assert bool(jnp.all(jnp.abs(state.sum(axis=-1) - 1.0) < 1e-6))
    # probabilities must stay in [0, 1] (clamped as in the reference)
    assert bool(jnp.all((pathogen >= 0.0) & (pathogen <= 1.0)))
    print("KERNEL_OK")
</pallas_src>

<mosaic_0001>
module attributes {stable_mosaic.version = 11 : i64} {
  func.func @_sir_kernel(%arg0: i32, %arg1: memref<3x128xf32, #tpu.memory_space<vmem>>, %arg2: memref<8x16x128xbf16, #tpu.memory_space<vmem>>, %arg3: memref<8x2x128xf32, #tpu.memory_space<vmem>>, %arg4: memref<1x128xf32, #tpu.memory_space<vmem>>, %arg5: memref<1x128xf32, #tpu.memory_space<vmem>>, %arg6: memref<8x3x128xf32, #tpu.memory_space<vmem>>, %arg7: memref<8x3x128xf32, #tpu.memory_space<vmem>>, %arg8: memref<8x128xf32, #tpu.memory_space<vmem>>) attributes {dimension_semantics = [#tpu.dimension_semantics<arbitrary>], iteration_bounds = array<i64: 1>, scalar_prefetch = 0 : i64, scratch_operands = 1 : i64, tpu.core_type = #tpu.core_type<tc>, window_params = [{pipeline_mode = #tpu.pipeline_mode<synchronous>, transform_indices = @transform_0, window_bounds = array<i64: 3, 128>}, {transform_indices = @transform_1, window_bounds = array<i64: 8, 16, 128>}, {transform_indices = @transform_2, window_bounds = array<i64: 8, 2, 128>}, {pipeline_mode = #tpu.pipeline_mode<synchronous>, transform_indices = @transform_3, window_bounds = array<i64: 1, 128>}, {pipeline_mode = #tpu.pipeline_mode<synchronous>, transform_indices = @transform_4, window_bounds = array<i64: 1, 128>}, {transform_indices = @transform_5, window_bounds = array<i64: 8, 3, 128>}, {transform_indices = @transform_6, window_bounds = array<i64: 8, 3, 128>}]} {
    %c0 = arith.constant 0 : index
    %c0_0 = arith.constant 0 : index
    %0 = vector.load %arg4[%c0, %c0_0] : memref<1x128xf32, #tpu.memory_space<vmem>>, vector<1x128xf32>
    %c0_1 = arith.constant 0 : index
    %c0_2 = arith.constant 0 : index
    %1 = vector.load %arg5[%c0_1, %c0_2] : memref<1x128xf32, #tpu.memory_space<vmem>>, vector<1x128xf32>
    %c8_i32 = arith.constant 8 : i32
    %2 = arith.muli %arg0, %c8_i32 : i32
    %c0_i32 = arith.constant 0 : i32
    %3 = arith.addi %2, %c0_i32 : i32
    %c0_i32_3 = arith.constant 0 : i32
    %4 = arith.cmpi eq, %3, %c0_i32_3 : i32
    %5 = arith.extui %4 : i1 to i32
    %c0_i32_4 = arith.constant 0 : i32
    %6 = arith.cmpi ne, %5, %c0_i32_4 : i32
    scf.if %6 {
      %c0_42 = arith.constant 0 : index
      %c0_43 = arith.constant 0 : index
      %66 = vector.load %arg1[%c0_42, %c0_43] : memref<3x128xf32, #tpu.memory_space<vmem>>, vector<3x128xf32>
      %c0_44 = arith.constant 0 : index
      %c0_45 = arith.constant 0 : index
      %67 = vector.load %arg8[%c0_44, %c0_45] : memref<8x128xf32, #tpu.memory_space<vmem>>, vector<3x128xf32>
      tpu.vector_store %arg8[%c0_44, %c0_45], %66 {strides = array<i32>} : memref<8x128xf32, #tpu.memory_space<vmem>>, vector<3x128xf32>,
      %c3 = arith.constant 3 : index
      %c0_46 = arith.constant 0 : index
      %68 = vector.load %arg8[%c3, %c0_46] : memref<8x128xf32, #tpu.memory_space<vmem>>, vector<3x128xf32>
      tpu.vector_store %arg8[%c3, %c0_46], %66 {strides = array<i32>} : memref<8x128xf32, #tpu.memory_space<vmem>>, vector<3x128xf32>,
      %c0_47 = arith.constant 0 : index
      %c0_48 = arith.constant 0 : index
      %c0_49 = arith.constant 0 : index
      %69 = vector.load %arg6[%c0_47, %c0_48, %c0_49] : memref<8x3x128xf32, #tpu.memory_space<vmem>>, vector<1x3x128xf32>
      %70 = vector.shape_cast %69 : vector<1x3x128xf32> to vector<3x128xf32>
      %71 = vector.shape_cast %66 : vector<3x128xf32> to vector<1x3x128xf32>
      tpu.vector_store %arg6[%c0_47, %c0_48, %c0_49], %71 {strides = array<i32>} : memref<8x3x128xf32, #tpu.memory_space<vmem>>, vector<1x3x128xf32>,
      %c0_50 = arith.constant 0 : index
      %c0_51 = arith.constant 0 : index
      %c0_52 = arith.constant 0 : index
      %72 = vector.load %arg7[%c0_50, %c0_51, %c0_52] : memref<8x3x128xf32, #tpu.memory_space<vmem>>, vector<1x3x128xf32>
      %73 = vector.shape_cast %72 : vector<1x3x128xf32> to vector<3x128xf32>
      %74 = vector.shape_cast %66 : vector<3x128xf32> to vector<1x3x128xf32>
      tpu.vector_store %arg7[%c0_50, %c0_51, %c0_52], %74 {strides = array<i32>} : memref<8x3x128xf32, #tpu.memory_space<vmem>>, vector<1x3x128xf32>,
    } else {
    }
    %c0_i32_5 = arith.constant 0 : i32
    %7 = arith.cmpi sgt, %3, %c0_i32_5 : i32
    %8 = arith.extui %7 : i1 to i32
    %c0_i32_6 = arith.constant 0 : i32
    %9 = arith.cmpi ne, %8, %c0_i32_6 : i32
    scf.if %9 {
      %c0_42 = arith.constant 0 : index
      %c0_43 = arith.constant 0 : index
      %c0_44 = arith.constant 0 : index
      %66 = vector.load %arg2[%c0_42, %c0_43, %c0_44] : memref<8x16x128xbf16, #tpu.memory_space<vmem>>, vector<1x16x128xbf16>
      %67 = vector.shape_cast %66 : vector<1x16x128xbf16> to vector<16x128xbf16>
      %c0_45 = arith.constant 0 : index
      %c0_46 = arith.constant 0 : index
      %68 = vector.load %arg8[%c0_45, %c0_46] : memref<8x128xf32, #tpu.memory_space<vmem>>, vector<1x128xf32>
      %c1 = arith.constant 1 : index
      %c0_47 = arith.constant 0 : index
      %69 = vector.load %arg8[%c1, %c0_47] : memref<8x128xf32, #tpu.memory_space<vmem>>, vector<1x128xf32>
      %c2 = arith.constant 2 : index
      %c0_48 = arith.constant 0 : index
      %70 = vector.load %arg8[%c2, %c0_48] : memref<8x128xf32, #tpu.memory_space<vmem>>, vector<1x128xf32>
      %c3 = arith.constant 3 : index
      %c0_49 = arith.constant 0 : index
      %71 = vector.load %arg8[%c3, %c0_49] : memref<8x128xf32, #tpu.memory_space<vmem>>, vector<1x128xf32>
      %c4 = arith.constant 4 : index
      %c0_50 = arith.constant 0 : index
      %72 = vector.load %arg8[%c4, %c0_50] : memref<8x128xf32, #tpu.memory_space<vmem>>, vector<1x128xf32>
      %73 = arith.truncf %72 : vector<1x128xf32> to vector<1x128xbf16>
      %cst = arith.constant dense<0.000000e+00> : vector<1x16xf32>
      %74 = tpu.matmul %73, %67, %cst {dimension_numbers = #tpu.dot_dimension_numbers<[1], [1], [0], [0], [0, 0, 1, 0], [], []>} : vector<1x128xbf16>, vector<16x128xbf16>, vector<1x16xf32> -> vector<1x16xf32>
      %75 = arith.truncf %74 : vector<1x16xf32> to vector<1x16xbf16>
      %cst_51 = arith.constant dense<0.000000e+00> : vector<1x128xf32>
      %76 = tpu.matmul %75, %67, %cst_51 {dimension_numbers = #tpu.dot_dimension_numbers<[1], [0], [0], [1], [0, 0, 1, 1], [], []>} : vector<1x16xbf16>, vector<16x128xbf16>, vector<1x128xf32> -> vector<1x128xf32>
      %77 = arith.mulf %0, %76 : vector<1x128xf32>
      %78 = arith.mulf %1, %72 : vector<1x128xf32>
      %79 = arith.subf %68, %77 : vector<1x128xf32>
      %cst_52 = arith.constant 0.000000e+00 : f32
      %cst_53 = arith.constant 1.000000e+00 : f32
      %80 = vector.broadcast %cst_52 : f32 to vector<1x128xf32>
      %81 = arith.maximumf %80, %79 : vector<1x128xf32>
      %82 = vector.broadcast %cst_53 : f32 to vector<1x128xf32>
      %83 = arith.minimumf %82, %81 : vector<1x128xf32>
      %84 = arith.addf %69, %77 : vector<1x128xf32>
      %85 = arith.subf %84, %78 : vector<1x128xf32>
      %cst_54 = arith.constant 0.000000e+00 : f32
      %cst_55 = arith.constant 1.000000e+00 : f32
      %86 = vector.broadcast %cst_54 : f32 to vector<1x128xf32>
      %87 = arith.maximumf %86, %85 : vector<1x128xf32>
      %88 = vector.broadcast %cst_55 : f32 to vector<1x128xf32>
      %89 = arith.minimumf %88, %87 : vector<1x128xf32>
      %90 = arith.addf %70, %78 : vector<1x128xf32>
      %cst_56 = arith.constant 0.000000e+00 : f32
      %cst_57 = arith.constant 1.000000e+00 : f32
      %91 = vector.broadcast %cst_56 : f32 to vector<1x128xf32>
      %92 = arith.maximumf %91, %90 : vector<1x128xf32>
      %93 = vector.broadcast %cst_57 : f32 to vector<1x128xf32>
      %94 = arith.minimumf %93, %92 : vector<1x128xf32>
      %c0_58 = arith.constant 0 : index
      %c0_59 = arith.constant 0 : index
      %c0_60 = arith.constant 0 : index
      %95 = vector.load %arg3[%c0_58, %c0_59, %c0_60] : memref<8x2x128xf32, #tpu.memory_space<vmem>>, vector<1x2x128xf32>
      %96 = vector.shape_cast %95 : vector<1x2x128xf32> to vector<2x128xf32>
      %97 = vector.extract_strided_slice %96 {offsets = [0, 0], sizes = [1, 128], strides = [1, 1]} : vector<2x128xf32> to vector<1x128xf32>
      %98 = vector.extract_strided_slice %96 {offsets = [1, 0], sizes = [1, 128], strides = [1, 1]} : vector<2x128xf32> to vector<1x128xf32>
      %cst_61 = arith.constant 5.000000e-01 : f32
      %99 = vector.broadcast %cst_61 : f32 to vector<1x128xf32>
      %100 = arith.cmpf ogt, %71, %99 : vector<1x128xf32>
      %cst_62 = arith.constant 5.000000e-01 : f32
      %101 = vector.broadcast %cst_62 : f32 to vector<1x128xf32>
      %102 = arith.cmpf ogt, %72, %101 : vector<1x128xf32>
      %103 = arith.cmpf olt, %97, %89 : vector<1x128xf32>
      %104 = arith.andi %100, %103 : vector<1x128xi1>
      %105 = arith.cmpf olt, %97, %94 : vector<1x128xf32>
      %106 = arith.andi %102, %105 : vector<1x128xi1>
      %cst_63 = arith.constant 5.000000e-01 : f32
      %107 = vector.broadcast %cst_63 : f32 to vector<1x128xf32>
      %108 = arith.cmpf olt, %98, %107 : vector<1x128xf32>
      %109 = arith.andi %106, %108 : vector<1x128xi1>
      %cst_64 = arith.constant dense<true> : vector<1x128xi1>
      %110 = arith.xori %108, %cst_64 : vector<1x128xi1>
      %111 = arith.andi %106, %110 : vector<1x128xi1>
      %cst_65 = arith.constant dense<true> : vector<1x128xi1>
      %112 = arith.xori %106, %cst_65 : vector<1x128xi1>
      %113 = arith.andi %102, %112 : vector<1x128xi1>
      %cst_66 = arith.constant dense<true> : vector<1x128xi1>
      %114 = arith.xori %104, %cst_66 : vector<1x128xi1>
      %115 = arith.andi %100, %114 : vector<1x128xi1>
      %116 = arith.ori %115, %111 : vector<1x128xi1>
      %117 = arith.ori %104, %113 : vector<1x128xi1>
      %cst_67 = arith.constant dense<true> : vector<1x128xi1>
      %118 = arith.xori %100, %cst_67 : vector<1x128xi1>
      %cst_68 = arith.constant dense<true> : vector<1x128xi1>
      %119 = arith.xori %102, %cst_68 : vector<1x128xi1>
      %120 = arith.andi %118, %119 : vector<1x128xi1>
      %121 = arith.ori %109, %120 : vector<1x128xi1>
      %c0_69 = arith.constant 0 : index
      %c0_70 = arith.constant 0 : index
      %122 = vector.load %arg8[%c0_69, %c0_70] : memref<8x128xf32, #tpu.memory_space<vmem>>, vector<1x128xf32>
      tpu.vector_store %arg8[%c0_69, %c0_70], %83 {strides = array<i32>} : memref<8x128xf32, #tpu.memory_space<vmem>>, vector<1x128xf32>,
      %c1_71 = arith.constant 1 : index
      %c0_72 = arith.constant 0 : index
      %123 = vector.load %arg8[%c1_71, %c0_72] : memref<8x128xf32, #tpu.memory_space<vmem>>, vector<1x128xf32>
      tpu.vector_store %arg8[%c1_71, %c0_72], %89 {strides = array<i32>} : memref<8x128xf32, #tpu.memory_space<vmem>>, vector<1x128xf32>,
      %c2_73 = arith.constant 2 : index
      %c0_74 = arith.constant 0 : index
      %124 = vector.load %arg8[%c2_73, %c0_74] : memref<8x128xf32, #tpu.memory_space<vmem>>, vector<1x128xf32>
      tpu.vector_store %arg8[%c2_73, %c0_74], %94 {strides = array<i32>} : memref<8x128xf32, #tpu.memory_space<vmem>>, vector<1x128xf32>,
      %125 = arith.extui %116 : vector<1x128xi1> to vector<1x128xi32>
      %126 = arith.sitofp %125 : vector<1x128xi32> to vector<1x128xf32>
      %c3_75 = arith.constant 3 : index
      %c0_76 = arith.constant 0 : index
      %127 = vector.load %arg8[%c3_75, %c0_76] : memref<8x128xf32, #tpu.memory_space<vmem>>, vector<1x128xf32>
      tpu.vector_store %arg8[%c3_75, %c0_76], %126 {strides = array<i32>} : memref<8x128xf32, #tpu.memory_space<vmem>>, vector<1x128xf32>,
      %128 = arith.extui %117 : vector<1x128xi1> to vector<1x128xi32>
      %129 = arith.sitofp %128 : vector<1x128xi32> to vector<1x128xf32>
      %c4_77 = arith.constant 4 : index
      %c0_78 = arith.constant 0 : index
      %130 = vector.load %arg8[%c4_77, %c0_78] : memref<8x128xf32, #tpu.memory_space<vmem>>, vector<1x128xf32>
      tpu.vector_store %arg8[%c4_77, %c0_78], %129 {strides = array<i32>} : memref<8x128xf32, #tpu.memory_space<vmem>>, vector<1x128xf32>,
      %131 = arith.extui %121 : vector<1x128xi1> to vector<1x128xi32>
      %132 = arith.sitofp %131 : vector<1x128xi32> to vector<1x128xf32>
      %c5 = arith.constant 5 : index
      %c0_79 = arith.constant 0 : index
      %133 = vector.load %arg8[%c5, %c0_79] : memref<8x128xf32, #tpu.memory_space<vmem>>, vector<1x128xf32>
      tpu.vector_store %arg8[%c5, %c0_79], %132 {strides = array<i32>} : memref<8x128xf32, #tpu.memory_space<vmem>>, vector<1x128xf32>,
      %c0_80 = arith.constant 0 : index
      %c0_81 = arith.constant 0 : index
      %134 = vector.load %arg8[%c0_80, %c0_81] : memref<8x128xf32, #tpu.memory_space<vmem>>, vector<3x128xf32>
      %c0_82 = arith.constant 0 : index
      %c0_83 = arith.constant 0 : index
      %c0_84 = arith.constant 0 : index
      %135 = vector.load %arg6[%c0_82, %c0_83, %c0_84] : memref<8x3x128xf32, #tpu.memory_space<vmem>>, vector<1x3x128xf32>
      %136 = vector.shape_cast %135 : vector<1x3x128xf32> to vector<3x128xf32>
      %137 = vector.shape_cast %134 : vector<3x128xf32> to vector<1x3x128xf32>
      tpu.vector_store %arg6[%c0_82, %c0_83, %c0_84], %137 {strides = array<i32>} : memref<8x3x128xf32, #tpu.memory_space<vmem>>, vector<1x3x128xf32>,
      %c3_85 = arith.constant 3 : index
      %c0_86 = arith.constant 0 : index
      %138 = vector.load %arg8[%c3_85, %c0_86] : memref<8x128xf32, #tpu.memory_space<vmem>>, vector<3x128xf32>
      %c0_87 = arith.constant 0 : index
      %c0_88 = arith.constant 0 : index
      %c0_89 = arith.constant 0 : index
      %139 = vector.load %arg7[%c0_87, %c0_88, %c0_89] : memref<8x3x128xf32, #tpu.memory_space<vmem>>, vector<1x3x128xf32>
      %140 = vector.shape_cast %139 : vector<1x3x128xf32> to vector<3x128xf32>
      %141 = vector.shape_cast %138 : vector<3x128xf32> to vector<1x3x128xf32>
      tpu.vector_store %arg7[%c0_87, %c0_88, %c0_89], %141 {strides = array<i32>} : memref<8x3x128xf32, #tpu.memory_space<vmem>>, vector<1x3x128xf32>,
    } else {
    }
    %c8_i32_7 = arith.constant 8 : i32
    %10 = arith.muli %arg0, %c8_i32_7 : i32
    %c1_i32 = arith.constant 1 : i32
    %11 = arith.addi %10, %c1_i32 : i32
    %c0_i32_8 = arith.constant 0 : i32
    %12 = arith.cmpi eq, %11, %c0_i32_8 : i32
    %13 = arith.extui %12 : i1 to i32
    %c0_i32_9 = arith.constant 0 : i32
    %14 = arith.cmpi ne, %13, %c0_i32_9 : i32
    scf.if %14 {
      %c0_42 = arith.constant 0 : index
      %c0_43 = arith.constant 0 : index
      %66 = vector.load %arg1[%c0_42, %c0_43] : memref<3x128xf32, #tpu.memory_space<vmem>>, vector<3x128xf32>
      %c0_44 = arith.constant 0 : index
      %c0_45 = arith.constant 0 : index
      %67 = vector.load %arg8[%c0_44, %c0_45] : memref<8x128xf32, #tpu.memory_space<vmem>>, vector<3x128xf32>
      tpu.vector_store %arg8[%c0_44, %c0_45], %66 {strides = array<i32>} : memref<8x128xf32, #tpu.memory_space<vmem>>, vector<3x128xf32>,
      %c3 = arith.constant 3 : index
      %c0_46 = arith.constant 0 : index
      %68 = vector.load %arg8[%c3, %c0_46] : memref<8x128xf32, #tpu.memory_space<vmem>>, vector<3x128xf32>
      tpu.vector_store %arg8[%c3, %c0_46], %66 {strides = array<i32>} : memref<8x128xf32, #tpu.memory_space<vmem>>, vector<3x128xf32>,
      %c0_47 = arith.constant 0 : index
      %c0_48 = arith.constant 0 : index
      %c0_49 = arith.constant 0 : index
      %69 = vector.load %arg6[%c0_47, %c0_48, %c0_49] : memref<8x3x128xf32, #tpu.memory_space<vmem>>, vector<1x3x128xf32>
      %70 = vector.shape_cast %69 : vector<1x3x128xf32> to vector<3x128xf32>
      %71 = vector.shape_cast %66 : vector<3x128xf32> to vector<1x3x128xf32>
      tpu.vector_store %arg6[%c0_47, %c0_48, %c0_49], %71 {strides = array<i32>} : memref<8x3x128xf32, #tpu.memory_space<vmem>>, vector<1x3x128xf32>,
      %c0_50 = arith.constant 0 : index
      %c0_51 = arith.constant 0 : index
      %c0_52 = arith.constant 0 : index
      %72 = vector.load %arg7[%c0_50, %c0_51, %c0_52] : memref<8x3x128xf32, #tpu.memory_space<vmem>>, vector<1x3x128xf32>
      %73 = vector.shape_cast %72 : vector<1x3x128xf32> to vector<3x128xf32>
      %74 = vector.shape_cast %66 : vector<3x128xf32> to vector<1x3x128xf32>
      tpu.vector_store %arg7[%c0_50, %c0_51, %c0_52], %74 {strides = array<i32>} : memref<8x3x128xf32, #tpu.memory_space<vmem>>, vector<1x3x128xf32>,
    } else {
    }
    %c0_i32_10 = arith.constant 0 : i32
    %15 = arith.cmpi sgt, %11, %c0_i32_10 : i32
    %16 = arith.extui %15 : i1 to i32
    %c0_i32_11 = arith.constant 0 : i32
    %17 = arith.cmpi ne, %16, %c0_i32_11 : i32
    scf.if %17 {
      %c1 = arith.constant 1 : index
      %c0_42 = arith.constant 0 : index
      %c0_43 = arith.constant 0 : index
      %66 = vector.load %arg2[%c1, %c0_42, %c0_43] : memref<8x16x128xbf16, #tpu.memory_space<vmem>>, vector<1x16x128xbf16>
      %67 = vector.shape_cast %66 : vector<1x16x128xbf16> to vector<16x128xbf16>
      %c0_44 = arith.constant 0 : index
      %c0_45 = arith.constant 0 : index
      %68 = vector.load %arg8[%c0_44, %c0_45] : memref<8x128xf32, #tpu.memory_space<vmem>>, vector<1x128xf32>
      %c1_46 = arith.constant 1 : index
      %c0_47 = arith.constant 0 : index
      %69 = vector.load %arg8[%c1_46, %c0_47] : memref<8x128xf32, #tpu.memory_space<vmem>>, vector<1x128xf32>
      %c2 = arith.constant 2 : index
      %c0_48 = arith.constant 0 : index
      %70 = vector.load %arg8[%c2, %c0_48] : memref<8x128xf32, #tpu.memory_space<vmem>>, vector<1x128xf32>
      %c3 = arith.constant 3 : index
      %c0_49 = arith.constant 0 : index
      %71 = vector.load %arg8[%c3, %c0_49] : memref<8x128xf32, #tpu.memory_space<vmem>>, vector<1x128xf32>
      %c4 = arith.constant 4 : index
      %c0_50 = arith.constant 0 : index
      %72 = vector.load %arg8[%c4, %c0_50] : memref<8x128xf32, #tpu.memory_space<vmem>>, vector<1x128xf32>
      %73 = arith.truncf %72 : vector<1x128xf32> to vector<1x128xbf16>
      %cst = arith.constant dense<0.000000e+00> : vector<1x16xf32>
      %74 = tpu.matmul %73, %67, %cst {dimension_numbers = #tpu.dot_dimension_numbers<[1], [1], [0], [0], [0, 0, 1, 0], [], []>} : vector<1x128xbf16>, vector<16x128xbf16>, vector<1x16xf32> -> vector<1x16xf32>
      %75 = arith.truncf %74 : vector<1x16xf32> to vector<1x16xbf16>
      %cst_51 = arith.constant dense<0.000000e+00> : vector<1x128xf32>
      %76 = tpu.matmul %75, %67, %cst_51 {dimension_numbers = #tpu.dot_dimension_numbers<[1], [0], [0], [1], [0, 0, 1, 1], [], []>} : vector<1x16xbf16>, vector<16x128xbf16>, vector<1x128xf32> -> vector<1x128xf32>
      %77 = arith.mulf %0, %76 : vector<1x128xf32>
      %78 = arith.mulf %1, %72 : vector<1x128xf32>
      %79 = arith.subf %68, %77 : vector<1x128xf32>
      %cst_52 = arith.constant 0.000000e+00 : f32
      %cst_53 = arith.constant 1.000000e+00 : f32
      %80 = vector.broadcast %cst_52 : f32 to vector<1x128xf32>
      %81 = arith.maximumf %80, %79 : vector<1x128xf32>
      %82 = vector.broadcast %cst_53 : f32 to vector<1x128xf32>
      %83 = arith.minimumf %82, %81 : vector<1x128xf32>
      %84 = arith.addf %69, %77 : vector<1x128xf32>
      %85 = arith.subf %84, %78 : vector<1x128xf32>
      %cst_54 = arith.constant 0.000000e+00 : f32
      %cst_55 = arith.constant 1.000000e+00 : f32
      %86 = vector.broadcast %cst_54 : f32 to vector<1x128xf32>
      %87 = arith.maximumf %86, %85 : vector<1x128xf32>
      %88 = vector.broadcast %cst_55 : f32 to vector<1x128xf32>
      %89 = arith.minimumf %88, %87 : vector<1x128xf32>
      %90 = arith.addf %70, %78 : vector<1x128xf32>
      %cst_56 = arith.constant 0.000000e+00 : f32
      %cst_57 = arith.constant 1.000000e+00 : f32
      %91 = vector.broadcast %cst_56 : f32 to vector<1x128xf32>
      %92 = arith.maximumf %91, %90 : vector<1x128xf32>
      %93 = vector.broadcast %cst_57 : f32 to vector<1x128xf32>
      %94 = arith.minimumf %93, %92 : vector<1x128xf32>
      %c1_58 = arith.constant 1 : index
      %c0_59 = arith.constant 0 : index
      %c0_60 = arith.constant 0 : index
      %95 = vector.load %arg3[%c1_58, %c0_59, %c0_60] : memref<8x2x128xf32, #tpu.memory_space<vmem>>, vector<1x2x128xf32>
      %96 = vector.shape_cast %95 : vector<1x2x128xf32> to vector<2x128xf32>
      %97 = vector.extract_strided_slice %96 {offsets = [0, 0], sizes = [1, 128], strides = [1, 1]} : vector<2x128xf32> to vector<1x128xf32>
      %98 = vector.extract_strided_slice %96 {offsets = [1, 0], sizes = [1, 128], strides = [1, 1]} : vector<2x128xf32> to vector<1x128xf32>
      %cst_61 = arith.constant 5.000000e-01 : f32
      %99 = vector.broadcast %cst_61 : f32 to vector<1x128xf32>
      %100 = arith.cmpf ogt, %71, %99 : vector<1x128xf32>
      %cst_62 = arith.constant 5.000000e-01 : f32
      %101 = vector.broadcast %cst_62 : f32 to vector<1x128xf32>
      %102 = arith.cmpf ogt, %72, %101 : vector<1x128xf32>
      %103 = arith.cmpf olt, %97, %89 : vector<1x128xf32>
      %104 = arith.andi %100, %103 : vector<1x128xi1>
      %105 = arith.cmpf olt, %97, %94 : vector<1x128xf32>
      %106 = arith.andi %102, %105 : vector<1x128xi1>
      %cst_63 = arith.constant 5.000000e-01 : f32
      %107 = vector.broadcast %cst_63 : f32 to vector<1x128xf32>
      %108 = arith.cmpf olt, %98, %107 : vector<1x128xf32>
      %109 = arith.andi %106, %108 : vector<1x128xi1>
      %cst_64 = arith.constant dense<true> : vector<1x128xi1>
      %110 = arith.xori %108, %cst_64 : vector<1x128xi1>
      %111 = arith.andi %106, %110 : vector<1x128xi1>
      %cst_65 = arith.constant dense<true> : vector<1x128xi1>
      %112 = arith.xori %106, %cst_65 : vector<1x128xi1>
      %113 = arith.andi %102, %112 : vector<1x128xi1>
      %cst_66 = arith.constant dense<true> : vector<1x128xi1>
      %114 = arith.xori %104, %cst_66 : vector<1x128xi1>
      %115 = arith.andi %100, %114 : vector<1x128xi1>
      %116 = arith.ori %115, %111 : vector<1x128xi1>
      %117 = arith.ori %104, %113 : vector<1x128xi1>
      %cst_67 = arith.constant dense<true> : vector<1x128xi1>
      %118 = arith.xori %100, %cst_67 : vector<1x128xi1>
      %cst_68 = arith.constant dense<true> : vector<1x128xi1>
      %119 = arith.xori %102, %cst_68 : vector<1x128xi1>
      %120 = arith.andi %118, %119 : vector<1x128xi1>
      %121 = arith.ori %109, %120 : vector<1x128xi1>
      %c0_69 = arith.constant 0 : index
      %c0_70 = arith.constant 0 : index
      %122 = vector.load %arg8[%c0_69, %c0_70] : memref<8x128xf32, #tpu.memory_space<vmem>>, vector<1x128xf32>
      tpu.vector_store %arg8[%c0_69, %c0_70], %83 {strides = array<i32>} : memref<8x128xf32, #tpu.memory_space<vmem>>, vector<1x128xf32>,
      %c1_71 = arith.constant 1 : index
      %c0_72 = arith.constant 0 : index
      %123 = vector.load %arg8[%c1_71, %c0_72] : memref<8x128xf32, #tpu.memory_space<vmem>>, vector<1x128xf32>
      tpu.vector_store %arg8[%c1_71, %c0_72], %89 {strides = array<i32>} : memref<8x128xf32, #tpu.memory_space<vmem>>, vector<1x128xf32>,
      %c2_73 = arith.constant 2 : index
      %c0_74 = arith.constant 0 : index
      %124 = vector.load %arg8[%c2_73, %c0_74] : memref<8x128xf32, #tpu.memory_space<vmem>>, vector<1x128xf32>
      tpu.vector_store %arg8[%c2_73, %c0_74], %94 {strides = array<i32>} : memref<8x128xf32, #tpu.memory_space<vmem>>, vector<1x128xf32>,
      %125 = arith.extui %116 : vector<1x128xi1> to vector<1x128xi32>
      %126 = arith.sitofp %125 : vector<1x128xi32> to vector<1x128xf32>
      %c3_75 = arith.constant 3 : index
      %c0_76 = arith.constant 0 : index
      %127 = vector.load %arg8[%c3_75, %c0_76] : memref<8x128xf32, #tpu.memory_space<vmem>>, vector<1x128xf32>
      tpu.vector_store %arg8[%c3_75, %c0_76], %126 {strides = array<i32>} : memref<8x128xf32, #tpu.memory_space<vmem>>, vector<1x128xf32>,
      %128 = arith.extui %117 : vector<1x128xi1> to vector<1x128xi32>
      %129 = arith.sitofp %128 : vector<1x128xi32> to vector<1x128xf32>
      %c4_77 = arith.constant 4 : index
      %c0_78 = arith.constant 0 : index
      %130 = vector.load %arg8[%c4_77, %c0_78] : memref<8x128xf32, #tpu.memory_space<vmem>>, vector<1x128xf32>
      tpu.vector_store %arg8[%c4_77, %c0_78], %129 {strides = array<i32>} : memref<8x128xf32, #tpu.memory_space<vmem>>, vector<1x128xf32>,
      %131 = arith.extui %121 : vector<1x128xi1> to vector<1x128xi32>
      %132 = arith.sitofp %131 : vector<1x128xi32> to vector<1x128xf32>
      %c5 = arith.constant 5 : index
      %c0_79 = arith.constant 0 : index
      %133 = vector.load %arg8[%c5, %c0_79] : memref<8x128xf32, #tpu.memory_space<vmem>>, vector<1x128xf32>
      tpu.vector_store %arg8[%c5, %c0_79], %132 {strides = array<i32>} : memref<8x128xf32, #tpu.memory_space<vmem>>, vector<1x128xf32>,
      %c0_80 = arith.constant 0 : index
      %c0_81 = arith.constant 0 : index
      %134 = vector.load %arg8[%c0_80, %c0_81] : memref<8x128xf32, #tpu.memory_space<vmem>>, vector<3x128xf32>
      %c1_82 = arith.constant 1 : index
      %c0_83 = arith.constant 0 : index
      %c0_84 = arith.constant 0 : index
      %135 = vector.load %arg6[%c1_82, %c0_83, %c0_84] : memref<8x3x128xf32, #tpu.memory_space<vmem>>, vector<1x3x128xf32>
      %136 = vector.shape_cast %135 : vector<1x3x128xf32> to vector<3x128xf32>
      %137 = vector.shape_cast %134 : vector<3x128xf32> to vector<1x3x128xf32>
      tpu.vector_store %arg6[%c1_82, %c0_83, %c0_84], %137 {strides = array<i32>} : memref<8x3x128xf32, #tpu.memory_space<vmem>>, vector<1x3x128xf32>,
      %c3_85 = arith.constant 3 : index
      %c0_86 = arith.constant 0 : index
      %138 = vector.load %arg8[%c3_85, %c0_86] : memref<8x128xf32, #tpu.memory_space<vmem>>, vector<3x128xf32>
      %c1_87 = arith.constant 1 : index
      %c0_88 = arith.constant 0 : index
      %c0_89 = arith.constant 0 : index
      %139 = vector.load %arg7[%c1_87, %c0_88, %c0_89] : memref<8x3x128xf32, #tpu.memory_space<vmem>>, vector<1x3x128xf32>
      %140 = vector.shape_cast %139 : vector<1x3x128xf32> to vector<3x128xf32>
      %141 = vector.shape_cast %138 : vector<3x128xf32> to vector<1x3x128xf32>
      tpu.vector_store %arg7[%c1_87, %c0_88, %c0_89], %141 {strides = array<i32>} : memref<8x3x128xf32, #tpu.memory_space<vmem>>, vector<1x3x128xf32>,
    } else {
    }
    %c8_i32_12 = arith.constant 8 : i32
    %18 = arith.muli %arg0, %c8_i32_12 : i32
    %c2_i32 = arith.constant 2 : i32
    %19 = arith.addi %18, %c2_i32 : i32
    %c0_i32_13 = arith.constant 0 : i32
    %20 = arith.cmpi eq, %19, %c0_i32_13 : i32
    %21 = arith.extui %20 : i1 to i32
    %c0_i32_14 = arith.constant 0 : i32
    %22 = arith.cmpi ne, %21, %c0_i32_14 : i32
    scf.if %22 {
      %c0_42 = arith.constant 0 : index
      %c0_43 = arith.constant 0 : index
      %66 = vector.load %arg1[%c0_42, %c0_43] : memref<3x128xf32, #tpu.memory_space<vmem>>, vector<3x128xf32>
      %c0_44 = arith.constant 0 : index
      %c0_45 = arith.constant 0 : index
      %67 = vector.load %arg8[%c0_44, %c0_45] : memref<8x128xf32, #tpu.memory_space<vmem>>, vector<3x128xf32>
      tpu.vector_store %arg8[%c0_44, %c0_45], %66 {strides = array<i32>} : memref<8x128xf32, #tpu.memory_space<vmem>>, vector<3x128xf32>,
      %c3 = arith.constant 3 : index
      %c0_46 = arith.constant 0 : index
      %68 = vector.load %arg8[%c3, %c0_46] : memref<8x128xf32, #tpu.memory_space<vmem>>, vector<3x128xf32>
      tpu.vector_store %arg8[%c3, %c0_46], %66 {strides = array<i32>} : memref<8x128xf32, #tpu.memory_space<vmem>>, vector<3x128xf32>,
      %c0_47 = arith.constant 0 : index
      %c0_48 = arith.constant 0 : index
      %c0_49 = arith.constant 0 : index
      %69 = vector.load %arg6[%c0_47, %c0_48, %c0_49] : memref<8x3x128xf32, #tpu.memory_space<vmem>>, vector<1x3x128xf32>
      %70 = vector.shape_cast %69 : vector<1x3x128xf32> to vector<3x128xf32>
      %71 = vector.shape_cast %66 : vector<3x128xf32> to vector<1x3x128xf32>
      tpu.vector_store %arg6[%c0_47, %c0_48, %c0_49], %71 {strides = array<i32>} : memref<8x3x128xf32, #tpu.memory_space<vmem>>, vector<1x3x128xf32>,
      %c0_50 = arith.constant 0 : index
      %c0_51 = arith.constant 0 : index
      %c0_52 = arith.constant 0 : index
      %72 = vector.load %arg7[%c0_50, %c0_51, %c0_52] : memref<8x3x128xf32, #tpu.memory_space<vmem>>, vector<1x3x128xf32>
      %73 = vector.shape_cast %72 : vector<1x3x128xf32> to vector<3x128xf32>
      %74 = vector.shape_cast %66 : vector<3x128xf32> to vector<1x3x128xf32>
      tpu.vector_store %arg7[%c0_50, %c0_51, %c0_52], %74 {strides = array<i32>} : memref<8x3x128xf32, #tpu.memory_space<vmem>>, vector<1x3x128xf32>,
    } else {
    }
    %c0_i32_15 = arith.constant 0 : i32
    %23 = arith.cmpi sgt, %19, %c0_i32_15 : i32
    %24 = arith.extui %23 : i1 to i32
    %c0_i32_16 = arith.constant 0 : i32
    %25 = arith.cmpi ne, %24, %c0_i32_16 : i32
    scf.if %25 {
      %c2 = arith.constant 2 : index
      %c0_42 = arith.constant 0 : index
      %c0_43 = arith.constant 0 : index
      %66 = vector.load %arg2[%c2, %c0_42, %c0_43] : memref<8x16x128xbf16, #tpu.memory_space<vmem>>, vector<1x16x128xbf16>
      %67 = vector.shape_cast %66 : vector<1x16x128xbf16> to vector<16x128xbf16>
      %c0_44 = arith.constant 0 : index
      %c0_45 = arith.constant 0 : index
      %68 = vector.load %arg8[%c0_44, %c0_45] : memref<8x128xf32, #tpu.memory_space<vmem>>, vector<1x128xf32>
      %c1 = arith.constant 1 : index
      %c0_46 = arith.constant 0 : index
      %69 = vector.load %arg8[%c1, %c0_46] : memref<8x128xf32, #tpu.memory_space<vmem>>, vector<1x128xf32>
      %c2_47 = arith.constant 2 : index
      %c0_48 = arith.constant 0 : index
      %70 = vector.load %arg8[%c2_47, %c0_48] : memref<8x128xf32, #tpu.memory_space<vmem>>, vector<1x128xf32>
      %c3 = arith.constant 3 : index
      %c0_49 = arith.constant 0 : index
      %71 = vector.load %arg8[%c3, %c0_49] : memref<8x128xf32, #tpu.memory_space<vmem>>, vector<1x128xf32>
      %c4 = arith.constant 4 : index
      %c0_50 = arith.constant 0 : index
      %72 = vector.load %arg8[%c4, %c0_50] : memref<8x128xf32, #tpu.memory_space<vmem>>, vector<1x128xf32>
      %73 = arith.truncf %72 : vector<1x128xf32> to vector<1x128xbf16>
      %cst = arith.constant dense<0.000000e+00> : vector<1x16xf32>
      %74 = tpu.matmul %73, %67, %cst {dimension_numbers = #tpu.dot_dimension_numbers<[1], [1], [0], [0], [0, 0, 1, 0], [], []>} : vector<1x128xbf16>, vector<16x128xbf16>, vector<1x16xf32> -> vector<1x16xf32>
      %75 = arith.truncf %74 : vector<1x16xf32> to vector<1x16xbf16>
      %cst_51 = arith.constant dense<0.000000e+00> : vector<1x128xf32>
      %76 = tpu.matmul %75, %67, %cst_51 {dimension_numbers = #tpu.dot_dimension_numbers<[1], [0], [0], [1], [0, 0, 1, 1], [], []>} : vector<1x16xbf16>, vector<16x128xbf16>, vector<1x128xf32> -> vector<1x128xf32>
      %77 = arith.mulf %0, %76 : vector<1x128xf32>
      %78 = arith.mulf %1, %72 : vector<1x128xf32>
      %79 = arith.subf %68, %77 : vector<1x128xf32>
      %cst_52 = arith.constant 0.000000e+00 : f32
      %cst_53 = arith.constant 1.000000e+00 : f32
      %80 = vector.broadcast %cst_52 : f32 to vector<1x128xf32>
      %81 = arith.maximumf %80, %79 : vector<1x128xf32>
      %82 = vector.broadcast %cst_53 : f32 to vector<1x128xf32>
      %83 = arith.minimumf %82, %81 : vector<1x128xf32>
      %84 = arith.addf %69, %77 : vector<1x128xf32>
      %85 = arith.subf %84, %78 : vector<1x128xf32>
      %cst_54 = arith.constant 0.000000e+00 : f32
      %cst_55 = arith.constant 1.000000e+00 : f32
      %86 = vector.broadcast %cst_54 : f32 to vector<1x128xf32>
      %87 = arith.maximumf %86, %85 : vector<1x128xf32>
      %88 = vector.broadcast %cst_55 : f32 to vector<1x128xf32>
      %89 = arith.minimumf %88, %87 : vector<1x128xf32>
      %90 = arith.addf %70, %78 : vector<1x128xf32>
      %cst_56 = arith.constant 0.000000e+00 : f32
      %cst_57 = arith.constant 1.000000e+00 : f32
      %91 = vector.broadcast %cst_56 : f32 to vector<1x128xf32>
      %92 = arith.maximumf %91, %90 : vector<1x128xf32>
      %93 = vector.broadcast %cst_57 : f32 to vector<1x128xf32>
      %94 = arith.minimumf %93, %92 : vector<1x128xf32>
      %c2_58 = arith.constant 2 : index
      %c0_59 = arith.constant 0 : index
      %c0_60 = arith.constant 0 : index
      %95 = vector.load %arg3[%c2_58, %c0_59, %c0_60] : memref<8x2x128xf32, #tpu.memory_space<vmem>>, vector<1x2x128xf32>
      %96 = vector.shape_cast %95 : vector<1x2x128xf32> to vector<2x128xf32>
      %97 = vector.extract_strided_slice %96 {offsets = [0, 0], sizes = [1, 128], strides = [1, 1]} : vector<2x128xf32> to vector<1x128xf32>
      %98 = vector.extract_strided_slice %96 {offsets = [1, 0], sizes = [1, 128], strides = [1, 1]} : vector<2x128xf32> to vector<1x128xf32>
      %cst_61 = arith.constant 5.000000e-01 : f32
      %99 = vector.broadcast %cst_61 : f32 to vector<1x128xf32>
      %100 = arith.cmpf ogt, %71, %99 : vector<1x128xf32>
      %cst_62 = arith.constant 5.000000e-01 : f32
      %101 = vector.broadcast %cst_62 : f32 to vector<1x128xf32>
      %102 = arith.cmpf ogt, %72, %101 : vector<1x128xf32>
      %103 = arith.cmpf olt, %97, %89 : vector<1x128xf32>
      %104 = arith.andi %100, %103 : vector<1x128xi1>
      %105 = arith.cmpf olt, %97, %94 : vector<1x128xf32>
      %106 = arith.andi %102, %105 : vector<1x128xi1>
      %cst_63 = arith.constant 5.000000e-01 : f32
      %107 = vector.broadcast %cst_63 : f32 to vector<1x128xf32>
      %108 = arith.cmpf olt, %98, %107 : vector<1x128xf32>
      %109 = arith.andi %106, %108 : vector<1x128xi1>
      %cst_64 = arith.constant dense<true> : vector<1x128xi1>
      %110 = arith.xori %108, %cst_64 : vector<1x128xi1>
      %111 = arith.andi %106, %110 : vector<1x128xi1>
      %cst_65 = arith.constant dense<true> : vector<1x128xi1>
      %112 = arith.xori %106, %cst_65 : vector<1x128xi1>
      %113 = arith.andi %102, %112 : vector<1x128xi1>
      %cst_66 = arith.constant dense<true> : vector<1x128xi1>
      %114 = arith.xori %104, %cst_66 : vector<1x128xi1>
      %115 = arith.andi %100, %114 : vector<1x128xi1>
      %116 = arith.ori %115, %111 : vector<1x128xi1>
      %117 = arith.ori %104, %113 : vector<1x128xi1>
      %cst_67 = arith.constant dense<true> : vector<1x128xi1>
      %118 = arith.xori %100, %cst_67 : vector<1x128xi1>
      %cst_68 = arith.constant dense<true> : vector<1x128xi1>
      %119 = arith.xori %102, %cst_68 : vector<1x128xi1>
      %120 = arith.andi %118, %119 : vector<1x128xi1>
      %121 = arith.ori %109, %120 : vector<1x128xi1>
      %c0_69 = arith.constant 0 : index
      %c0_70 = arith.constant 0 : index
      %122 = vector.load %arg8[%c0_69, %c0_70] : memref<8x128xf32, #tpu.memory_space<vmem>>, vector<1x128xf32>
      tpu.vector_store %arg8[%c0_69, %c0_70], %83 {strides = array<i32>} : memref<8x128xf32, #tpu.memory_space<vmem>>, vector<1x128xf32>,
      %c1_71 = arith.constant 1 : index
      %c0_72 = arith.constant 0 : index
      %123 = vector.load %arg8[%c1_71, %c0_72] : memref<8x128xf32, #tpu.memory_space<vmem>>, vector<1x128xf32>
      tpu.vector_store %arg8[%c1_71, %c0_72], %89 {strides = array<i32>} : memref<8x128xf32, #tpu.memory_space<vmem>>, vector<1x128xf32>,
      %c2_73 = arith.constant 2 : index
      %c0_74 = arith.constant 0 : index
      %124 = vector.load %arg8[%c2_73, %c0_74] : memref<8x128xf32, #tpu.memory_space<vmem>>, vector<1x128xf32>
      tpu.vector_store %arg8[%c2_73, %c0_74], %94 {strides = array<i32>} : memref<8x128xf32, #tpu.memory_space<vmem>>, vector<1x128xf32>,
      %125 = arith.extui %116 : vector<1x128xi1> to vector<1x128xi32>
      %126 = arith.sitofp %125 : vector<1x128xi32> to vector<1x128xf32>
      %c3_75 = arith.constant 3 : index
      %c0_76 = arith.constant 0 : index
      %127 = vector.load %arg8[%c3_75, %c0_76] : memref<8x128xf32, #tpu.memory_space<vmem>>, vector<1x128xf32>
      tpu.vector_store %arg8[%c3_75, %c0_76], %126 {strides = array<i32>} : memref<8x128xf32, #tpu.memory_space<vmem>>, vector<1x128xf32>,
      %128 = arith.extui %117 : vector<1x128xi1> to vector<1x128xi32>
      %129 = arith.sitofp %128 : vector<1x128xi32> to vector<1x128xf32>
      %c4_77 = arith.constant 4 : index
      %c0_78 = arith.constant 0 : index
      %130 = vector.load %arg8[%c4_77, %c0_78] : memref<8x128xf32, #tpu.memory_space<vmem>>, vector<1x128xf32>
      tpu.vector_store %arg8[%c4_77, %c0_78], %129 {strides = array<i32>} : memref<8x128xf32, #tpu.memory_space<vmem>>, vector<1x128xf32>,
      %131 = arith.extui %121 : vector<1x128xi1> to vector<1x128xi32>
      %132 = arith.sitofp %131 : vector<1x128xi32> to vector<1x128xf32>
      %c5 = arith.constant 5 : index
      %c0_79 = arith.constant 0 : index
      %133 = vector.load %arg8[%c5, %c0_79] : memref<8x128xf32, #tpu.memory_space<vmem>>, vector<1x128xf32>
      tpu.vector_store %arg8[%c5, %c0_79], %132 {strides = array<i32>} : memref<8x128xf32, #tpu.memory_space<vmem>>, vector<1x128xf32>,
      %c0_80 = arith.constant 0 : index
      %c0_81 = arith.constant 0 : index
      %134 = vector.load %arg8[%c0_80, %c0_81] : memref<8x128xf32, #tpu.memory_space<vmem>>, vector<3x128xf32>
      %c2_82 = arith.constant 2 : index
      %c0_83 = arith.constant 0 : index
      %c0_84 = arith.constant 0 : index
      %135 = vector.load %arg6[%c2_82, %c0_83, %c0_84] : memref<8x3x128xf32, #tpu.memory_space<vmem>>, vector<1x3x128xf32>
      %136 = vector.shape_cast %135 : vector<1x3x128xf32> to vector<3x128xf32>
      %137 = vector.shape_cast %134 : vector<3x128xf32> to vector<1x3x128xf32>
      tpu.vector_store %arg6[%c2_82, %c0_83, %c0_84], %137 {strides = array<i32>} : memref<8x3x128xf32, #tpu.memory_space<vmem>>, vector<1x3x128xf32>,
      %c3_85 = arith.constant 3 : index
      %c0_86 = arith.constant 0 : index
      %138 = vector.load %arg8[%c3_85, %c0_86] : memref<8x128xf32, #tpu.memory_space<vmem>>, vector<3x128xf32>
      %c2_87 = arith.constant 2 : index
      %c0_88 = arith.constant 0 : index
      %c0_89 = arith.constant 0 : index
      %139 = vector.load %arg7[%c2_87, %c0_88, %c0_89] : memref<8x3x128xf32, #tpu.memory_space<vmem>>, vector<1x3x128xf32>
      %140 = vector.shape_cast %139 : vector<1x3x128xf32> to vector<3x128xf32>
      %141 = vector.shape_cast %138 : vector<3x128xf32> to vector<1x3x128xf32>
      tpu.vector_store %arg7[%c2_87, %c0_88, %c0_89], %141 {strides = array<i32>} : memref<8x3x128xf32, #tpu.memory_space<vmem>>, vector<1x3x128xf32>,
    } else {
    }
    %c8_i32_17 = arith.constant 8 : i32
    %26 = arith.muli %arg0, %c8_i32_17 : i32
    %c3_i32 = arith.constant 3 : i32
    %27 = arith.addi %26, %c3_i32 : i32
    %c0_i32_18 = arith.constant 0 : i32
    %28 = arith.cmpi eq, %27, %c0_i32_18 : i32
    %29 = arith.extui %28 : i1 to i32
    %c0_i32_19 = arith.constant 0 : i32
    %30 = arith.cmpi ne, %29, %c0_i32_19 : i32
    scf.if %30 {
      %c0_42 = arith.constant 0 : index
      %c0_43 = arith.constant 0 : index
      %66 = vector.load %arg1[%c0_42, %c0_43] : memref<3x128xf32, #tpu.memory_space<vmem>>, vector<3x128xf32>
      %c0_44 = arith.constant 0 : index
      %c0_45 = arith.constant 0 : index
      %67 = vector.load %arg8[%c0_44, %c0_45] : memref<8x128xf32, #tpu.memory_space<vmem>>, vector<3x128xf32>
      tpu.vector_store %arg8[%c0_44, %c0_45], %66 {strides = array<i32>} : memref<8x128xf32, #tpu.memory_space<vmem>>, vector<3x128xf32>,
      %c3 = arith.constant 3 : index
      %c0_46 = arith.constant 0 : index
      %68 = vector.load %arg8[%c3, %c0_46] : memref<8x128xf32, #tpu.memory_space<vmem>>, vector<3x128xf32>
      tpu.vector_store %arg8[%c3, %c0_46], %66 {strides = array<i32>} : memref<8x128xf32, #tpu.memory_space<vmem>>, vector<3x128xf32>,
      %c0_47 = arith.constant 0 : index
      %c0_48 = arith.constant 0 : index
      %c0_49 = arith.constant 0 : index
      %69 = vector.load %arg6[%c0_47, %c0_48, %c0_49] : memref<8x3x128xf32, #tpu.memory_space<vmem>>, vector<1x3x128xf32>
      %70 = vector.shape_cast %69 : vector<1x3x128xf32> to vector<3x128xf32>
      %71 = vector.shape_cast %66 : vector<3x128xf32> to vector<1x3x128xf32>
      tpu.vector_store %arg6[%c0_47, %c0_48, %c0_49], %71 {strides = array<i32>} : memref<8x3x128xf32, #tpu.memory_space<vmem>>, vector<1x3x128xf32>,
      %c0_50 = arith.constant 0 : index
      %c0_51 = arith.constant 0 : index
      %c0_52 = arith.constant 0 : index
      %72 = vector.load %arg7[%c0_50, %c0_51, %c0_52] : memref<8x3x128xf32, #tpu.memory_space<vmem>>, vector<1x3x128xf32>
      %73 = vector.shape_cast %72 : vector<1x3x128xf32> to vector<3x128xf32>
      %74 = vector.shape_cast %66 : vector<3x128xf32> to vector<1x3x128xf32>
      tpu.vector_store %arg7[%c0_50, %c0_51, %c0_52], %74 {strides = array<i32>} : memref<8x3x128xf32, #tpu.memory_space<vmem>>, vector<1x3x128xf32>,
    } else {
    }
    %c0_i32_20 = arith.constant 0 : i32
    %31 = arith.cmpi sgt, %27, %c0_i32_20 : i32
    %32 = arith.extui %31 : i1 to i32
    %c0_i32_21 = arith.constant 0 : i32
    %33 = arith.cmpi ne, %32, %c0_i32_21 : i32
    scf.if %33 {
      %c3 = arith.constant 3 : index
      %c0_42 = arith.constant 0 : index
      %c0_43 = arith.constant 0 : index
      %66 = vector.load %arg2[%c3, %c0_42, %c0_43] : memref<8x16x128xbf16, #tpu.memory_space<vmem>>, vector<1x16x128xbf16>
      %67 = vector.shape_cast %66 : vector<1x16x128xbf16> to vector<16x128xbf16>
      %c0_44 = arith.constant 0 : index
      %c0_45 = arith.constant 0 : index
      %68 = vector.load %arg8[%c0_44, %c0_45] : memref<8x128xf32, #tpu.memory_space<vmem>>, vector<1x128xf32>
      %c1 = arith.constant 1 : index
      %c0_46 = arith.constant 0 : index
      %69 = vector.load %arg8[%c1, %c0_46] : memref<8x128xf32, #tpu.memory_space<vmem>>, vector<1x128xf32>
      %c2 = arith.constant 2 : index
      %c0_47 = arith.constant 0 : index
      %70 = vector.load %arg8[%c2, %c0_47] : memref<8x128xf32, #tpu.memory_space<vmem>>, vector<1x128xf32>
      %c3_48 = arith.constant 3 : index
      %c0_49 = arith.constant 0 : index
      %71 = vector.load %arg8[%c3_48, %c0_49] : memref<8x128xf32, #tpu.memory_space<vmem>>, vector<1x128xf32>
      %c4 = arith.constant 4 : index
      %c0_50 = arith.constant 0 : index
      %72 = vector.load %arg8[%c4, %c0_50] : memref<8x128xf32, #tpu.memory_space<vmem>>, vector<1x128xf32>
      %73 = arith.truncf %72 : vector<1x128xf32> to vector<1x128xbf16>
      %cst = arith.constant dense<0.000000e+00> : vector<1x16xf32>
      %74 = tpu.matmul %73, %67, %cst {dimension_numbers = #tpu.dot_dimension_numbers<[1], [1], [0], [0], [0, 0, 1, 0], [], []>} : vector<1x128xbf16>, vector<16x128xbf16>, vector<1x16xf32> -> vector<1x16xf32>
      %75 = arith.truncf %74 : vector<1x16xf32> to vector<1x16xbf16>
      %cst_51 = arith.constant dense<0.000000e+00> : vector<1x128xf32>
      %76 = tpu.matmul %75, %67, %cst_51 {dimension_numbers = #tpu.dot_dimension_numbers<[1], [0], [0], [1], [0, 0, 1, 1], [], []>} : vector<1x16xbf16>, vector<16x128xbf16>, vector<1x128xf32> -> vector<1x128xf32>
      %77 = arith.mulf %0, %76 : vector<1x128xf32>
      %78 = arith.mulf %1, %72 : vector<1x128xf32>
      %79 = arith.subf %68, %77 : vector<1x128xf32>
      %cst_52 = arith.constant 0.000000e+00 : f32
      %cst_53 = arith.constant 1.000000e+00 : f32
      %80 = vector.broadcast %cst_52 : f32 to vector<1x128xf32>
      %81 = arith.maximumf %80, %79 : vector<1x128xf32>
      %82 = vector.broadcast %cst_53 : f32 to vector<1x128xf32>
      %83 = arith.minimumf %82, %81 : vector<1x128xf32>
      %84 = arith.addf %69, %77 : vector<1x128xf32>
      %85 = arith.subf %84, %78 : vector<1x128xf32>
      %cst_54 = arith.constant 0.000000e+00 : f32
      %cst_55 = arith.constant 1.000000e+00 : f32
      %86 = vector.broadcast %cst_54 : f32 to vector<1x128xf32>
      %87 = arith.maximumf %86, %85 : vector<1x128xf32>
      %88 = vector.broadcast %cst_55 : f32 to vector<1x128xf32>
      %89 = arith.minimumf %88, %87 : vector<1x128xf32>
      %90 = arith.addf %70, %78 : vector<1x128xf32>
      %cst_56 = arith.constant 0.000000e+00 : f32
      %cst_57 = arith.constant 1.000000e+00 : f32
      %91 = vector.broadcast %cst_56 : f32 to vector<1x128xf32>
      %92 = arith.maximumf %91, %90 : vector<1x128xf32>
      %93 = vector.broadcast %cst_57 : f32 to vector<1x128xf32>
      %94 = arith.minimumf %93, %92 : vector<1x128xf32>
      %c3_58 = arith.constant 3 : index
      %c0_59 = arith.constant 0 : index
      %c0_60 = arith.constant 0 : index
      %95 = vector.load %arg3[%c3_58, %c0_59, %c0_60] : memref<8x2x128xf32, #tpu.memory_space<vmem>>, vector<1x2x128xf32>
      %96 = vector.shape_cast %95 : vector<1x2x128xf32> to vector<2x128xf32>
      %97 = vector.extract_strided_slice %96 {offsets = [0, 0], sizes = [1, 128], strides = [1, 1]} : vector<2x128xf32> to vector<1x128xf32>
      %98 = vector.extract_strided_slice %96 {offsets = [1, 0], sizes = [1, 128], strides = [1, 1]} : vector<2x128xf32> to vector<1x128xf32>
      %cst_61 = arith.constant 5.000000e-01 : f32
      %99 = vector.broadcast %cst_61 : f32 to vector<1x128xf32>
      %100 = arith.cmpf ogt, %71, %99 : vector<1x128xf32>
      %cst_62 = arith.constant 5.000000e-01 : f32
      %101 = vector.broadcast %cst_62 : f32 to vector<1x128xf32>
      %102 = arith.cmpf ogt, %72, %101 : vector<1x128xf32>
      %103 = arith.cmpf olt, %97, %89 : vector<1x128xf32>
      %104 = arith.andi %100, %103 : vector<1x128xi1>
      %105 = arith.cmpf olt, %97, %94 : vector<1x128xf32>
      %106 = arith.andi %102, %105 : vector<1x128xi1>
      %cst_63 = arith.constant 5.000000e-01 : f32
      %107 = vector.broadcast %cst_63 : f32 to vector<1x128xf32>
      %108 = arith.cmpf olt, %98, %107 : vector<1x128xf32>
      %109 = arith.andi %106, %108 : vector<1x128xi1>
      %cst_64 = arith.constant dense<true> : vector<1x128xi1>
      %110 = arith.xori %108, %cst_64 : vector<1x128xi1>
      %111 = arith.andi %106, %110 : vector<1x128xi1>
      %cst_65 = arith.constant dense<true> : vector<1x128xi1>
      %112 = arith.xori %106, %cst_65 : vector<1x128xi1>
      %113 = arith.andi %102, %112 : vector<1x128xi1>
      %cst_66 = arith.constant dense<true> : vector<1x128xi1>
      %114 = arith.xori %104, %cst_66 : vector<1x128xi1>
      %115 = arith.andi %100, %114 : vector<1x128xi1>
      %116 = arith.ori %115, %111 : vector<1x128xi1>
      %117 = arith.ori %104, %113 : vector<1x128xi1>
      %cst_67 = arith.constant dense<true> : vector<1x128xi1>
      %118 = arith.xori %100, %cst_67 : vector<1x128xi1>
      %cst_68 = arith.constant dense<true> : vector<1x128xi1>
      %119 = arith.xori %102, %cst_68 : vector<1x128xi1>
      %120 = arith.andi %118, %119 : vector<1x128xi1>
      %121 = arith.ori %109, %120 : vector<1x128xi1>
      %c0_69 = arith.constant 0 : index
      %c0_70 = arith.constant 0 : index
      %122 = vector.load %arg8[%c0_69, %c0_70] : memref<8x128xf32, #tpu.memory_space<vmem>>, vector<1x128xf32>
      tpu.vector_store %arg8[%c0_69, %c0_70], %83 {strides = array<i32>} : memref<8x128xf32, #tpu.memory_space<vmem>>, vector<1x128xf32>,
      %c1_71 = arith.constant 1 : index
      %c0_72 = arith.constant 0 : index
      %123 = vector.load %arg8[%c1_71, %c0_72] : memref<8x128xf32, #tpu.memory_space<vmem>>, vector<1x128xf32>
      tpu.vector_store %arg8[%c1_71, %c0_72], %89 {strides = array<i32>} : memref<8x128xf32, #tpu.memory_space<vmem>>, vector<1x128xf32>,
      %c2_73 = arith.constant 2 : index
      %c0_74 = arith.constant 0 : index
      %124 = vector.load %arg8[%c2_73, %c0_74] : memref<8x128xf32, #tpu.memory_space<vmem>>, vector<1x128xf32>
      tpu.vector_store %arg8[%c2_73, %c0_74], %94 {strides = array<i32>} : memref<8x128xf32, #tpu.memory_space<vmem>>, vector<1x128xf32>,
      %125 = arith.extui %116 : vector<1x128xi1> to vector<1x128xi32>
      %126 = arith.sitofp %125 : vector<1x128xi32> to vector<1x128xf32>
      %c3_75 = arith.constant 3 : index
      %c0_76 = arith.constant 0 : index
      %127 = vector.load %arg8[%c3_75, %c0_76] : memref<8x128xf32, #tpu.memory_space<vmem>>, vector<1x128xf32>
      tpu.vector_store %arg8[%c3_75, %c0_76], %126 {strides = array<i32>} : memref<8x128xf32, #tpu.memory_space<vmem>>, vector<1x128xf32>,
      %128 = arith.extui %117 : vector<1x128xi1> to vector<1x128xi32>
      %129 = arith.sitofp %128 : vector<1x128xi32> to vector<1x128xf32>
      %c4_77 = arith.constant 4 : index
      %c0_78 = arith.constant 0 : index
      %130 = vector.load %arg8[%c4_77, %c0_78] : memref<8x128xf32, #tpu.memory_space<vmem>>, vector<1x128xf32>
      tpu.vector_store %arg8[%c4_77, %c0_78], %129 {strides = array<i32>} : memref<8x128xf32, #tpu.memory_space<vmem>>, vector<1x128xf32>,
      %131 = arith.extui %121 : vector<1x128xi1> to vector<1x128xi32>
      %132 = arith.sitofp %131 : vector<1x128xi32> to vector<1x128xf32>
      %c5 = arith.constant 5 : index
      %c0_79 = arith.constant 0 : index
      %133 = vector.load %arg8[%c5, %c0_79] : memref<8x128xf32, #tpu.memory_space<vmem>>, vector<1x128xf32>
      tpu.vector_store %arg8[%c5, %c0_79], %132 {strides = array<i32>} : memref<8x128xf32, #tpu.memory_space<vmem>>, vector<1x128xf32>,
      %c0_80 = arith.constant 0 : index
      %c0_81 = arith.constant 0 : index
      %134 = vector.load %arg8[%c0_80, %c0_81] : memref<8x128xf32, #tpu.memory_space<vmem>>, vector<3x128xf32>
      %c3_82 = arith.constant 3 : index
      %c0_83 = arith.constant 0 : index
      %c0_84 = arith.constant 0 : index
      %135 = vector.load %arg6[%c3_82, %c0_83, %c0_84] : memref<8x3x128xf32, #tpu.memory_space<vmem>>, vector<1x3x128xf32>
      %136 = vector.shape_cast %135 : vector<1x3x128xf32> to vector<3x128xf32>
      %137 = vector.shape_cast %134 : vector<3x128xf32> to vector<1x3x128xf32>
      tpu.vector_store %arg6[%c3_82, %c0_83, %c0_84], %137 {strides = array<i32>} : memref<8x3x128xf32, #tpu.memory_space<vmem>>, vector<1x3x128xf32>,
      %c3_85 = arith.constant 3 : index
      %c0_86 = arith.constant 0 : index
      %138 = vector.load %arg8[%c3_85, %c0_86] : memref<8x128xf32, #tpu.memory_space<vmem>>, vector<3x128xf32>
      %c3_87 = arith.constant 3 : index
      %c0_88 = arith.constant 0 : index
      %c0_89 = arith.constant 0 : index
      %139 = vector.load %arg7[%c3_87, %c0_88, %c0_89] : memref<8x3x128xf32, #tpu.memory_space<vmem>>, vector<1x3x128xf32>
      %140 = vector.shape_cast %139 : vector<1x3x128xf32> to vector<3x128xf32>
      %141 = vector.shape_cast %138 : vector<3x128xf32> to vector<1x3x128xf32>
      tpu.vector_store %arg7[%c3_87, %c0_88, %c0_89], %141 {strides = array<i32>} : memref<8x3x128xf32, #tpu.memory_space<vmem>>, vector<1x3x128xf32>,
    } else {
    }
    %c8_i32_22 = arith.constant 8 : i32
    %34 = arith.muli %arg0, %c8_i32_22 : i32
    %c4_i32 = arith.constant 4 : i32
    %35 = arith.addi %34, %c4_i32 : i32
    %c0_i32_23 = arith.constant 0 : i32
    %36 = arith.cmpi eq, %35, %c0_i32_23 : i32
    %37 = arith.extui %36 : i1 to i32
    %c0_i32_24 = arith.constant 0 : i32
    %38 = arith.cmpi ne, %37, %c0_i32_24 : i32
    scf.if %38 {
      %c0_42 = arith.constant 0 : index
      %c0_43 = arith.constant 0 : index
      %66 = vector.load %arg1[%c0_42, %c0_43] : memref<3x128xf32, #tpu.memory_space<vmem>>, vector<3x128xf32>
      %c0_44 = arith.constant 0 : index
      %c0_45 = arith.constant 0 : index
      %67 = vector.load %arg8[%c0_44, %c0_45] : memref<8x128xf32, #tpu.memory_space<vmem>>, vector<3x128xf32>
      tpu.vector_store %arg8[%c0_44, %c0_45], %66 {strides = array<i32>} : memref<8x128xf32, #tpu.memory_space<vmem>>, vector<3x128xf32>,
      %c3 = arith.constant 3 : index
      %c0_46 = arith.constant 0 : index
      %68 = vector.load %arg8[%c3, %c0_46] : memref<8x128xf32, #tpu.memory_space<vmem>>, vector<3x128xf32>
      tpu.vector_store %arg8[%c3, %c0_46], %66 {strides = array<i32>} : memref<8x128xf32, #tpu.memory_space<vmem>>, vector<3x128xf32>,
      %c0_47 = arith.constant 0 : index
      %c0_48 = arith.constant 0 : index
      %c0_49 = arith.constant 0 : index
      %69 = vector.load %arg6[%c0_47, %c0_48, %c0_49] : memref<8x3x128xf32, #tpu.memory_space<vmem>>, vector<1x3x128xf32>
      %70 = vector.shape_cast %69 : vector<1x3x128xf32> to vector<3x128xf32>
      %71 = vector.shape_cast %66 : vector<3x128xf32> to vector<1x3x128xf32>
      tpu.vector_store %arg6[%c0_47, %c0_48, %c0_49], %71 {strides = array<i32>} : memref<8x3x128xf32, #tpu.memory_space<vmem>>, vector<1x3x128xf32>,
      %c0_50 = arith.constant 0 : index
      %c0_51 = arith.constant 0 : index
      %c0_52 = arith.constant 0 : index
      %72 = vector.load %arg7[%c0_50, %c0_51, %c0_52] : memref<8x3x128xf32, #tpu.memory_space<vmem>>, vector<1x3x128xf32>
      %73 = vector.shape_cast %72 : vector<1x3x128xf32> to vector<3x128xf32>
      %74 = vector.shape_cast %66 : vector<3x128xf32> to vector<1x3x128xf32>
      tpu.vector_store %arg7[%c0_50, %c0_51, %c0_52], %74 {strides = array<i32>} : memref<8x3x128xf32, #tpu.memory_space<vmem>>, vector<1x3x128xf32>,
    } else {
    }
    %c0_i32_25 = arith.constant 0 : i32
    %39 = arith.cmpi sgt, %35, %c0_i32_25 : i32
    %40 = arith.extui %39 : i1 to i32
    %c0_i32_26 = arith.constant 0 : i32
    %41 = arith.cmpi ne, %40, %c0_i32_26 : i32
    scf.if %41 {
      %c4 = arith.constant 4 : index
      %c0_42 = arith.constant 0 : index
      %c0_43 = arith.constant 0 : index
      %66 = vector.load %arg2[%c4, %c0_42, %c0_43] : memref<8x16x128xbf16, #tpu.memory_space<vmem>>, vector<1x16x128xbf16>
      %67 = vector.shape_cast %66 : vector<1x16x128xbf16> to vector<16x128xbf16>
      %c0_44 = arith.constant 0 : index
      %c0_45 = arith.constant 0 : index
      %68 = vector.load %arg8[%c0_44, %c0_45] : memref<8x128xf32, #tpu.memory_space<vmem>>, vector<1x128xf32>
      %c1 = arith.constant 1 : index
      %c0_46 = arith.constant 0 : index
      %69 = vector.load %arg8[%c1, %c0_46] : memref<8x128xf32, #tpu.memory_space<vmem>>, vector<1x128xf32>
      %c2 = arith.constant 2 : index
      %c0_47 = arith.constant 0 : index
      %70 = vector.load %arg8[%c2, %c0_47] : memref<8x128xf32, #tpu.memory_space<vmem>>, vector<1x128xf32>
      %c3 = arith.constant 3 : index
      %c0_48 = arith.constant 0 : index
      %71 = vector.load %arg8[%c3, %c0_48] : memref<8x128xf32, #tpu.memory_space<vmem>>, vector<1x128xf32>
      %c4_49 = arith.constant 4 : index
      %c0_50 = arith.constant 0 : index
      %72 = vector.load %arg8[%c4_49, %c0_50] : memref<8x128xf32, #tpu.memory_space<vmem>>, vector<1x128xf32>
      %73 = arith.truncf %72 : vector<1x128xf32> to vector<1x128xbf16>
      %cst = arith.constant dense<0.000000e+00> : vector<1x16xf32>
      %74 = tpu.matmul %73, %67, %cst {dimension_numbers = #tpu.dot_dimension_numbers<[1], [1], [0], [0], [0, 0, 1, 0], [], []>} : vector<1x128xbf16>, vector<16x128xbf16>, vector<1x16xf32> -> vector<1x16xf32>
      %75 = arith.truncf %74 : vector<1x16xf32> to vector<1x16xbf16>
      %cst_51 = arith.constant dense<0.000000e+00> : vector<1x128xf32>
      %76 = tpu.matmul %75, %67, %cst_51 {dimension_numbers = #tpu.dot_dimension_numbers<[1], [0], [0], [1], [0, 0, 1, 1], [], []>} : vector<1x16xbf16>, vector<16x128xbf16>, vector<1x128xf32> -> vector<1x128xf32>
      %77 = arith.mulf %0, %76 : vector<1x128xf32>
      %78 = arith.mulf %1, %72 : vector<1x128xf32>
      %79 = arith.subf %68, %77 : vector<1x128xf32>
      %cst_52 = arith.constant 0.000000e+00 : f32
      %cst_53 = arith.constant 1.000000e+00 : f32
      %80 = vector.broadcast %cst_52 : f32 to vector<1x128xf32>
      %81 = arith.maximumf %80, %79 : vector<1x128xf32>
      %82 = vector.broadcast %cst_53 : f32 to vector<1x128xf32>
      %83 = arith.minimumf %82, %81 : vector<1x128xf32>
      %84 = arith.addf %69, %77 : vector<1x128xf32>
      %85 = arith.subf %84, %78 : vector<1x128xf32>
      %cst_54 = arith.constant 0.000000e+00 : f32
      %cst_55 = arith.constant 1.000000e+00 : f32
      %86 = vector.broadcast %cst_54 : f32 to vector<1x128xf32>
      %87 = arith.maximumf %86, %85 : vector<1x128xf32>
      %88 = vector.broadcast %cst_55 : f32 to vector<1x128xf32>
      %89 = arith.minimumf %88, %87 : vector<1x128xf32>
      %90 = arith.addf %70, %78 : vector<1x128xf32>
      %cst_56 = arith.constant 0.000000e+00 : f32
      %cst_57 = arith.constant 1.000000e+00 : f32
      %91 = vector.broadcast %cst_56 : f32 to vector<1x128xf32>
      %92 = arith.maximumf %91, %90 : vector<1x128xf32>
      %93 = vector.broadcast %cst_57 : f32 to vector<1x128xf32>
      %94 = arith.minimumf %93, %92 : vector<1x128xf32>
      %c4_58 = arith.constant 4 : index
      %c0_59 = arith.constant 0 : index
      %c0_60 = arith.constant 0 : index
      %95 = vector.load %arg3[%c4_58, %c0_59, %c0_60] : memref<8x2x128xf32, #tpu.memory_space<vmem>>, vector<1x2x128xf32>
      %96 = vector.shape_cast %95 : vector<1x2x128xf32> to vector<2x128xf32>
      %97 = vector.extract_strided_slice %96 {offsets = [0, 0], sizes = [1, 128], strides = [1, 1]} : vector<2x128xf32> to vector<1x128xf32>
      %98 = vector.extract_strided_slice %96 {offsets = [1, 0], sizes = [1, 128], strides = [1, 1]} : vector<2x128xf32> to vector<1x128xf32>
      %cst_61 = arith.constant 5.000000e-01 : f32
      %99 = vector.broadcast %cst_61 : f32 to vector<1x128xf32>
      %100 = arith.cmpf ogt, %71, %99 : vector<1x128xf32>
      %cst_62 = arith.constant 5.000000e-01 : f32
      %101 = vector.broadcast %cst_62 : f32 to vector<1x128xf32>
      %102 = arith.cmpf ogt, %72, %101 : vector<1x128xf32>
      %103 = arith.cmpf olt, %97, %89 : vector<1x128xf32>
      %104 = arith.andi %100, %103 : vector<1x128xi1>
      %105 = arith.cmpf olt, %97, %94 : vector<1x128xf32>
      %106 = arith.andi %102, %105 : vector<1x128xi1>
      %cst_63 = arith.constant 5.000000e-01 : f32
      %107 = vector.broadcast %cst_63 : f32 to vector<1x128xf32>
      %108 = arith.cmpf olt, %98, %107 : vector<1x128xf32>
      %109 = arith.andi %106, %108 : vector<1x128xi1>
      %cst_64 = arith.constant dense<true> : vector<1x128xi1>
      %110 = arith.xori %108, %cst_64 : vector<1x128xi1>
      %111 = arith.andi %106, %110 : vector<1x128xi1>
      %cst_65 = arith.constant dense<true> : vector<1x128xi1>
      %112 = arith.xori %106, %cst_65 : vector<1x128xi1>
      %113 = arith.andi %102, %112 : vector<1x128xi1>
      %cst_66 = arith.constant dense<true> : vector<1x128xi1>
      %114 = arith.xori %104, %cst_66 : vector<1x128xi1>
      %115 = arith.andi %100, %114 : vector<1x128xi1>
      %116 = arith.ori %115, %111 : vector<1x128xi1>
      %117 = arith.ori %104, %113 : vector<1x128xi1>
      %cst_67 = arith.constant dense<true> : vector<1x128xi1>
      %118 = arith.xori %100, %cst_67 : vector<1x128xi1>
      %cst_68 = arith.constant dense<true> : vector<1x128xi1>
      %119 = arith.xori %102, %cst_68 : vector<1x128xi1>
      %120 = arith.andi %118, %119 : vector<1x128xi1>
      %121 = arith.ori %109, %120 : vector<1x128xi1>
      %c0_69 = arith.constant 0 : index
      %c0_70 = arith.constant 0 : index
      %122 = vector.load %arg8[%c0_69, %c0_70] : memref<8x128xf32, #tpu.memory_space<vmem>>, vector<1x128xf32>
      tpu.vector_store %arg8[%c0_69, %c0_70], %83 {strides = array<i32>} : memref<8x128xf32, #tpu.memory_space<vmem>>, vector<1x128xf32>,
      %c1_71 = arith.constant 1 : index
      %c0_72 = arith.constant 0 : index
      %123 = vector.load %arg8[%c1_71, %c0_72] : memref<8x128xf32, #tpu.memory_space<vmem>>, vector<1x128xf32>
      tpu.vector_store %arg8[%c1_71, %c0_72], %89 {strides = array<i32>} : memref<8x128xf32, #tpu.memory_space<vmem>>, vector<1x128xf32>,
      %c2_73 = arith.constant 2 : index
      %c0_74 = arith.constant 0 : index
      %124 = vector.load %arg8[%c2_73, %c0_74] : memref<8x128xf32, #tpu.memory_space<vmem>>, vector<1x128xf32>
      tpu.vector_store %arg8[%c2_73, %c0_74], %94 {strides = array<i32>} : memref<8x128xf32, #tpu.memory_space<vmem>>, vector<1x128xf32>,
      %125 = arith.extui %116 : vector<1x128xi1> to vector<1x128xi32>
      %126 = arith.sitofp %125 : vector<1x128xi32> to vector<1x128xf32>
      %c3_75 = arith.constant 3 : index
      %c0_76 = arith.constant 0 : index
      %127 = vector.load %arg8[%c3_75, %c0_76] : memref<8x128xf32, #tpu.memory_space<vmem>>, vector<1x128xf32>
      tpu.vector_store %arg8[%c3_75, %c0_76], %126 {strides = array<i32>} : memref<8x128xf32, #tpu.memory_space<vmem>>, vector<1x128xf32>,
      %128 = arith.extui %117 : vector<1x128xi1> to vector<1x128xi32>
      %129 = arith.sitofp %128 : vector<1x128xi32> to vector<1x128xf32>
      %c4_77 = arith.constant 4 : index
      %c0_78 = arith.constant 0 : index
      %130 = vector.load %arg8[%c4_77, %c0_78] : memref<8x128xf32, #tpu.memory_space<vmem>>, vector<1x128xf32>
      tpu.vector_store %arg8[%c4_77, %c0_78], %129 {strides = array<i32>} : memref<8x128xf32, #tpu.memory_space<vmem>>, vector<1x128xf32>,
      %131 = arith.extui %121 : vector<1x128xi1> to vector<1x128xi32>
      %132 = arith.sitofp %131 : vector<1x128xi32> to vector<1x128xf32>
      %c5 = arith.constant 5 : index
      %c0_79 = arith.constant 0 : index
      %133 = vector.load %arg8[%c5, %c0_79] : memref<8x128xf32, #tpu.memory_space<vmem>>, vector<1x128xf32>
      tpu.vector_store %arg8[%c5, %c0_79], %132 {strides = array<i32>} : memref<8x128xf32, #tpu.memory_space<vmem>>, vector<1x128xf32>,
      %c0_80 = arith.constant 0 : index
      %c0_81 = arith.constant 0 : index
      %134 = vector.load %arg8[%c0_80, %c0_81] : memref<8x128xf32, #tpu.memory_space<vmem>>, vector<3x128xf32>
      %c4_82 = arith.constant 4 : index
      %c0_83 = arith.constant 0 : index
      %c0_84 = arith.constant 0 : index
      %135 = vector.load %arg6[%c4_82, %c0_83, %c0_84] : memref<8x3x128xf32, #tpu.memory_space<vmem>>, vector<1x3x128xf32>
      %136 = vector.shape_cast %135 : vector<1x3x128xf32> to vector<3x128xf32>
      %137 = vector.shape_cast %134 : vector<3x128xf32> to vector<1x3x128xf32>
      tpu.vector_store %arg6[%c4_82, %c0_83, %c0_84], %137 {strides = array<i32>} : memref<8x3x128xf32, #tpu.memory_space<vmem>>, vector<1x3x128xf32>,
      %c3_85 = arith.constant 3 : index
      %c0_86 = arith.constant 0 : index
      %138 = vector.load %arg8[%c3_85, %c0_86] : memref<8x128xf32, #tpu.memory_space<vmem>>, vector<3x128xf32>
      %c4_87 = arith.constant 4 : index
      %c0_88 = arith.constant 0 : index
      %c0_89 = arith.constant 0 : index
      %139 = vector.load %arg7[%c4_87, %c0_88, %c0_89] : memref<8x3x128xf32, #tpu.memory_space<vmem>>, vector<1x3x128xf32>
      %140 = vector.shape_cast %139 : vector<1x3x128xf32> to vector<3x128xf32>
      %141 = vector.shape_cast %138 : vector<3x128xf32> to vector<1x3x128xf32>
      tpu.vector_store %arg7[%c4_87, %c0_88, %c0_89], %141 {strides = array<i32>} : memref<8x3x128xf32, #tpu.memory_space<vmem>>, vector<1x3x128xf32>,
    } else {
    }
    %c8_i32_27 = arith.constant 8 : i32
    %42 = arith.muli %arg0, %c8_i32_27 : i32
    %c5_i32 = arith.constant 5 : i32
    %43 = arith.addi %42, %c5_i32 : i32
    %c0_i32_28 = arith.constant 0 : i32
    %44 = arith.cmpi eq, %43, %c0_i32_28 : i32
    %45 = arith.extui %44 : i1 to i32
    %c0_i32_29 = arith.constant 0 : i32
    %46 = arith.cmpi ne, %45, %c0_i32_29 : i32
    scf.if %46 {
      %c0_42 = arith.constant 0 : index
      %c0_43 = arith.constant 0 : index
      %66 = vector.load %arg1[%c0_42, %c0_43] : memref<3x128xf32, #tpu.memory_space<vmem>>, vector<3x128xf32>
      %c0_44 = arith.constant 0 : index
      %c0_45 = arith.constant 0 : index
      %67 = vector.load %arg8[%c0_44, %c0_45] : memref<8x128xf32, #tpu.memory_space<vmem>>, vector<3x128xf32>
      tpu.vector_store %arg8[%c0_44, %c0_45], %66 {strides = array<i32>} : memref<8x128xf32, #tpu.memory_space<vmem>>, vector<3x128xf32>,
      %c3 = arith.constant 3 : index
      %c0_46 = arith.constant 0 : index
      %68 = vector.load %arg8[%c3, %c0_46] : memref<8x128xf32, #tpu.memory_space<vmem>>, vector<3x128xf32>
      tpu.vector_store %arg8[%c3, %c0_46], %66 {strides = array<i32>} : memref<8x128xf32, #tpu.memory_space<vmem>>, vector<3x128xf32>,
      %c0_47 = arith.constant 0 : index
      %c0_48 = arith.constant 0 : index
      %c0_49 = arith.constant 0 : index
      %69 = vector.load %arg6[%c0_47, %c0_48, %c0_49] : memref<8x3x128xf32, #tpu.memory_space<vmem>>, vector<1x3x128xf32>
      %70 = vector.shape_cast %69 : vector<1x3x128xf32> to vector<3x128xf32>
      %71 = vector.shape_cast %66 : vector<3x128xf32> to vector<1x3x128xf32>
      tpu.vector_store %arg6[%c0_47, %c0_48, %c0_49], %71 {strides = array<i32>} : memref<8x3x128xf32, #tpu.memory_space<vmem>>, vector<1x3x128xf32>,
      %c0_50 = arith.constant 0 : index
      %c0_51 = arith.constant 0 : index
      %c0_52 = arith.constant 0 : index
      %72 = vector.load %arg7[%c0_50, %c0_51, %c0_52] : memref<8x3x128xf32, #tpu.memory_space<vmem>>, vector<1x3x128xf32>
      %73 = vector.shape_cast %72 : vector<1x3x128xf32> to vector<3x128xf32>
      %74 = vector.shape_cast %66 : vector<3x128xf32> to vector<1x3x128xf32>
      tpu.vector_store %arg7[%c0_50, %c0_51, %c0_52], %74 {strides = array<i32>} : memref<8x3x128xf32, #tpu.memory_space<vmem>>, vector<1x3x128xf32>,
    } else {
    }
    %c0_i32_30 = arith.constant 0 : i32
    %47 = arith.cmpi sgt, %43, %c0_i32_30 : i32
    %48 = arith.extui %47 : i1 to i32
    %c0_i32_31 = arith.constant 0 : i32
    %49 = arith.cmpi ne, %48, %c0_i32_31 : i32
    scf.if %49 {
      %c5 = arith.constant 5 : index
      %c0_42 = arith.constant 0 : index
      %c0_43 = arith.constant 0 : index
      %66 = vector.load %arg2[%c5, %c0_42, %c0_43] : memref<8x16x128xbf16, #tpu.memory_space<vmem>>, vector<1x16x128xbf16>
      %67 = vector.shape_cast %66 : vector<1x16x128xbf16> to vector<16x128xbf16>
      %c0_44 = arith.constant 0 : index
      %c0_45 = arith.constant 0 : index
      %68 = vector.load %arg8[%c0_44, %c0_45] : memref<8x128xf32, #tpu.memory_space<vmem>>, vector<1x128xf32>
      %c1 = arith.constant 1 : index
      %c0_46 = arith.constant 0 : index
      %69 = vector.load %arg8[%c1, %c0_46] : memref<8x128xf32, #tpu.memory_space<vmem>>, vector<1x128xf32>
      %c2 = arith.constant 2 : index
      %c0_47 = arith.constant 0 : index
      %70 = vector.load %arg8[%c2, %c0_47] : memref<8x128xf32, #tpu.memory_space<vmem>>, vector<1x128xf32>
      %c3 = arith.constant 3 : index
      %c0_48 = arith.constant 0 : index
      %71 = vector.load %arg8[%c3, %c0_48] : memref<8x128xf32, #tpu.memory_space<vmem>>, vector<1x128xf32>
      %c4 = arith.constant 4 : index
      %c0_49 = arith.constant 0 : index
      %72 = vector.load %arg8[%c4, %c0_49] : memref<8x128xf32, #tpu.memory_space<vmem>>, vector<1x128xf32>
      %73 = arith.truncf %72 : vector<1x128xf32> to vector<1x128xbf16>
      %cst = arith.constant dense<0.000000e+00> : vector<1x16xf32>
      %74 = tpu.matmul %73, %67, %cst {dimension_numbers = #tpu.dot_dimension_numbers<[1], [1], [0], [0], [0, 0, 1, 0], [], []>} : vector<1x128xbf16>, vector<16x128xbf16>, vector<1x16xf32> -> vector<1x16xf32>
      %75 = arith.truncf %74 : vector<1x16xf32> to vector<1x16xbf16>
      %cst_50 = arith.constant dense<0.000000e+00> : vector<1x128xf32>
      %76 = tpu.matmul %75, %67, %cst_50 {dimension_numbers = #tpu.dot_dimension_numbers<[1], [0], [0], [1], [0, 0, 1, 1], [], []>} : vector<1x16xbf16>, vector<16x128xbf16>, vector<1x128xf32> -> vector<1x128xf32>
      %77 = arith.mulf %0, %76 : vector<1x128xf32>
      %78 = arith.mulf %1, %72 : vector<1x128xf32>
      %79 = arith.subf %68, %77 : vector<1x128xf32>
      %cst_51 = arith.constant 0.000000e+00 : f32
      %cst_52 = arith.constant 1.000000e+00 : f32
      %80 = vector.broadcast %cst_51 : f32 to vector<1x128xf32>
      %81 = arith.maximumf %80, %79 : vector<1x128xf32>
      %82 = vector.broadcast %cst_52 : f32 to vector<1x128xf32>
      %83 = arith.minimumf %82, %81 : vector<1x128xf32>
      %84 = arith.addf %69, %77 : vector<1x128xf32>
      %85 = arith.subf %84, %78 : vector<1x128xf32>
      %cst_53 = arith.constant 0.000000e+00 : f32
      %cst_54 = arith.constant 1.000000e+00 : f32
      %86 = vector.broadcast %cst_53 : f32 to vector<1x128xf32>
      %87 = arith.maximumf %86, %85 : vector<1x128xf32>
      %88 = vector.broadcast %cst_54 : f32 to vector<1x128xf32>
      %89 = arith.minimumf %88, %87 : vector<1x128xf32>
      %90 = arith.addf %70, %78 : vector<1x128xf32>
      %cst_55 = arith.constant 0.000000e+00 : f32
      %cst_56 = arith.constant 1.000000e+00 : f32
      %91 = vector.broadcast %cst_55 : f32 to vector<1x128xf32>
      %92 = arith.maximumf %91, %90 : vector<1x128xf32>
      %93 = vector.broadcast %cst_56 : f32 to vector<1x128xf32>
      %94 = arith.minimumf %93, %92 : vector<1x128xf32>
      %c5_57 = arith.constant 5 : index
      %c0_58 = arith.constant 0 : index
      %c0_59 = arith.constant 0 : index
      %95 = vector.load %arg3[%c5_57, %c0_58, %c0_59] : memref<8x2x128xf32, #tpu.memory_space<vmem>>, vector<1x2x128xf32>
      %96 = vector.shape_cast %95 : vector<1x2x128xf32> to vector<2x128xf32>
      %97 = vector.extract_strided_slice %96 {offsets = [0, 0], sizes = [1, 128], strides = [1, 1]} : vector<2x128xf32> to vector<1x128xf32>
      %98 = vector.extract_strided_slice %96 {offsets = [1, 0], sizes = [1, 128], strides = [1, 1]} : vector<2x128xf32> to vector<1x128xf32>
      %cst_60 = arith.constant 5.000000e-01 : f32
      %99 = vector.broadcast %cst_60 : f32 to vector<1x128xf32>
      %100 = arith.cmpf ogt, %71, %99 : vector<1x128xf32>
      %cst_61 = arith.constant 5.000000e-01 : f32
      %101 = vector.broadcast %cst_61 : f32 to vector<1x128xf32>
      %102 = arith.cmpf ogt, %72, %101 : vector<1x128xf32>
      %103 = arith.cmpf olt, %97, %89 : vector<1x128xf32>
      %104 = arith.andi %100, %103 : vector<1x128xi1>
      %105 = arith.cmpf olt, %97, %94 : vector<1x128xf32>
      %106 = arith.andi %102, %105 : vector<1x128xi1>
      %cst_62 = arith.constant 5.000000e-01 : f32
      %107 = vector.broadcast %cst_62 : f32 to vector<1x128xf32>
      %108 = arith.cmpf olt, %98, %107 : vector<1x128xf32>
      %109 = arith.andi %106, %108 : vector<1x128xi1>
      %cst_63 = arith.constant dense<true> : vector<1x128xi1>
      %110 = arith.xori %108, %cst_63 : vector<1x128xi1>
      %111 = arith.andi %106, %110 : vector<1x128xi1>
      %cst_64 = arith.constant dense<true> : vector<1x128xi1>
      %112 = arith.xori %106, %cst_64 : vector<1x128xi1>
      %113 = arith.andi %102, %112 : vector<1x128xi1>
      %cst_65 = arith.constant dense<true> : vector<1x128xi1>
      %114 = arith.xori %104, %cst_65 : vector<1x128xi1>
      %115 = arith.andi %100, %114 : vector<1x128xi1>
      %116 = arith.ori %115, %111 : vector<1x128xi1>
      %117 = arith.ori %104, %113 : vector<1x128xi1>
      %cst_66 = arith.constant dense<true> : vector<1x128xi1>
      %118 = arith.xori %100, %cst_66 : vector<1x128xi1>
      %cst_67 = arith.constant dense<true> : vector<1x128xi1>
      %119 = arith.xori %102, %cst_67 : vector<1x128xi1>
      %120 = arith.andi %118, %119 : vector<1x128xi1>
      %121 = arith.ori %109, %120 : vector<1x128xi1>
      %c0_68 = arith.constant 0 : index
      %c0_69 = arith.constant 0 : index
      %122 = vector.load %arg8[%c0_68, %c0_69] : memref<8x128xf32, #tpu.memory_space<vmem>>, vector<1x128xf32>
      tpu.vector_store %arg8[%c0_68, %c0_69], %83 {strides = array<i32>} : memref<8x128xf32, #tpu.memory_space<vmem>>, vector<1x128xf32>,
      %c1_70 = arith.constant 1 : index
      %c0_71 = arith.constant 0 : index
      %123 = vector.load %arg8[%c1_70, %c0_71] : memref<8x128xf32, #tpu.memory_space<vmem>>, vector<1x128xf32>
      tpu.vector_store %arg8[%c1_70, %c0_71], %89 {strides = array<i32>} : memref<8x128xf32, #tpu.memory_space<vmem>>, vector<1x128xf32>,
      %c2_72 = arith.constant 2 : index
      %c0_73 = arith.constant 0 : index
      %124 = vector.load %arg8[%c2_72, %c0_73] : memref<8x128xf32, #tpu.memory_space<vmem>>, vector<1x128xf32>
      tpu.vector_store %arg8[%c2_72, %c0_73], %94 {strides = array<i32>} : memref<8x128xf32, #tpu.memory_space<vmem>>, vector<1x128xf32>,
      %125 = arith.extui %116 : vector<1x128xi1> to vector<1x128xi32>
      %126 = arith.sitofp %125 : vector<1x128xi32> to vector<1x128xf32>
      %c3_74 = arith.constant 3 : index
      %c0_75 = arith.constant 0 : index
      %127 = vector.load %arg8[%c3_74, %c0_75] : memref<8x128xf32, #tpu.memory_space<vmem>>, vector<1x128xf32>
      tpu.vector_store %arg8[%c3_74, %c0_75], %126 {strides = array<i32>} : memref<8x128xf32, #tpu.memory_space<vmem>>, vector<1x128xf32>,
      %128 = arith.extui %117 : vector<1x128xi1> to vector<1x128xi32>
      %129 = arith.sitofp %128 : vector<1x128xi32> to vector<1x128xf32>
      %c4_76 = arith.constant 4 : index
      %c0_77 = arith.constant 0 : index
      %130 = vector.load %arg8[%c4_76, %c0_77] : memref<8x128xf32, #tpu.memory_space<vmem>>, vector<1x128xf32>
      tpu.vector_store %arg8[%c4_76, %c0_77], %129 {strides = array<i32>} : memref<8x128xf32, #tpu.memory_space<vmem>>, vector<1x128xf32>,
      %131 = arith.extui %121 : vector<1x128xi1> to vector<1x128xi32>
      %132 = arith.sitofp %131 : vector<1x128xi32> to vector<1x128xf32>
      %c5_78 = arith.constant 5 : index
      %c0_79 = arith.constant 0 : index
      %133 = vector.load %arg8[%c5_78, %c0_79] : memref<8x128xf32, #tpu.memory_space<vmem>>, vector<1x128xf32>
      tpu.vector_store %arg8[%c5_78, %c0_79], %132 {strides = array<i32>} : memref<8x128xf32, #tpu.memory_space<vmem>>, vector<1x128xf32>,
      %c0_80 = arith.constant 0 : index
      %c0_81 = arith.constant 0 : index
      %134 = vector.load %arg8[%c0_80, %c0_81] : memref<8x128xf32, #tpu.memory_space<vmem>>, vector<3x128xf32>
      %c5_82 = arith.constant 5 : index
      %c0_83 = arith.constant 0 : index
      %c0_84 = arith.constant 0 : index
      %135 = vector.load %arg6[%c5_82, %c0_83, %c0_84] : memref<8x3x128xf32, #tpu.memory_space<vmem>>, vector<1x3x128xf32>
      %136 = vector.shape_cast %135 : vector<1x3x128xf32> to vector<3x128xf32>
      %137 = vector.shape_cast %134 : vector<3x128xf32> to vector<1x3x128xf32>
      tpu.vector_store %arg6[%c5_82, %c0_83, %c0_84], %137 {strides = array<i32>} : memref<8x3x128xf32, #tpu.memory_space<vmem>>, vector<1x3x128xf32>,
      %c3_85 = arith.constant 3 : index
      %c0_86 = arith.constant 0 : index
      %138 = vector.load %arg8[%c3_85, %c0_86] : memref<8x128xf32, #tpu.memory_space<vmem>>, vector<3x128xf32>
      %c5_87 = arith.constant 5 : index
      %c0_88 = arith.constant 0 : index
      %c0_89 = arith.constant 0 : index
      %139 = vector.load %arg7[%c5_87, %c0_88, %c0_89] : memref<8x3x128xf32, #tpu.memory_space<vmem>>, vector<1x3x128xf32>
      %140 = vector.shape_cast %139 : vector<1x3x128xf32> to vector<3x128xf32>
      %141 = vector.shape_cast %138 : vector<3x128xf32> to vector<1x3x128xf32>
      tpu.vector_store %arg7[%c5_87, %c0_88, %c0_89], %141 {strides = array<i32>} : memref<8x3x128xf32, #tpu.memory_space<vmem>>, vector<1x3x128xf32>,
    } else {
    }
    %c8_i32_32 = arith.constant 8 : i32
    %50 = arith.muli %arg0, %c8_i32_32 : i32
    %c6_i32 = arith.constant 6 : i32
    %51 = arith.addi %50, %c6_i32 : i32
    %c0_i32_33 = arith.constant 0 : i32
    %52 = arith.cmpi eq, %51, %c0_i32_33 : i32
    %53 = arith.extui %52 : i1 to i32
    %c0_i32_34 = arith.constant 0 : i32
    %54 = arith.cmpi ne, %53, %c0_i32_34 : i32
    scf.if %54 {
      %c0_42 = arith.constant 0 : index
      %c0_43 = arith.constant 0 : index
      %66 = vector.load %arg1[%c0_42, %c0_43] : memref<3x128xf32, #tpu.memory_space<vmem>>, vector<3x128xf32>
      %c0_44 = arith.constant 0 : index
      %c0_45 = arith.constant 0 : index
      %67 = vector.load %arg8[%c0_44, %c0_45] : memref<8x128xf32, #tpu.memory_space<vmem>>, vector<3x128xf32>
      tpu.vector_store %arg8[%c0_44, %c0_45], %66 {strides = array<i32>} : memref<8x128xf32, #tpu.memory_space<vmem>>, vector<3x128xf32>,
      %c3 = arith.constant 3 : index
      %c0_46 = arith.constant 0 : index
      %68 = vector.load %arg8[%c3, %c0_46] : memref<8x128xf32, #tpu.memory_space<vmem>>, vector<3x128xf32>
      tpu.vector_store %arg8[%c3, %c0_46], %66 {strides = array<i32>} : memref<8x128xf32, #tpu.memory_space<vmem>>, vector<3x128xf32>,
      %c0_47 = arith.constant 0 : index
      %c0_48 = arith.constant 0 : index
      %c0_49 = arith.constant 0 : index
      %69 = vector.load %arg6[%c0_47, %c0_48, %c0_49] : memref<8x3x128xf32, #tpu.memory_space<vmem>>, vector<1x3x128xf32>
      %70 = vector.shape_cast %69 : vector<1x3x128xf32> to vector<3x128xf32>
      %71 = vector.shape_cast %66 : vector<3x128xf32> to vector<1x3x128xf32>
      tpu.vector_store %arg6[%c0_47, %c0_48, %c0_49], %71 {strides = array<i32>} : memref<8x3x128xf32, #tpu.memory_space<vmem>>, vector<1x3x128xf32>,
      %c0_50 = arith.constant 0 : index
      %c0_51 = arith.constant 0 : index
      %c0_52 = arith.constant 0 : index
      %72 = vector.load %arg7[%c0_50, %c0_51, %c0_52] : memref<8x3x128xf32, #tpu.memory_space<vmem>>, vector<1x3x128xf32>
      %73 = vector.shape_cast %72 : vector<1x3x128xf32> to vector<3x128xf32>
      %74 = vector.shape_cast %66 : vector<3x128xf32> to vector<1x3x128xf32>
      tpu.vector_store %arg7[%c0_50, %c0_51, %c0_52], %74 {strides = array<i32>} : memref<8x3x128xf32, #tpu.memory_space<vmem>>, vector<1x3x128xf32>,
    } else {
    }
    %c0_i32_35 = arith.constant 0 : i32
    %55 = arith.cmpi sgt, %51, %c0_i32_35 : i32
    %56 = arith.extui %55 : i1 to i32
    %c0_i32_36 = arith.constant 0 : i32
    %57 = arith.cmpi ne, %56, %c0_i32_36 : i32
    scf.if %57 {
      %c6 = arith.constant 6 : index
      %c0_42 = arith.constant 0 : index
      %c0_43 = arith.constant 0 : index
      %66 = vector.load %arg2[%c6, %c0_42, %c0_43] : memref<8x16x128xbf16, #tpu.memory_space<vmem>>, vector<1x16x128xbf16>
      %67 = vector.shape_cast %66 : vector<1x16x128xbf16> to vector<16x128xbf16>
      %c0_44 = arith.constant 0 : index
      %c0_45 = arith.constant 0 : index
      %68 = vector.load %arg8[%c0_44, %c0_45] : memref<8x128xf32, #tpu.memory_space<vmem>>, vector<1x128xf32>
      %c1 = arith.constant 1 : index
      %c0_46 = arith.constant 0 : index
      %69 = vector.load %arg8[%c1, %c0_46] : memref<8x128xf32, #tpu.memory_space<vmem>>, vector<1x128xf32>
      %c2 = arith.constant 2 : index
      %c0_47 = arith.constant 0 : index
      %70 = vector.load %arg8[%c2, %c0_47] : memref<8x128xf32, #tpu.memory_space<vmem>>, vector<1x128xf32>
      %c3 = arith.constant 3 : index
      %c0_48 = arith.constant 0 : index
      %71 = vector.load %arg8[%c3, %c0_48] : memref<8x128xf32, #tpu.memory_space<vmem>>, vector<1x128xf32>
      %c4 = arith.constant 4 : index
      %c0_49 = arith.constant 0 : index
      %72 = vector.load %arg8[%c4, %c0_49] : memref<8x128xf32, #tpu.memory_space<vmem>>, vector<1x128xf32>
      %73 = arith.truncf %72 : vector<1x128xf32> to vector<1x128xbf16>
      %cst = arith.constant dense<0.000000e+00> : vector<1x16xf32>
      %74 = tpu.matmul %73, %67, %cst {dimension_numbers = #tpu.dot_dimension_numbers<[1], [1], [0], [0], [0, 0, 1, 0], [], []>} : vector<1x128xbf16>, vector<16x128xbf16>, vector<1x16xf32> -> vector<1x16xf32>
      %75 = arith.truncf %74 : vector<1x16xf32> to vector<1x16xbf16>
      %cst_50 = arith.constant dense<0.000000e+00> : vector<1x128xf32>
      %76 = tpu.matmul %75, %67, %cst_50 {dimension_numbers = #tpu.dot_dimension_numbers<[1], [0], [0], [1], [0, 0, 1, 1], [], []>} : vector<1x16xbf16>, vector<16x128xbf16>, vector<1x128xf32> -> vector<1x128xf32>
      %77 = arith.mulf %0, %76 : vector<1x128xf32>
      %78 = arith.mulf %1, %72 : vector<1x128xf32>
      %79 = arith.subf %68, %77 : vector<1x128xf32>
      %cst_51 = arith.constant 0.000000e+00 : f32
      %cst_52 = arith.constant 1.000000e+00 : f32
      %80 = vector.broadcast %cst_51 : f32 to vector<1x128xf32>
      %81 = arith.maximumf %80, %79 : vector<1x128xf32>
      %82 = vector.broadcast %cst_52 : f32 to vector<1x128xf32>
      %83 = arith.minimumf %82, %81 : vector<1x128xf32>
      %84 = arith.addf %69, %77 : vector<1x128xf32>
      %85 = arith.subf %84, %78 : vector<1x128xf32>
      %cst_53 = arith.constant 0.000000e+00 : f32
      %cst_54 = arith.constant 1.000000e+00 : f32
      %86 = vector.broadcast %cst_53 : f32 to vector<1x128xf32>
      %87 = arith.maximumf %86, %85 : vector<1x128xf32>
      %88 = vector.broadcast %cst_54 : f32 to vector<1x128xf32>
      %89 = arith.minimumf %88, %87 : vector<1x128xf32>
      %90 = arith.addf %70, %78 : vector<1x128xf32>
      %cst_55 = arith.constant 0.000000e+00 : f32
      %cst_56 = arith.constant 1.000000e+00 : f32
      %91 = vector.broadcast %cst_55 : f32 to vector<1x128xf32>
      %92 = arith.maximumf %91, %90 : vector<1x128xf32>
      %93 = vector.broadcast %cst_56 : f32 to vector<1x128xf32>
      %94 = arith.minimumf %93, %92 : vector<1x128xf32>
      %c6_57 = arith.constant 6 : index
      %c0_58 = arith.constant 0 : index
      %c0_59 = arith.constant 0 : index
      %95 = vector.load %arg3[%c6_57, %c0_58, %c0_59] : memref<8x2x128xf32, #tpu.memory_space<vmem>>, vector<1x2x128xf32>
      %96 = vector.shape_cast %95 : vector<1x2x128xf32> to vector<2x128xf32>
      %97 = vector.extract_strided_slice %96 {offsets = [0, 0], sizes = [1, 128], strides = [1, 1]} : vector<2x128xf32> to vector<1x128xf32>
      %98 = vector.extract_strided_slice %96 {offsets = [1, 0], sizes = [1, 128], strides = [1, 1]} : vector<2x128xf32> to vector<1x128xf32>
      %cst_60 = arith.constant 5.000000e-01 : f32
      %99 = vector.broadcast %cst_60 : f32 to vector<1x128xf32>
      %100 = arith.cmpf ogt, %71, %99 : vector<1x128xf32>
      %cst_61 = arith.constant 5.000000e-01 : f32
      %101 = vector.broadcast %cst_61 : f32 to vector<1x128xf32>
      %102 = arith.cmpf ogt, %72, %101 : vector<1x128xf32>
      %103 = arith.cmpf olt, %97, %89 : vector<1x128xf32>
      %104 = arith.andi %100, %103 : vector<1x128xi1>
      %105 = arith.cmpf olt, %97, %94 : vector<1x128xf32>
      %106 = arith.andi %102, %105 : vector<1x128xi1>
      %cst_62 = arith.constant 5.000000e-01 : f32
      %107 = vector.broadcast %cst_62 : f32 to vector<1x128xf32>
      %108 = arith.cmpf olt, %98, %107 : vector<1x128xf32>
      %109 = arith.andi %106, %108 : vector<1x128xi1>
      %cst_63 = arith.constant dense<true> : vector<1x128xi1>
      %110 = arith.xori %108, %cst_63 : vector<1x128xi1>
      %111 = arith.andi %106, %110 : vector<1x128xi1>
      %cst_64 = arith.constant dense<true> : vector<1x128xi1>
      %112 = arith.xori %106, %cst_64 : vector<1x128xi1>
      %113 = arith.andi %102, %112 : vector<1x128xi1>
      %cst_65 = arith.constant dense<true> : vector<1x128xi1>
      %114 = arith.xori %104, %cst_65 : vector<1x128xi1>
      %115 = arith.andi %100, %114 : vector<1x128xi1>
      %116 = arith.ori %115, %111 : vector<1x128xi1>
      %117 = arith.ori %104, %113 : vector<1x128xi1>
      %cst_66 = arith.constant dense<true> : vector<1x128xi1>
      %118 = arith.xori %100, %cst_66 : vector<1x128xi1>
      %cst_67 = arith.constant dense<true> : vector<1x128xi1>
      %119 = arith.xori %102, %cst_67 : vector<1x128xi1>
      %120 = arith.andi %118, %119 : vector<1x128xi1>
      %121 = arith.ori %109, %120 : vector<1x128xi1>
      %c0_68 = arith.constant 0 : index
      %c0_69 = arith.constant 0 : index
      %122 = vector.load %arg8[%c0_68, %c0_69] : memref<8x128xf32, #tpu.memory_space<vmem>>, vector<1x128xf32>
      tpu.vector_store %arg8[%c0_68, %c0_69], %83 {strides = array<i32>} : memref<8x128xf32, #tpu.memory_space<vmem>>, vector<1x128xf32>,
      %c1_70 = arith.constant 1 : index
      %c0_71 = arith.constant 0 : index
      %123 = vector.load %arg8[%c1_70, %c0_71] : memref<8x128xf32, #tpu.memory_space<vmem>>, vector<1x128xf32>
      tpu.vector_store %arg8[%c1_70, %c0_71], %89 {strides = array<i32>} : memref<8x128xf32, #tpu.memory_space<vmem>>, vector<1x128xf32>,
      %c2_72 = arith.constant 2 : index
      %c0_73 = arith.constant 0 : index
      %124 = vector.load %arg8[%c2_72, %c0_73] : memref<8x128xf32, #tpu.memory_space<vmem>>, vector<1x128xf32>
      tpu.vector_store %arg8[%c2_72, %c0_73], %94 {strides = array<i32>} : memref<8x128xf32, #tpu.memory_space<vmem>>, vector<1x128xf32>,
      %125 = arith.extui %116 : vector<1x128xi1> to vector<1x128xi32>
      %126 = arith.sitofp %125 : vector<1x128xi32> to vector<1x128xf32>
      %c3_74 = arith.constant 3 : index
      %c0_75 = arith.constant 0 : index
      %127 = vector.load %arg8[%c3_74, %c0_75] : memref<8x128xf32, #tpu.memory_space<vmem>>, vector<1x128xf32>
      tpu.vector_store %arg8[%c3_74, %c0_75], %126 {strides = array<i32>} : memref<8x128xf32, #tpu.memory_space<vmem>>, vector<1x128xf32>,
      %128 = arith.extui %117 : vector<1x128xi1> to vector<1x128xi32>
      %129 = arith.sitofp %128 : vector<1x128xi32> to vector<1x128xf32>
      %c4_76 = arith.constant 4 : index
      %c0_77 = arith.constant 0 : index
      %130 = vector.load %arg8[%c4_76, %c0_77] : memref<8x128xf32, #tpu.memory_space<vmem>>, vector<1x128xf32>
      tpu.vector_store %arg8[%c4_76, %c0_77], %129 {strides = array<i32>} : memref<8x128xf32, #tpu.memory_space<vmem>>, vector<1x128xf32>,
      %131 = arith.extui %121 : vector<1x128xi1> to vector<1x128xi32>
      %132 = arith.sitofp %131 : vector<1x128xi32> to vector<1x128xf32>
      %c5 = arith.constant 5 : index
      %c0_78 = arith.constant 0 : index
      %133 = vector.load %arg8[%c5, %c0_78] : memref<8x128xf32, #tpu.memory_space<vmem>>, vector<1x128xf32>
      tpu.vector_store %arg8[%c5, %c0_78], %132 {strides = array<i32>} : memref<8x128xf32, #tpu.memory_space<vmem>>, vector<1x128xf32>,
      %c0_79 = arith.constant 0 : index
      %c0_80 = arith.constant 0 : index
      %134 = vector.load %arg8[%c0_79, %c0_80] : memref<8x128xf32, #tpu.memory_space<vmem>>, vector<3x128xf32>
      %c6_81 = arith.constant 6 : index
      %c0_82 = arith.constant 0 : index
      %c0_83 = arith.constant 0 : index
      %135 = vector.load %arg6[%c6_81, %c0_82, %c0_83] : memref<8x3x128xf32, #tpu.memory_space<vmem>>, vector<1x3x128xf32>
      %136 = vector.shape_cast %135 : vector<1x3x128xf32> to vector<3x128xf32>
      %137 = vector.shape_cast %134 : vector<3x128xf32> to vector<1x3x128xf32>
      tpu.vector_store %arg6[%c6_81, %c0_82, %c0_83], %137 {strides = array<i32>} : memref<8x3x128xf32, #tpu.memory_space<vmem>>, vector<1x3x128xf32>,
      %c3_84 = arith.constant 3 : index
      %c0_85 = arith.constant 0 : index
      %138 = vector.load %arg8[%c3_84, %c0_85] : memref<8x128xf32, #tpu.memory_space<vmem>>, vector<3x128xf32>
      %c6_86 = arith.constant 6 : index
      %c0_87 = arith.constant 0 : index
      %c0_88 = arith.constant 0 : index
      %139 = vector.load %arg7[%c6_86, %c0_87, %c0_88] : memref<8x3x128xf32, #tpu.memory_space<vmem>>, vector<1x3x128xf32>
      %140 = vector.shape_cast %139 : vector<1x3x128xf32> to vector<3x128xf32>
      %141 = vector.shape_cast %138 : vector<3x128xf32> to vector<1x3x128xf32>
      tpu.vector_store %arg7[%c6_86, %c0_87, %c0_88], %141 {strides = array<i32>} : memref<8x3x128xf32, #tpu.memory_space<vmem>>, vector<1x3x128xf32>,
    } else {
    }
    %c8_i32_37 = arith.constant 8 : i32
    %58 = arith.muli %arg0, %c8_i32_37 : i32
    %c7_i32 = arith.constant 7 : i32
    %59 = arith.addi %58, %c7_i32 : i32
    %c0_i32_38 = arith.constant 0 : i32
    %60 = arith.cmpi eq, %59, %c0_i32_38 : i32
    %61 = arith.extui %60 : i1 to i32
    %c0_i32_39 = arith.constant 0 : i32
    %62 = arith.cmpi ne, %61, %c0_i32_39 : i32
    scf.if %62 {
      %c0_42 = arith.constant 0 : index
      %c0_43 = arith.constant 0 : index
      %66 = vector.load %arg1[%c0_42, %c0_43] : memref<3x128xf32, #tpu.memory_space<vmem>>, vector<3x128xf32>
      %c0_44 = arith.constant 0 : index
      %c0_45 = arith.constant 0 : index
      %67 = vector.load %arg8[%c0_44, %c0_45] : memref<8x128xf32, #tpu.memory_space<vmem>>, vector<3x128xf32>
      tpu.vector_store %arg8[%c0_44, %c0_45], %66 {strides = array<i32>} : memref<8x128xf32, #tpu.memory_space<vmem>>, vector<3x128xf32>,
      %c3 = arith.constant 3 : index
      %c0_46 = arith.constant 0 : index
      %68 = vector.load %arg8[%c3, %c0_46] : memref<8x128xf32, #tpu.memory_space<vmem>>, vector<3x128xf32>
      tpu.vector_store %arg8[%c3, %c0_46], %66 {strides = array<i32>} : memref<8x128xf32, #tpu.memory_space<vmem>>, vector<3x128xf32>,
      %c0_47 = arith.constant 0 : index
      %c0_48 = arith.constant 0 : index
      %c0_49 = arith.constant 0 : index
      %69 = vector.load %arg6[%c0_47, %c0_48, %c0_49] : memref<8x3x128xf32, #tpu.memory_space<vmem>>, vector<1x3x128xf32>
      %70 = vector.shape_cast %69 : vector<1x3x128xf32> to vector<3x128xf32>
      %71 = vector.shape_cast %66 : vector<3x128xf32> to vector<1x3x128xf32>
      tpu.vector_store %arg6[%c0_47, %c0_48, %c0_49], %71 {strides = array<i32>} : memref<8x3x128xf32, #tpu.memory_space<vmem>>, vector<1x3x128xf32>,
      %c0_50 = arith.constant 0 : index
      %c0_51 = arith.constant 0 : index
      %c0_52 = arith.constant 0 : index
      %72 = vector.load %arg7[%c0_50, %c0_51, %c0_52] : memref<8x3x128xf32, #tpu.memory_space<vmem>>, vector<1x3x128xf32>
      %73 = vector.shape_cast %72 : vector<1x3x128xf32> to vector<3x128xf32>
      %74 = vector.shape_cast %66 : vector<3x128xf32> to vector<1x3x128xf32>
      tpu.vector_store %arg7[%c0_50, %c0_51, %c0_52], %74 {strides = array<i32>} : memref<8x3x128xf32, #tpu.memory_space<vmem>>, vector<1x3x128xf32>,
    } else {
    }
    %c0_i32_40 = arith.constant 0 : i32
    %63 = arith.cmpi sgt, %59, %c0_i32_40 : i32
    %64 = arith.extui %63 : i1 to i32
    %c0_i32_41 = arith.constant 0 : i32
    %65 = arith.cmpi ne, %64, %c0_i32_41 : i32
    scf.if %65 {
      %c7 = arith.constant 7 : index
      %c0_42 = arith.constant 0 : index
      %c0_43 = arith.constant 0 : index
      %66 = vector.load %arg2[%c7, %c0_42, %c0_43] : memref<8x16x128xbf16, #tpu.memory_space<vmem>>, vector<1x16x128xbf16>
      %67 = vector.shape_cast %66 : vector<1x16x128xbf16> to vector<16x128xbf16>
      %c0_44 = arith.constant 0 : index
      %c0_45 = arith.constant 0 : index
      %68 = vector.load %arg8[%c0_44, %c0_45] : memref<8x128xf32, #tpu.memory_space<vmem>>, vector<1x128xf32>
      %c1 = arith.constant 1 : index
      %c0_46 = arith.constant 0 : index
      %69 = vector.load %arg8[%c1, %c0_46] : memref<8x128xf32, #tpu.memory_space<vmem>>, vector<1x128xf32>
      %c2 = arith.constant 2 : index
      %c0_47 = arith.constant 0 : index
      %70 = vector.load %arg8[%c2, %c0_47] : memref<8x128xf32, #tpu.memory_space<vmem>>, vector<1x128xf32>
      %c3 = arith.constant 3 : index
      %c0_48 = arith.constant 0 : index
      %71 = vector.load %arg8[%c3, %c0_48] : memref<8x128xf32, #tpu.memory_space<vmem>>, vector<1x128xf32>
      %c4 = arith.constant 4 : index
      %c0_49 = arith.constant 0 : index
      %72 = vector.load %arg8[%c4, %c0_49] : memref<8x128xf32, #tpu.memory_space<vmem>>, vector<1x128xf32>
      %73 = arith.truncf %72 : vector<1x128xf32> to vector<1x128xbf16>
      %cst = arith.constant dense<0.000000e+00> : vector<1x16xf32>
      %74 = tpu.matmul %73, %67, %cst {dimension_numbers = #tpu.dot_dimension_numbers<[1], [1], [0], [0], [0, 0, 1, 0], [], []>} : vector<1x128xbf16>, vector<16x128xbf16>, vector<1x16xf32> -> vector<1x16xf32>
      %75 = arith.truncf %74 : vector<1x16xf32> to vector<1x16xbf16>
      %cst_50 = arith.constant dense<0.000000e+00> : vector<1x128xf32>
      %76 = tpu.matmul %75, %67, %cst_50 {dimension_numbers = #tpu.dot_dimension_numbers<[1], [0], [0], [1], [0, 0, 1, 1], [], []>} : vector<1x16xbf16>, vector<16x128xbf16>, vector<1x128xf32> -> vector<1x128xf32>
      %77 = arith.mulf %0, %76 : vector<1x128xf32>
      %78 = arith.mulf %1, %72 : vector<1x128xf32>
      %79 = arith.subf %68, %77 : vector<1x128xf32>
      %cst_51 = arith.constant 0.000000e+00 : f32
      %cst_52 = arith.constant 1.000000e+00 : f32
      %80 = vector.broadcast %cst_51 : f32 to vector<1x128xf32>
      %81 = arith.maximumf %80, %79 : vector<1x128xf32>
      %82 = vector.broadcast %cst_52 : f32 to vector<1x128xf32>
      %83 = arith.minimumf %82, %81 : vector<1x128xf32>
      %84 = arith.addf %69, %77 : vector<1x128xf32>
      %85 = arith.subf %84, %78 : vector<1x128xf32>
      %cst_53 = arith.constant 0.000000e+00 : f32
      %cst_54 = arith.constant 1.000000e+00 : f32
      %86 = vector.broadcast %cst_53 : f32 to vector<1x128xf32>
      %87 = arith.maximumf %86, %85 : vector<1x128xf32>
      %88 = vector.broadcast %cst_54 : f32 to vector<1x128xf32>
      %89 = arith.minimumf %88, %87 : vector<1x128xf32>
      %90 = arith.addf %70, %78 : vector<1x128xf32>
      %cst_55 = arith.constant 0.000000e+00 : f32
      %cst_56 = arith.constant 1.000000e+00 : f32
      %91 = vector.broadcast %cst_55 : f32 to vector<1x128xf32>
      %92 = arith.maximumf %91, %90 : vector<1x128xf32>
      %93 = vector.broadcast %cst_56 : f32 to vector<1x128xf32>
      %94 = arith.minimumf %93, %92 : vector<1x128xf32>
      %c7_57 = arith.constant 7 : index
      %c0_58 = arith.constant 0 : index
      %c0_59 = arith.constant 0 : index
      %95 = vector.load %arg3[%c7_57, %c0_58, %c0_59] : memref<8x2x128xf32, #tpu.memory_space<vmem>>, vector<1x2x128xf32>
      %96 = vector.shape_cast %95 : vector<1x2x128xf32> to vector<2x128xf32>
      %97 = vector.extract_strided_slice %96 {offsets = [0, 0], sizes = [1, 128], strides = [1, 1]} : vector<2x128xf32> to vector<1x128xf32>
      %98 = vector.extract_strided_slice %96 {offsets = [1, 0], sizes = [1, 128], strides = [1, 1]} : vector<2x128xf32> to vector<1x128xf32>
      %cst_60 = arith.constant 5.000000e-01 : f32
      %99 = vector.broadcast %cst_60 : f32 to vector<1x128xf32>
      %100 = arith.cmpf ogt, %71, %99 : vector<1x128xf32>
      %cst_61 = arith.constant 5.000000e-01 : f32
      %101 = vector.broadcast %cst_61 : f32 to vector<1x128xf32>
      %102 = arith.cmpf ogt, %72, %101 : vector<1x128xf32>
      %103 = arith.cmpf olt, %97, %89 : vector<1x128xf32>
      %104 = arith.andi %100, %103 : vector<1x128xi1>
      %105 = arith.cmpf olt, %97, %94 : vector<1x128xf32>
      %106 = arith.andi %102, %105 : vector<1x128xi1>
      %cst_62 = arith.constant 5.000000e-01 : f32
      %107 = vector.broadcast %cst_62 : f32 to vector<1x128xf32>
      %108 = arith.cmpf olt, %98, %107 : vector<1x128xf32>
      %109 = arith.andi %106, %108 : vector<1x128xi1>
      %cst_63 = arith.constant dense<true> : vector<1x128xi1>
      %110 = arith.xori %108, %cst_63 : vector<1x128xi1>
      %111 = arith.andi %106, %110 : vector<1x128xi1>
      %cst_64 = arith.constant dense<true> : vector<1x128xi1>
      %112 = arith.xori %106, %cst_64 : vector<1x128xi1>
      %113 = arith.andi %102, %112 : vector<1x128xi1>
      %cst_65 = arith.constant dense<true> : vector<1x128xi1>
      %114 = arith.xori %104, %cst_65 : vector<1x128xi1>
      %115 = arith.andi %100, %114 : vector<1x128xi1>
      %116 = arith.ori %115, %111 : vector<1x128xi1>
      %117 = arith.ori %104, %113 : vector<1x128xi1>
      %cst_66 = arith.constant dense<true> : vector<1x128xi1>
      %118 = arith.xori %100, %cst_66 : vector<1x128xi1>
      %cst_67 = arith.constant dense<true> : vector<1x128xi1>
      %119 = arith.xori %102, %cst_67 : vector<1x128xi1>
      %120 = arith.andi %118, %119 : vector<1x128xi1>
      %121 = arith.ori %109, %120 : vector<1x128xi1>
      %c0_68 = arith.constant 0 : index
      %c0_69 = arith.constant 0 : index
      %122 = vector.load %arg8[%c0_68, %c0_69] : memref<8x128xf32, #tpu.memory_space<vmem>>, vector<1x128xf32>
      tpu.vector_store %arg8[%c0_68, %c0_69], %83 {strides = array<i32>} : memref<8x128xf32, #tpu.memory_space<vmem>>, vector<1x128xf32>,
      %c1_70 = arith.constant 1 : index
      %c0_71 = arith.constant 0 : index
      %123 = vector.load %arg8[%c1_70, %c0_71] : memref<8x128xf32, #tpu.memory_space<vmem>>, vector<1x128xf32>
      tpu.vector_store %arg8[%c1_70, %c0_71], %89 {strides = array<i32>} : memref<8x128xf32, #tpu.memory_space<vmem>>, vector<1x128xf32>,
      %c2_72 = arith.constant 2 : index
      %c0_73 = arith.constant 0 : index
      %124 = vector.load %arg8[%c2_72, %c0_73] : memref<8x128xf32, #tpu.memory_space<vmem>>, vector<1x128xf32>
      tpu.vector_store %arg8[%c2_72, %c0_73], %94 {strides = array<i32>} : memref<8x128xf32, #tpu.memory_space<vmem>>, vector<1x128xf32>,
      %125 = arith.extui %116 : vector<1x128xi1> to vector<1x128xi32>
      %126 = arith.sitofp %125 : vector<1x128xi32> to vector<1x128xf32>
      %c3_74 = arith.constant 3 : index
      %c0_75 = arith.constant 0 : index
      %127 = vector.load %arg8[%c3_74, %c0_75] : memref<8x128xf32, #tpu.memory_space<vmem>>, vector<1x128xf32>
      tpu.vector_store %arg8[%c3_74, %c0_75], %126 {strides = array<i32>} : memref<8x128xf32, #tpu.memory_space<vmem>>, vector<1x128xf32>,
      %128 = arith.extui %117 : vector<1x128xi1> to vector<1x128xi32>
      %129 = arith.sitofp %128 : vector<1x128xi32> to vector<1x128xf32>
      %c4_76 = arith.constant 4 : index
      %c0_77 = arith.constant 0 : index
      %130 = vector.load %arg8[%c4_76, %c0_77] : memref<8x128xf32, #tpu.memory_space<vmem>>, vector<1x128xf32>
      tpu.vector_store %arg8[%c4_76, %c0_77], %129 {strides = array<i32>} : memref<8x128xf32, #tpu.memory_space<vmem>>, vector<1x128xf32>,
      %131 = arith.extui %121 : vector<1x128xi1> to vector<1x128xi32>
      %132 = arith.sitofp %131 : vector<1x128xi32> to vector<1x128xf32>
      %c5 = arith.constant 5 : index
      %c0_78 = arith.constant 0 : index
      %133 = vector.load %arg8[%c5, %c0_78] : memref<8x128xf32, #tpu.memory_space<vmem>>, vector<1x128xf32>
      tpu.vector_store %arg8[%c5, %c0_78], %132 {strides = array<i32>} : memref<8x128xf32, #tpu.memory_space<vmem>>, vector<1x128xf32>,
      %c0_79 = arith.constant 0 : index
      %c0_80 = arith.constant 0 : index
      %134 = vector.load %arg8[%c0_79, %c0_80] : memref<8x128xf32, #tpu.memory_space<vmem>>, vector<3x128xf32>
      %c7_81 = arith.constant 7 : index
      %c0_82 = arith.constant 0 : index
      %c0_83 = arith.constant 0 : index
      %135 = vector.load %arg6[%c7_81, %c0_82, %c0_83] : memref<8x3x128xf32, #tpu.memory_space<vmem>>, vector<1x3x128xf32>
      %136 = vector.shape_cast %135 : vector<1x3x128xf32> to vector<3x128xf32>
      %137 = vector.shape_cast %134 : vector<3x128xf32> to vector<1x3x128xf32>
      tpu.vector_store %arg6[%c7_81, %c0_82, %c0_83], %137 {strides = array<i32>} : memref<8x3x128xf32, #tpu.memory_space<vmem>>, vector<1x3x128xf32>,
      %c3_84 = arith.constant 3 : index
      %c0_85 = arith.constant 0 : index
      %138 = vector.load %arg8[%c3_84, %c0_85] : memref<8x128xf32, #tpu.memory_space<vmem>>, vector<3x128xf32>
      %c7_86 = arith.constant 7 : index
      %c0_87 = arith.constant 0 : index
      %c0_88 = arith.constant 0 : index
      %139 = vector.load %arg7[%c7_86, %c0_87, %c0_88] : memref<8x3x128xf32, #tpu.memory_space<vmem>>, vector<1x3x128xf32>
      %140 = vector.shape_cast %139 : vector<1x3x128xf32> to vector<3x128xf32>
      %141 = vector.shape_cast %138 : vector<3x128xf32> to vector<1x3x128xf32>
      tpu.vector_store %arg7[%c7_86, %c0_87, %c0_88], %141 {strides = array<i32>} : memref<8x3x128xf32, #tpu.memory_space<vmem>>, vector<1x3x128xf32>,
    } else {
    }
    return
  }
  func.func @transform_0(%arg0: i32) -> (i32, i32) {
    %c0_i32 = arith.constant 0 : i32
    %c0_i32_0 = arith.constant 0 : i32
    %c0_i32_1 = arith.constant 0 : i32
    return %c0_i32, %c0_i32_0 : i32, i32
  }
  func.func @transform_1(%arg0: i32) -> (i32, i32, i32) {
    %c0_i32 = arith.constant 0 : i32
    %c0_i32_0 = arith.constant 0 : i32
    %c0_i32_1 = arith.constant 0 : i32
    return %arg0, %c0_i32, %c0_i32_0 : i32, i32, i32
  }
  func.func @transform_2(%arg0: i32) -> (i32, i32, i32) {
    %c0_i32 = arith.constant 0 : i32
    %c0_i32_0 = arith.constant 0 : i32
    %c0_i32_1 = arith.constant 0 : i32
    return %arg0, %c0_i32, %c0_i32_0 : i32, i32, i32
  }
  func.func @transform_3(%arg0: i32) -> (i32, i32) {
    %c0_i32 = arith.constant 0 : i32
    %c0_i32_0 = arith.constant 0 : i32
    %c0_i32_1 = arith.constant 0 : i32
    return %c0_i32, %c0_i32_0 : i32, i32
  }
  func.func @transform_4(%arg0: i32) -> (i32, i32) {
    %c0_i32 = arith.constant 0 : i32
    %c0_i32_0 = arith.constant 0 : i32
    %c0_i32_1 = arith.constant 0 : i32
    return %c0_i32, %c0_i32_0 : i32, i32
  }
  func.func @transform_5(%arg0: i32) -> (i32, i32, i32) {
    %c0_i32 = arith.constant 0 : i32
    %c0_i32_0 = arith.constant 0 : i32
    %c0_i32_1 = arith.constant 0 : i32
    return %arg0, %c0_i32, %c0_i32_0 : i32, i32, i32
  }
  func.func @transform_6(%arg0: i32) -> (i32, i32, i32) {
    %c0_i32 = arith.constant 0 : i32
    %c0_i32_0 = arith.constant 0 : i32
    %c0_i32_1 = arith.constant 0 : i32
    return %arg0, %c0_i32, %c0_i32_0 : i32, i32, i32
  }
}

</mosaic_0001>

<llo_original>
// kernel: tpu_custom_call.1
$region0: #{tpu_custom_call.1}
  #allocation0 [shape = 'u32[]', space=smem, size = 0x4, offset = 0x4, fixed_abs, tag = 'smem constant byte address 0x4 - core index']
  #allocation1 [shape = 'u32[144,128]{1,0:T(1,128)}', space=vmem, size = 0x12000, scoped, tag = 'internal scratch']
  #allocation2 [shape = 'f32[8,128]{1,0:T(8,128)}', space=vmem, size = 0x1000, scoped, tag = 'scratch operand']
  %s0 = inlined_call_operand.hbm [shape: f32[3,128], index: 0, kind: input, shape index: {}]
  %s1 = inlined_call_operand.hbm [shape: bf16[8,16,128], index: 1, kind: input, shape index: {}]
  %s2 = inlined_call_operand.hbm [shape: f32[8,2,128], index: 2, kind: input, shape index: {}]
  %s3 = inlined_call_operand.vmem [shape: f32[1,128], index: 3, kind: input, shape index: {}]
  %s4 = inlined_call_operand.vmem [shape: f32[1,128], index: 4, kind: input, shape index: {}]
  %s5 = inlined_call_operand.vmem [shape: f32[8,3,128], index: 5, kind: output, shape index: {0}]
  %s6 = inlined_call_operand.vmem [shape: f32[8,3,128], index: 6, kind: output, shape index: {1}]
  %7 = xla_tuple %s5, %s6
  %s8 = sld [smem:[#allocation0]]
  $region114: #{tpu_custom_call.1} parent=0
    _
  %s10 = ssub.s32 1, %s8
  %s11 = scalar_select 0, %s10, %s8
  $region1: #{tpu_custom_call.1} parent=0
    #allocation3 [shape = 'u8[2048]{0}', space=vmem, size = 0x800, scoped, tag = 'input window, operand 0, single buffered']
    #allocation4 [shape = 's32[1]{0}', space=sflag, size = 0x4, scoped, tag = 'scoped memory for tpu_custom_call.1']
    #allocation5 [shape = 'u8[32768]{0}', space=vmem, size = 0x8000, scoped, tag = 'input window, operand 1, single buffered']
    #allocation6 [shape = 's32[1]{0}', space=sflag, size = 0x4, scoped, tag = 'scoped memory for tpu_custom_call.1']
    #allocation7 [shape = 'u8[8192]{0}', space=vmem, size = 0x2000, scoped, tag = 'input window, operand 2, single buffered']
    %12 = vsyncpa [#allocation4], 0
    %13 = vsyncpa [#allocation6], 0
    // Predicated region
    $region2: #{tpu_custom_call.1} parent=1 // pred_check
      _
    $region3: #{tpu_custom_call.1} parent=1 // pred_check_branch
      %15 = sbr.rel (0) target = $region5
    $region4: #{tpu_custom_call.1} parent=1 // pred_region
      %s17 = ssub.s32 64, 64
      %18 = vsyncadd [#allocation4], %s17
      %s20 = sshll.u32 [#allocation3], 4
      %s21 = int_to_ptr.vmem [resolvable:$true] %s20
      %23 = dma.hbm_to_vmem [thread:$0]  %s0, 64, %s21, [#allocation4]
    $region5: #{tpu_custom_call.1} parent=1 // pred_fallthru
      _
    // Predicated region
    $region6: #{tpu_custom_call.1} parent=1 // pred_check
      _
    $region7: #{tpu_custom_call.1} parent=1 // pred_check_branch
      %25 = sbr.rel (0) target = $region9
    $region8: #{tpu_custom_call.1} parent=1 // pred_region
      %s27 = ssub.s32 1024, 1024
      %28 = vsyncadd [#allocation6], %s27
      %s29 = sshll.u32 [#allocation5], 4
      %s30 = int_to_ptr.vmem [resolvable:$true] %s29
      %35 = dma.hbm_to_vmem [thread:$0]  %s1, 1024, %s30, [#allocation6], 64, 64, 4
    $region9: #{tpu_custom_call.1} parent=1 // pred_fallthru
      _
    // Predicated region
    $region10: #{tpu_custom_call.1} parent=1 // pred_check
      _
    $region11: #{tpu_custom_call.1} parent=1 // pred_check_branch
      %37 = sbr.rel (0) target = $region13
    $region12: #{tpu_custom_call.1} parent=1 // pred_region
      %s39 = ssub.s32 256, 256
      %40 = vsyncadd [#allocation6], %s39
      %s41 = sshll.u32 [#allocation7], 4
      %s42 = int_to_ptr.vmem [resolvable:$true] %s41
      %47 = dma.hbm_to_vmem [thread:$0]  %s2, 256, %s42, [#allocation6], 32, 32, 2
    $region13: #{tpu_custom_call.1} parent=1 // pred_fallthru
      _
    // Predicated region
    $region14: #{tpu_custom_call.1} parent=1 // pred_check
      _
    $region15: #{tpu_custom_call.1} parent=1 // pred_check_branch
      %49 = sbr.rel (0) target = $region17
    $region16: #{tpu_custom_call.1} parent=1 // pred_region
      _
    $region17: #{tpu_custom_call.1} parent=1 // pred_fallthru
      _
    // Predicated region
    $region18: #{tpu_custom_call.1} parent=1 // pred_check
      _
    $region19: #{tpu_custom_call.1} parent=1 // pred_check_branch
      %51 = sbr.rel (0) target = $region21
    $region20: #{tpu_custom_call.1} parent=1 // pred_region
      _
    $region21: #{tpu_custom_call.1} parent=1 // pred_fallthru
      _
    // Predicated region
    $region22: #{tpu_custom_call.1} parent=1 // pred_check
      _
    $region23: #{tpu_custom_call.1} parent=1 // pred_check_branch
      %53 = sbr.rel (0) target = $region25
    $region24: #{tpu_custom_call.1} parent=1 // pred_region
      %54 = dma.done [#allocation4], 64
    $region25: #{tpu_custom_call.1} parent=1 // pred_fallthru
      _
    // Predicated region
    $region26: #{tpu_custom_call.1} parent=1 // pred_check
      _
    $region27: #{tpu_custom_call.1} parent=1 // pred_check_branch
      %56 = sbr.rel (0) target = $region29
    $region28: #{tpu_custom_call.1} parent=1 // pred_region
      %57 = dma.done [#allocation6], 1024
    $region29: #{tpu_custom_call.1} parent=1 // pred_fallthru
      _
    // Predicated region
    $region30: #{tpu_custom_call.1} parent=1 // pred_check
      _
    $region31: #{tpu_custom_call.1} parent=1 // pred_check_branch
      %59 = sbr.rel (0) target = $region33
    $region32: #{tpu_custom_call.1} parent=1 // pred_region
      %60 = dma.done [#allocation6], 256
    $region33: #{tpu_custom_call.1} parent=1 // pred_fallthru
      _
    %v62 = vld [vmem:[%s3] sm:$0x1]
    %v63 = vld [vmem:[%s4] sm:$0x1]
    %s64 = smul.u32 0, 8
    %p65 = scmp.eq.s32.totalorder %s64, 0
    // Predicated region
    $region34: #{tpu_custom_call.1} parent=1 // pred_check
      %p66 = pneg %p65
    $region35: #{tpu_custom_call.1} parent=1 // pred_check_branch
      %68 = sbr.rel (%p66) target = $region37
    $region36: #{tpu_custom_call.1} parent=1 // pred_region
      %v69 = vld [vmem:[#allocation3] sm:$0x7]
      %70 = vst [vmem:[#allocation2] sm:$0x7] %v69
      %71 = vst [vmem:[#allocation2 + $0x3] sm:$0x7] %v69
      %72 = vst [vmem:[%s5] sm:$0x7] %v69
      %73 = vst [vmem:[%s6] sm:$0x7] %v69
    $region37: #{tpu_custom_call.1} parent=1 // pred_fallthru
      _
    %p74 = scmp.gt.s32.totalorder %s64, 0
    // Predicated region
    $region38: #{tpu_custom_call.1} parent=1 // pred_check
      %p75 = pneg %p74
    $region39: #{tpu_custom_call.1} parent=1 // pred_check_branch
      %77 = sbr.rel (%p75) target = $region41
    $region40: #{tpu_custom_call.1} parent=1 // pred_region
      %v78 = vld [vmem:[#allocation5] sm:$0xf]
      %v79 = vld [vmem:[#allocation5 + $0x4] sm:$0xf]
      %v80 = vld [vmem:[#allocation2] sm:$0x1]
      %v81 = vld [vmem:[#allocation2 + $0x1] sm:$0x1]
      %v82 = vld [vmem:[#allocation2 + $0x2] sm:$0x1]
      %v83 = vld [vmem:[#allocation2 + $0x3] sm:$0x1]
      %v84 = vld [vmem:[#allocation2 + $0x4] sm:$0x1]
      %v85 = vpack.c.bf16 %v84, %v84
      %v88 = vunpack.c.l.b16 %v78
      %v89 = vunpack.c.l.b16 %v79
      %v90 = vpack.c.b16 %v89, %v88
      %92 = vmatprep.subr.bf16.mxu0 0
      %93 = vmatpush1.bf16.xpose.msra.mxu0 0
      %94 = vmatprep.subr.bf16.mxu0 0
      %95 = vmatpush1.bf16.xpose.msra.mxu0 0
      %96 = vmatprep.subr.bf16.mxu0 0
      %97 = vmatpush1.bf16.xpose.msra.mxu0 0
      %98 = vmatprep.subr.bf16.mxu0 0
      %99 = vmatpush1.bf16.xpose.msra.mxu0 0
      %100 = vmatprep.subr.bf16.mxu0 0
      %101 = vmatpush1.bf16.xpose.msra.mxu0 0
      %102 = vmatprep.subr.bf16.mxu0 0
      %103 = vmatpush1.bf16.xpose.msra.mxu0 0
      %104 = vmatprep.subr.bf16.mxu0 0
      %105 = vmatpush1.bf16.xpose.msra.mxu0 0
      %106 = vmatprep.subr.bf16.mxu0 0
      %107 = vmatpush1.bf16.xpose.msra.mxu0 %v90
      %108 = vmatprep.subr.bf16.mxu0 0
      %109 = vmatpush2.bf16.xpose.msra.mxu0 0
      %110 = vmatprep.subr.bf16.mxu0 0
      %111 = vmatpush2.bf16.xpose.msra.mxu0 0
      %112 = vmatprep.subr.bf16.mxu0 0
      %113 = vmatpush2.bf16.xpose.msra.mxu0 0
      %114 = vmatprep.subr.bf16.mxu0 0
      %115 = vmatpush2.bf16.xpose.msra.mxu0 0
      %116 = vmatprep.subr.bf16.mxu0 0
      %117 = vmatpush2.bf16.xpose.msra.mxu0 0
      %118 = vmatprep.subr.bf16.mxu0 0
      %119 = vmatpush2.bf16.xpose.msra.mxu0 0
      %120 = vmatprep.subr.bf16.mxu0 0
      %121 = vmatpush2.bf16.xpose.msra.mxu0 0
      %122 = vmatprep.subr.bf16.mxu0 0
      %123 = vmatpush2.bf16.xpose.msra.mxu0 0
      %124 = vmatprep.mubr.bf16.mxu0 0
      %125 = vmatmul.mubr.bf16.gmra.mxu0 %v85
      %v126 = vpop.f32.mrf.mxu0
      %v127 = vadd.f32 0.0, %v126
      %v128 = vpop.f32.mrf.mxu0
      %v129 = vpop.f32.mrf.mxu0
      %v130 = vpop.f32.mrf.mxu0
      %131 = vdwg.mxu0
      %v132 = vpack.c.bf16 %v127, %v127
      %vm133 = vcmask 130048
      %v135 = vsel %vm133, %v132, 0
      %137 = vmatprep.subr.bf16.mxu0 0
      %138 = vmatpush1.bf16.msra.mxu0 0
      %139 = vmatprep.subr.bf16.mxu0 0
      %140 = vmatpush1.bf16.msra.mxu0 0
      %141 = vmatprep.subr.bf16.mxu0 0
      %142 = vmatpush1.bf16.msra.mxu0 0
      %143 = vmatprep.subr.bf16.mxu0 0
      %144 = vmatpush1.bf16.msra.mxu0 0
      %145 = vmatprep.subr.bf16.mxu0 0
      %146 = vmatpush1.bf16.msra.mxu0 0
      %147 = vmatprep.subr.bf16.mxu0 0
      %148 = vmatpush1.bf16.msra.mxu0 0
      %149 = vmatprep.subr.bf16.mxu0 0
      %150 = vmatpush1.bf16.msra.mxu0 0
      %151 = vmatprep.subr.bf16.mxu0 0
      %152 = vmatpush1.bf16.msra.mxu0 %v90
      %153 = vmatprep.subr.bf16.mxu0 0
      %154 = vmatpush2.bf16.msra.mxu0 0
      %155 = vmatprep.subr.bf16.mxu0 0
      %156 = vmatpush2.bf16.msra.mxu0 0
      %157 = vmatprep.subr.bf16.mxu0 0
      %158 = vmatpush2.bf16.msra.mxu0 0
      %159 = vmatprep.subr.bf16.mxu0 0
      %160 = vmatpush2.bf16.msra.mxu0 0
      %161 = vmatprep.subr.bf16.mxu0 0
      %162 = vmatpush2.bf16.msra.mxu0 0
      %163 = vmatprep.subr.bf16.mxu0 0
      %164 = vmatpush2.bf16.msra.mxu0 0
      %165 = vmatprep.subr.bf16.mxu0 0
      %166 = vmatpush2.bf16.msra.mxu0 0
      %167 = vmatprep.subr.bf16.mxu0 0
      %168 = vmatpush2.bf16.msra.mxu0 0
      %169 = vmatprep.mubr.bf16.mxu0 0
      %170 = vmatmul.mubr.bf16.gmra.mxu0 %v135
      %v171 = vpop.f32.mrf.mxu0
      %v172 = vadd.f32 0.0, %v171
      %v173 = vpop.f32.mrf.mxu0
      %v174 = vpop.f32.mrf.mxu0
      %v175 = vpop.f32.mrf.mxu0
      %176 = vdwg.mxu0
      %v177 = vmul.f32 %v62, %v172
      %v178 = vmul.f32 %v63, %v84
      %v179 = vsub.f32 %v80, %v177
      %v180 = vmax.f32 %v179, 0.0
      %v181 = vmin.f32 %v180, 1.0
      %v182 = vadd.f32 %v81, %v177
      %v183 = vsub.f32 %v182, %v178
      %v184 = vmax.f32 %v183, 0.0
      %v185 = vmin.f32 %v184, 1.0
      %v186 = vadd.f32 %v82, %v178
      %v187 = vmax.f32 %v186, 0.0
      %v188 = vmin.f32 %v187, 1.0
      %v189 = vld [vmem:[#allocation7] sm:$0x3]
      %vm190 = vcmp.gt.f32.partialorder %v83, 0.5
      %vm191 = vcmp.gt.f32.partialorder %v84, 0.5
      %vm192 = vcmp.lt.f32.partialorder %v189, %v185
      %vm193 = vmand %vm190, %vm192
      %vm194 = vcmp.lt.f32.partialorder %v189, %v188
      %vm195 = vmand %vm191, %vm194
      %vm196 = vcmp.lt.f32.partialorder %v189, 0.5
      %v197 = vsel %vm196, 1, 0
      %v198 = vrot.slane %v197, 1
      %vm199 = vcmp.ne.s32.totalorder %v198, 0
      %vm200 = vmand %vm195, %vm199
      %vm201 = vmxor %vm196, 1
      %v202 = vsel %vm201, 1, 0
      %v203 = vrot.slane %v202, 1
      %vm204 = vcmp.ne.s32.totalorder %v203, 0
      %vm205 = vmand %vm195, %vm204
      %vm206 = vmxor %vm195, 1
      %vm207 = vmand %vm191, %vm206
      %vm208 = vmxor %vm193, 1
      %vm209 = vmand %vm190, %vm208
      %vm210 = vmor %vm209, %vm205
      %vm211 = vmor %vm193, %vm207
      %vm212 = vmxor %vm190, 1
      %vm213 = vmxor %vm191, 1
      %vm214 = vmand %vm212, %vm213
      %vm215 = vmor %vm200, %vm214
      %216 = vst [vmem:[#allocation2] sm:$0x1] %v181
      %217 = vst [vmem:[#allocation2 + $0x1] sm:$0x1] %v185
      %218 = vst [vmem:[#allocation2 + $0x2] sm:$0x1] %v188
      %v219 = vsel %vm210, 1, 0
      %v220 = vcvt.s32.f32 %v219
      %221 = vst [vmem:[#allocation2 + $0x3] sm:$0x1] %v220
      %v222 = vsel %vm211, 1, 0
      %v223 = vcvt.s32.f32 %v222
      %224 = vst [vmem:[#allocation2 + $0x4] sm:$0x1] %v223
      %v225 = vsel %vm215, 1, 0
      %v226 = vcvt.s32.f32 %v225
      %227 = vst [vmem:[#allocation2 + $0x5] sm:$0x1] %v226
      %v228 = vld [vmem:[#allocation2] sm:$0x7]
      %229 = vst [vmem:[%s5] sm:$0x7] %v228
      %v230 = vld [vmem:[#allocation2 + $0x3] sm:$0x7]
      %231 = vst [vmem:[%s6] sm:$0x7] %v230
    $region41: #{tpu_custom_call.1} parent=1 // pred_fallthru
      _
    %s232 = sadd.s32 %s64, 1
    %p233 = scmp.eq.s32.totalorder %s232, 0
    // Predicated region
    $region42: #{tpu_custom_call.1} parent=1 // pred_check
      %p234 = pneg %p233
    $region43: #{tpu_custom_call.1} parent=1 // pred_check_branch
      %236 = sbr.rel (%p234) target = $region45
    $region44: #{tpu_custom_call.1} parent=1 // pred_region
      %v237 = vld [vmem:[#allocation3] sm:$0x7]
      %238 = vst [vmem:[#allocation2] sm:$0x7] %v237
      %239 = vst [vmem:[#allocation2 + $0x3] sm:$0x7] %v237
      %240 = vst [vmem:[%s5] sm:$0x7] %v237
      %241 = vst [vmem:[%s6] sm:$0x7] %v237
    $region45: #{tpu_custom_call.1} parent=1 // pred_fallthru
      _
    %p242 = scmp.gt.s32.totalorder %s232, 0
    // Predicated region
    $region46: #{tpu_custom_call.1} parent=1 // pred_check
      %p243 = pneg %p242
    $region47: #{tpu_custom_call.1} parent=1 // pred_check_branch
      %245 = sbr.rel (%p243) target = $region49
    $region48: #{tpu_custom_call.1} parent=1 // pred_region
      %s246 = scalar_lea.vmem [#allocation5], 8
      %v247 = vld [vmem:[%s246] sm:$0xf]
      %v248 = vld [vmem:[%s246 + $0x4] sm:$0xf]
      %v249 = vld [vmem:[#allocation2] sm:$0x1]
      %v250 = vld [vmem:[#allocation2 + $0x1] sm:$0x1]
      %v251 = vld [vmem:[#allocation2 + $0x2] sm:$0x1]
      %v252 = vld [vmem:[#allocation2 + $0x3] sm:$0x1]
      %v253 = vld [vmem:[#allocation2 + $0x4] sm:$0x1]
      %v254 = vpack.c.bf16 %v253, %v253
      %v257 = vunpack.c.l.b16 %v247
      %v258 = vunpack.c.l.b16 %v248
      %v259 = vpack.c.b16 %v258, %v257
      %261 = vmatprep.subr.bf16.mxu0 0
      %262 = vmatpush1.bf16.xpose.msra.mxu0 0
      %263 = vmatprep.subr.bf16.mxu0 0
      %264 = vmatpush1.bf16.xpose.msra.mxu0 0
      %265 = vmatprep.subr.bf16.mxu0 0
      %266 = vmatpush1.bf16.xpose.msra.mxu0 0
      %267 = vmatprep.subr.bf16.mxu0 0
      %268 = vmatpush1.bf16.xpose.msra.mxu0 0
      %269 = vmatprep.subr.bf16.mxu0 0
      %270 = vmatpush1.bf16.xpose.msra.mxu0 0
      %271 = vmatprep.subr.bf16.mxu0 0
      %272 = vmatpush1.bf16.xpose.msra.mxu0 0
      %273 = vmatprep.subr.bf16.mxu0 0
      %274 = vmatpush1.bf16.xpose.msra.mxu0 0
      %275 = vmatprep.subr.bf16.mxu0 0
      %276 = vmatpush1.bf16.xpose.msra.mxu0 %v259
      %277 = vmatprep.subr.bf16.mxu0 0
      %278 = vmatpush2.bf16.xpose.msra.mxu0 0
      %279 = vmatprep.subr.bf16.mxu0 0
      %280 = vmatpush2.bf16.xpose.msra.mxu0 0
      %281 = vmatprep.subr.bf16.mxu0 0
      %282 = vmatpush2.bf16.xpose.msra.mxu0 0
      %283 = vmatprep.subr.bf16.mxu0 0
      %284 = vmatpush2.bf16.xpose.msra.mxu0 0
      %285 = vmatprep.subr.bf16.mxu0 0
      %286 = vmatpush2.bf16.xpose.msra.mxu0 0
      %287 = vmatprep.subr.bf16.mxu0 0
      %288 = vmatpush2.bf16.xpose.msra.mxu0 0
      %289 = vmatprep.subr.bf16.mxu0 0
      %290 = vmatpush2.bf16.xpose.msra.mxu0 0
      %291 = vmatprep.subr.bf16.mxu0 0
      %292 = vmatpush2.bf16.xpose.msra.mxu0 0
      %293 = vmatprep.mubr.bf16.mxu0 0
      %294 = vmatmul.mubr.bf16.gmra.mxu0 %v254
      %v295 = vpop.f32.mrf.mxu0
      %v296 = vadd.f32 0.0, %v295
      %v297 = vpop.f32.mrf.mxu0
      %v298 = vpop.f32.mrf.mxu0
      %v299 = vpop.f32.mrf.mxu0
      %300 = vdwg.mxu0
      %v301 = vpack.c.bf16 %v296, %v296
      %vm302 = vcmask 130048
      %v304 = vsel %vm302, %v301, 0
      %306 = vmatprep.subr.bf16.mxu0 0
      %307 = vmatpush1.bf16.msra.mxu0 0
      %308 = vmatprep.subr.bf16.mxu0 0
      %309 = vmatpush1.bf16.msra.mxu0 0
      %310 = vmatprep.subr.bf16.mxu0 0
      %311 = vmatpush1.bf16.msra.mxu0 0
      %312 = vmatprep.subr.bf16.mxu0 0
      %313 = vmatpush1.bf16.msra.mxu0 0
      %314 = vmatprep.subr.bf16.mxu0 0
      %315 = vmatpush1.bf16.msra.mxu0 0
      %316 = vmatprep.subr.bf16.mxu0 0
      %317 = vmatpush1.bf16.msra.mxu0 0
      %318 = vmatprep.subr.bf16.mxu0 0
      %319 = vmatpush1.bf16.msra.mxu0 0
      %320 = vmatprep.subr.bf16.mxu0 0
      %321 = vmatpush1.bf16.msra.mxu0 %v259
      %322 = vmatprep.subr.bf16.mxu0 0
      %323 = vmatpush2.bf16.msra.mxu0 0
      %324 = vmatprep.subr.bf16.mxu0 0
      %325 = vmatpush2.bf16.msra.mxu0 0
      %326 = vmatprep.subr.bf16.mxu0 0
      %327 = vmatpush2.bf16.msra.mxu0 0
      %328 = vmatprep.subr.bf16.mxu0 0
      %329 = vmatpush2.bf16.msra.mxu0 0
      %330 = vmatprep.subr.bf16.mxu0 0
      %331 = vmatpush2.bf16.msra.mxu0 0
      %332 = vmatprep.subr.bf16.mxu0 0
      %333 = vmatpush2.bf16.msra.mxu0 0
      %334 = vmatprep.subr.bf16.mxu0 0
      %335 = vmatpush2.bf16.msra.mxu0 0
      %336 = vmatprep.subr.bf16.mxu0 0
      %337 = vmatpush2.bf16.msra.mxu0 0
      %338 = vmatprep.mubr.bf16.mxu0 0
      %339 = vmatmul.mubr.bf16.gmra.mxu0 %v304
      %v340 = vpop.f32.mrf.mxu0
      %v341 = vadd.f32 0.0, %v340
      %v342 = vpop.f32.mrf.mxu0
      %v343 = vpop.f32.mrf.mxu0
      %v344 = vpop.f32.mrf.mxu0
      %345 = vdwg.mxu0
      %v346 = vmul.f32 %v62, %v341
      %v347 = vmul.f32 %v63, %v253
      %v348 = vsub.f32 %v249, %v346
      %v349 = vmax.f32 %v348, 0.0
      %v350 = vmin.f32 %v349, 1.0
      %v351 = vadd.f32 %v250, %v346
      %v352 = vsub.f32 %v351, %v347
      %v353 = vmax.f32 %v352, 0.0
      %v354 = vmin.f32 %v353, 1.0
      %v355 = vadd.f32 %v251, %v347
      %v356 = vmax.f32 %v355, 0.0
      %v357 = vmin.f32 %v356, 1.0
      %s358 = scalar_lea.vmem [#allocation7], 2
      %v359 = vld [vmem:[%s358] sm:$0x3]
      %vm360 = vcmp.gt.f32.partialorder %v252, 0.5
      %vm361 = vcmp.gt.f32.partialorder %v253, 0.5
      %vm362 = vcmp.lt.f32.partialorder %v359, %v354
      %vm363 = vmand %vm360, %vm362
      %vm364 = vcmp.lt.f32.partialorder %v359, %v357
      %vm365 = vmand %vm361, %vm364
      %vm366 = vcmp.lt.f32.partialorder %v359, 0.5
      %v367 = vsel %vm366, 1, 0
      %v368 = vrot.slane %v367, 1
      %vm369 = vcmp.ne.s32.totalorder %v368, 0
      %vm370 = vmand %vm365, %vm369
      %vm371 = vmxor %vm366, 1
      %v372 = vsel %vm371, 1, 0
      %v373 = vrot.slane %v372, 1
      %vm374 = vcmp.ne.s32.totalorder %v373, 0
      %vm375 = vmand %vm365, %vm374
      %vm376 = vmxor %vm365, 1
      %vm377 = vmand %vm361, %vm376
      %vm378 = vmxor %vm363, 1
      %vm379 = vmand %vm360, %vm378
      %vm380 = vmor %vm379, %vm375
      %vm381 = vmor %vm363, %vm377
      %vm382 = vmxor %vm360, 1
      %vm383 = vmxor %vm361, 1
      %vm384 = vmand %vm382, %vm383
      %vm385 = vmor %vm370, %vm384
      %386 = vst [vmem:[#allocation2] sm:$0x1] %v350
      %387 = vst [vmem:[#allocation2 + $0x1] sm:$0x1] %v354
      %388 = vst [vmem:[#allocation2 + $0x2] sm:$0x1] %v357
      %v389 = vsel %vm380, 1, 0
      %v390 = vcvt.s32.f32 %v389
      %391 = vst [vmem:[#allocation2 + $0x3] sm:$0x1] %v390
      %v392 = vsel %vm381, 1, 0
      %v393 = vcvt.s32.f32 %v392
      %394 = vst [vmem:[#allocation2 + $0x4] sm:$0x1] %v393
      %v395 = vsel %vm385, 1, 0
      %v396 = vcvt.s32.f32 %v395
      %397 = vst [vmem:[#allocation2 + $0x5] sm:$0x1] %v396
      %v398 = vld [vmem:[#allocation2] sm:$0x7]
      %s399 = scalar_lea.vmem %s5, 4
      %400 = vst [vmem:[%s399] sm:$0x7] %v398
      %v401 = vld [vmem:[#allocation2 + $0x3] sm:$0x7]
      %s402 = scalar_lea.vmem %s6, 4
      %403 = vst [vmem:[%s402] sm:$0x7] %v401
    $region49: #{tpu_custom_call.1} parent=1 // pred_fallthru
      _
    %s404 = sadd.s32 %s64, 2
    %p405 = scmp.eq.s32.totalorder %s404, 0
    // Predicated region
    $region50: #{tpu_custom_call.1} parent=1 // pred_check
      %p406 = pneg %p405
    $region51: #{tpu_custom_call.1} parent=1 // pred_check_branch
      %408 = sbr.rel (%p406) target = $region53
    $region52: #{tpu_custom_call.1} parent=1 // pred_region
      %v409 = vld [vmem:[#allocation3] sm:$0x7]
      %410 = vst [vmem:[#allocation2] sm:$0x7] %v409
      %411 = vst [vmem:[#allocation2 + $0x3] sm:$0x7] %v409
      %412 = vst [vmem:[%s5] sm:$0x7] %v409
      %413 = vst [vmem:[%s6] sm:$0x7] %v409
    $region53: #{tpu_custom_call.1} parent=1 // pred_fallthru
      _
    %p414 = scmp.gt.s32.totalorder %s404, 0
    // Predicated region
    $region54: #{tpu_custom_call.1} parent=1 // pred_check
      %p415 = pneg %p414
    $region55: #{tpu_custom_call.1} parent=1 // pred_check_branch
      %417 = sbr.rel (%p415) target = $region57
    $region56: #{tpu_custom_call.1} parent=1 // pred_region
      %s418 = scalar_lea.vmem [#allocation5], 16
      %v419 = vld [vmem:[%s418] sm:$0xf]
      %v420 = vld [vmem:[%s418 + $0x4] sm:$0xf]
      %v421 = vld [vmem:[#allocation2] sm:$0x1]
      %v422 = vld [vmem:[#allocation2 + $0x1] sm:$0x1]
      %v423 = vld [vmem:[#allocation2 + $0x2] sm:$0x1]
      %v424 = vld [vmem:[#allocation2 + $0x3] sm:$0x1]
      %v425 = vld [vmem:[#allocation2 + $0x4] sm:$0x1]
      %v426 = vpack.c.bf16 %v425, %v425
      %v429 = vunpack.c.l.b16 %v419
      %v430 = vunpack.c.l.b16 %v420
      %v431 = vpack.c.b16 %v430, %v429
      %433 = vmatprep.subr.bf16.mxu0 0
      %434 = vmatpush1.bf16.xpose.msra.mxu0 0
      %435 = vmatprep.subr.bf16.mxu0 0
      %436 = vmatpush1.bf16.xpose.msra.mxu0 0
      %437 = vmatprep.subr.bf16.mxu0 0
      %438 = vmatpush1.bf16.xpose.msra.mxu0 0
      %439 = vmatprep.subr.bf16.mxu0 0
      %440 = vmatpush1.bf16.xpose.msra.mxu0 0
      %441 = vmatprep.subr.bf16.mxu0 0
      %442 = vmatpush1.bf16.xpose.msra.mxu0 0
      %443 = vmatprep.subr.bf16.mxu0 0
      %444 = vmatpush1.bf16.xpose.msra.mxu0 0
      %445 = vmatprep.subr.bf16.mxu0 0
      %446 = vmatpush1.bf16.xpose.msra.mxu0 0
      %447 = vmatprep.subr.bf16.mxu0 0
      %448 = vmatpush1.bf16.xpose.msra.mxu0 %v431
      %449 = vmatprep.subr.bf16.mxu0 0
      %450 = vmatpush2.bf16.xpose.msra.mxu0 0
      %451 = vmatprep.subr.bf16.mxu0 0
      %452 = vmatpush2.bf16.xpose.msra.mxu0 0
      %453 = vmatprep.subr.bf16.mxu0 0
      %454 = vmatpush2.bf16.xpose.msra.mxu0 0
      %455 = vmatprep.subr.bf16.mxu0 0
      %456 = vmatpush2.bf16.xpose.msra.mxu0 0
      %457 = vmatprep.subr.bf16.mxu0 0
      %458 = vmatpush2.bf16.xpose.msra.mxu0 0
      %459 = vmatprep.subr.bf16.mxu0 0
      %460 = vmatpush2.bf16.xpose.msra.mxu0 0
      %461 = vmatprep.subr.bf16.mxu0 0
      %462 = vmatpush2.bf16.xpose.msra.mxu0 0
      %463 = vmatprep.subr.bf16.mxu0 0
      %464 = vmatpush2.bf16.xpose.msra.mxu0 0
      %465 = vmatprep.mubr.bf16.mxu0 0
      %466 = vmatmul.mubr.bf16.gmra.mxu0 %v426
      %v467 = vpop.f32.mrf.mxu0
      %v468 = vadd.f32 0.0, %v467
      %v469 = vpop.f32.mrf.mxu0
      %v470 = vpop.f32.mrf.mxu0
      %v471 = vpop.f32.mrf.mxu0
      %472 = vdwg.mxu0
      %v473 = vpack.c.bf16 %v468, %v468
      %vm474 = vcmask 130048
      %v476 = vsel %vm474, %v473, 0
      %478 = vmatprep.subr.bf16.mxu0 0
      %479 = vmatpush1.bf16.msra.mxu0 0
      %480 = vmatprep.subr.bf16.mxu0 0
      %481 = vmatpush1.bf16.msra.mxu0 0
      %482 = vmatprep.subr.bf16.mxu0 0
      %483 = vmatpush1.bf16.msra.mxu0 0
      %484 = vmatprep.subr.bf16.mxu0 0
      %485 = vmatpush1.bf16.msra.mxu0 0
      %486 = vmatprep.subr.bf16.mxu0 0
      %487 = vmatpush1.bf16.msra.mxu0 0
      %488 = vmatprep.subr.bf16.mxu0 0
      %489 = vmatpush1.bf16.msra.mxu0 0
      %490 = vmatprep.subr.bf16.mxu0 0
      %491 = vmatpush1.bf16.msra.mxu0 0
      %492 = vmatprep.subr.bf16.mxu0 0
      %493 = vmatpush1.bf16.msra.mxu0 %v431
      %494 = vmatprep.subr.bf16.mxu0 0
      %495 = vmatpush2.bf16.msra.mxu0 0
      %496 = vmatprep.subr.bf16.mxu0 0
      %497 = vmatpush2.bf16.msra.mxu0 0
      %498 = vmatprep.subr.bf16.mxu0 0
      %499 = vmatpush2.bf16.msra.mxu0 0
      %500 = vmatprep.subr.bf16.mxu0 0
      %501 = vmatpush2.bf16.msra.mxu0 0
      %502 = vmatprep.subr.bf16.mxu0 0
      %503 = vmatpush2.bf16.msra.mxu0 0
      %504 = vmatprep.subr.bf16.mxu0 0
      %505 = vmatpush2.bf16.msra.mxu0 0
      %506 = vmatprep.subr.bf16.mxu0 0
      %507 = vmatpush2.bf16.msra.mxu0 0
      %508 = vmatprep.subr.bf16.mxu0 0
      %509 = vmatpush2.bf16.msra.mxu0 0
      %510 = vmatprep.mubr.bf16.mxu0 0
      %511 = vmatmul.mubr.bf16.gmra.mxu0 %v476
      %v512 = vpop.f32.mrf.mxu0
      %v513 = vadd.f32 0.0, %v512
      %v514 = vpop.f32.mrf.mxu0
      %v515 = vpop.f32.mrf.mxu0
      %v516 = vpop.f32.mrf.mxu0
      %517 = vdwg.mxu0
      %v518 = vmul.f32 %v62, %v513
      %v519 = vmul.f32 %v63, %v425
      %v520 = vsub.f32 %v421, %v518
      %v521 = vmax.f32 %v520, 0.0
      %v522 = vmin.f32 %v521, 1.0
      %v523 = vadd.f32 %v422, %v518
      %v524 = vsub.f32 %v523, %v519
      %v525 = vmax.f32 %v524, 0.0
      %v526 = vmin.f32 %v525, 1.0
      %v527 = vadd.f32 %v423, %v519
      %v528 = vmax.f32 %v527, 0.0
      %v529 = vmin.f32 %v528, 1.0
      %s530 = scalar_lea.vmem [#allocation7], 4
      %v531 = vld [vmem:[%s530] sm:$0x3]
      %vm532 = vcmp.gt.f32.partialorder %v424, 0.5
      %vm533 = vcmp.gt.f32.partialorder %v425, 0.5
      %vm534 = vcmp.lt.f32.partialorder %v531, %v526
      %vm535 = vmand %vm532, %vm534
      %vm536 = vcmp.lt.f32.partialorder %v531, %v529
      %vm537 = vmand %vm533, %vm536
      %vm538 = vcmp.lt.f32.partialorder %v531, 0.5
      %v539 = vsel %vm538, 1, 0
      %v540 = vrot.slane %v539, 1
      %vm541 = vcmp.ne.s32.totalorder %v540, 0
      %vm542 = vmand %vm537, %vm541
      %vm543 = vmxor %vm538, 1
      %v544 = vsel %vm543, 1, 0
      %v545 = vrot.slane %v544, 1
      %vm546 = vcmp.ne.s32.totalorder %v545, 0
      %vm547 = vmand %vm537, %vm546
      %vm548 = vmxor %vm537, 1
      %vm549 = vmand %vm533, %vm548
      %vm550 = vmxor %vm535, 1
      %vm551 = vmand %vm532, %vm550
      %vm552 = vmor %vm551, %vm547
      %vm553 = vmor %vm535, %vm549
      %vm554 = vmxor %vm532, 1
      %vm555 = vmxor %vm533, 1
      %vm556 = vmand %vm554, %vm555
      %vm557 = vmor %vm542, %vm556
      %558 = vst [vmem:[#allocation2] sm:$0x1] %v522
      %559 = vst [vmem:[#allocation2 + $0x1] sm:$0x1] %v526
      %560 = vst [vmem:[#allocation2 + $0x2] sm:$0x1] %v529
      %v561 = vsel %vm552, 1, 0
      %v562 = vcvt.s32.f32 %v561
      %563 = vst [vmem:[#allocation2 + $0x3] sm:$0x1] %v562
      %v564 = vsel %vm553, 1, 0
      %v565 = vcvt.s32.f32 %v564
      %566 = vst [vmem:[#allocation2 + $0x4] sm:$0x1] %v565
      %v567 = vsel %vm557, 1, 0
      %v568 = vcvt.s32.f32 %v567
      %569 = vst [vmem:[#allocation2 + $0x5] sm:$0x1] %v568
      %v570 = vld [vmem:[#allocation2] sm:$0x7]
      %s571 = scalar_lea.vmem %s5, 8
      %572 = vst [vmem:[%s571] sm:$0x7] %v570
      %v573 = vld [vmem:[#allocation2 + $0x3] sm:$0x7]
      %s574 = scalar_lea.vmem %s6, 8
      %575 = vst [vmem:[%s574] sm:$0x7] %v573
    $region57: #{tpu_custom_call.1} parent=1 // pred_fallthru
      _
    %s576 = sadd.s32 %s64, 3
    %p577 = scmp.eq.s32.totalorder %s576, 0
    // Predicated region
    $region58: #{tpu_custom_call.1} parent=1 // pred_check
      %p578 = pneg %p577
    $region59: #{tpu_custom_call.1} parent=1 // pred_check_branch
      %580 = sbr.rel (%p578) target = $region61
    $region60: #{tpu_custom_call.1} parent=1 // pred_region
      %v581 = vld [vmem:[#allocation3] sm:$0x7]
      %582 = vst [vmem:[#allocation2] sm:$0x7] %v581
      %583 = vst [vmem:[#allocation2 + $0x3] sm:$0x7] %v581
      %584 = vst [vmem:[%s5] sm:$0x7] %v581
      %585 = vst [vmem:[%s6] sm:$0x7] %v581
    $region61: #{tpu_custom_call.1} parent=1 // pred_fallthru
      _
    %p586 = scmp.gt.s32.totalorder %s576, 0
    // Predicated region
    $region62: #{tpu_custom_call.1} parent=1 // pred_check
      %p587 = pneg %p586
    $region63: #{tpu_custom_call.1} parent=1 // pred_check_branch
      %589 = sbr.rel (%p587) target = $region65
    $region64: #{tpu_custom_call.1} parent=1 // pred_region
      %s590 = scalar_lea.vmem [#allocation5], 24
      %v591 = vld [vmem:[%s590] sm:$0xf]
      %v592 = vld [vmem:[%s590 + $0x4] sm:$0xf]
      %v593 = vld [vmem:[#allocation2] sm:$0x1]
      %v594 = vld [vmem:[#allocation2 + $0x1] sm:$0x1]
      %v595 = vld [vmem:[#allocation2 + $0x2] sm:$0x1]
      %v596 = vld [vmem:[#allocation2 + $0x3] sm:$0x1]
      %v597 = vld [vmem:[#allocation2 + $0x4] sm:$0x1]
      %v598 = vpack.c.bf16 %v597, %v597
      %v601 = vunpack.c.l.b16 %v591
      %v602 = vunpack.c.l.b16 %v592
      %v603 = vpack.c.b16 %v602, %v601
      %605 = vmatprep.subr.bf16.mxu0 0
      %606 = vmatpush1.bf16.xpose.msra.mxu0 0
      %607 = vmatprep.subr.bf16.mxu0 0
      %608 = vmatpush1.bf16.xpose.msra.mxu0 0
      %609 = vmatprep.subr.bf16.mxu0 0
      %610 = vmatpush1.bf16.xpose.msra.mxu0 0
      %611 = vmatprep.subr.bf16.mxu0 0
      %612 = vmatpush1.bf16.xpose.msra.mxu0 0
      %613 = vmatprep.subr.bf16.mxu0 0
      %614 = vmatpush1.bf16.xpose.msra.mxu0 0
      %615 = vmatprep.subr.bf16.mxu0 0
      %616 = vmatpush1.bf16.xpose.msra.mxu0 0
      %617 = vmatprep.subr.bf16.mxu0 0
      %618 = vmatpush1.bf16.xpose.msra.mxu0 0
      %619 = vmatprep.subr.bf16.mxu0 0
      %620 = vmatpush1.bf16.xpose.msra.mxu0 %v603
      %621 = vmatprep.subr.bf16.mxu0 0
      %622 = vmatpush2.bf16.xpose.msra.mxu0 0
      %623 = vmatprep.subr.bf16.mxu0 0
      %624 = vmatpush2.bf16.xpose.msra.mxu0 0
      %625 = vmatprep.subr.bf16.mxu0 0
      %626 = vmatpush2.bf16.xpose.msra.mxu0 0
      %627 = vmatprep.subr.bf16.mxu0 0
      %628 = vmatpush2.bf16.xpose.msra.mxu0 0
      %629 = vmatprep.subr.bf16.mxu0 0
      %630 = vmatpush2.bf16.xpose.msra.mxu0 0
      %631 = vmatprep.subr.bf16.mxu0 0
      %632 = vmatpush2.bf16.xpose.msra.mxu0 0
      %633 = vmatprep.subr.bf16.mxu0 0
      %634 = vmatpush2.bf16.xpose.msra.mxu0 0
      %635 = vmatprep.subr.bf16.mxu0 0
      %636 = vmatpush2.bf16.xpose.msra.mxu0 0
      %637 = vmatprep.mubr.bf16.mxu0 0
      %638 = vmatmul.mubr.bf16.gmra.mxu0 %v598
      %v639 = vpop.f32.mrf.mxu0
      %v640 = vadd.f32 0.0, %v639
      %v641 = vpop.f32.mrf.mxu0
      %v642 = vpop.f32.mrf.mxu0
      %v643 = vpop.f32.mrf.mxu0
      %644 = vdwg.mxu0
      %v645 = vpack.c.bf16 %v640, %v640
      %vm646 = vcmask 130048
      %v648 = vsel %vm646, %v645, 0
      %650 = vmatprep.subr.bf16.mxu0 0
      %651 = vmatpush1.bf16.msra.mxu0 0
      %652 = vmatprep.subr.bf16.mxu0 0
      %653 = vmatpush1.bf16.msra.mxu0 0
      %654 = vmatprep.subr.bf16.mxu0 0
      %655 = vmatpush1.bf16.msra.mxu0 0
      %656 = vmatprep.subr.bf16.mxu0 0
      %657 = vmatpush1.bf16.msra.mxu0 0
      %658 = vmatprep.subr.bf16.mxu0 0
      %659 = vmatpush1.bf16.msra.mxu0 0
      %660 = vmatprep.subr.bf16.mxu0 0
      %661 = vmatpush1.bf16.msra.mxu0 0
      %662 = vmatprep.subr.bf16.mxu0 0
      %663 = vmatpush1.bf16.msra.mxu0 0
      %664 = vmatprep.subr.bf16.mxu0 0
      %665 = vmatpush1.bf16.msra.mxu0 %v603
      %666 = vmatprep.subr.bf16.mxu0 0
      %667 = vmatpush2.bf16.msra.mxu0 0
      %668 = vmatprep.subr.bf16.mxu0 0
      %669 = vmatpush2.bf16.msra.mxu0 0
      %670 = vmatprep.subr.bf16.mxu0 0
      %671 = vmatpush2.bf16.msra.mxu0 0
      %672 = vmatprep.subr.bf16.mxu0 0
      %673 = vmatpush2.bf16.msra.mxu0 0
      %674 = vmatprep.subr.bf16.mxu0 0
      %675 = vmatpush2.bf16.msra.mxu0 0
      %676 = vmatprep.subr.bf16.mxu0 0
      %677 = vmatpush2.bf16.msra.mxu0 0
      %678 = vmatprep.subr.bf16.mxu0 0
      %679 = vmatpush2.bf16.msra.mxu0 0
      %680 = vmatprep.subr.bf16.mxu0 0
      %681 = vmatpush2.bf16.msra.mxu0 0
      %682 = vmatprep.mubr.bf16.mxu0 0
      %683 = vmatmul.mubr.bf16.gmra.mxu0 %v648
      %v684 = vpop.f32.mrf.mxu0
      %v685 = vadd.f32 0.0, %v684
      %v686 = vpop.f32.mrf.mxu0
      %v687 = vpop.f32.mrf.mxu0
      %v688 = vpop.f32.mrf.mxu0
      %689 = vdwg.mxu0
      %v690 = vmul.f32 %v62, %v685
      %v691 = vmul.f32 %v63, %v597
      %v692 = vsub.f32 %v593, %v690
      %v693 = vmax.f32 %v692, 0.0
      %v694 = vmin.f32 %v693, 1.0
      %v695 = vadd.f32 %v594, %v690
      %v696 = vsub.f32 %v695, %v691
      %v697 = vmax.f32 %v696, 0.0
      %v698 = vmin.f32 %v697, 1.0
      %v699 = vadd.f32 %v595, %v691
      %v700 = vmax.f32 %v699, 0.0
      %v701 = vmin.f32 %v700, 1.0
      %s702 = scalar_lea.vmem [#allocation7], 6
      %v703 = vld [vmem:[%s702] sm:$0x3]
      %vm704 = vcmp.gt.f32.partialorder %v596, 0.5
      %vm705 = vcmp.gt.f32.partialorder %v597, 0.5
      %vm706 = vcmp.lt.f32.partialorder %v703, %v698
      %vm707 = vmand %vm704, %vm706
      %vm708 = vcmp.lt.f32.partialorder %v703, %v701
      %vm709 = vmand %vm705, %vm708
      %vm710 = vcmp.lt.f32.partialorder %v703, 0.5
      %v711 = vsel %vm710, 1, 0
      %v712 = vrot.slane %v711, 1
      %vm713 = vcmp.ne.s32.totalorder %v712, 0
      %vm714 = vmand %vm709, %vm713
      %vm715 = vmxor %vm710, 1
      %v716 = vsel %vm715, 1, 0
      %v717 = vrot.slane %v716, 1
      %vm718 = vcmp.ne.s32.totalorder %v717, 0
      %vm719 = vmand %vm709, %vm718
      %vm720 = vmxor %vm709, 1
      %vm721 = vmand %vm705, %vm720
      %vm722 = vmxor %vm707, 1
      %vm723 = vmand %vm704, %vm722
      %vm724 = vmor %vm723, %vm719
      %vm725 = vmor %vm707, %vm721
      %vm726 = vmxor %vm704, 1
      %vm727 = vmxor %vm705, 1
      %vm728 = vmand %vm726, %vm727
      %vm729 = vmor %vm714, %vm728
      %730 = vst [vmem:[#allocation2] sm:$0x1] %v694
      %731 = vst [vmem:[#allocation2 + $0x1] sm:$0x1] %v698
      %732 = vst [vmem:[#allocation2 + $0x2] sm:$0x1] %v701
      %v733 = vsel %vm724, 1, 0
      %v734 = vcvt.s32.f32 %v733
      %735 = vst [vmem:[#allocation2 + $0x3] sm:$0x1] %v734
      %v736 = vsel %vm725, 1, 0
      %v737 = vcvt.s32.f32 %v736
      %738 = vst [vmem:[#allocation2 + $0x4] sm:$0x1] %v737
      %v739 = vsel %vm729, 1, 0
      %v740 = vcvt.s32.f32 %v739
      %741 = vst [vmem:[#allocation2 + $0x5] sm:$0x1] %v740
      %v742 = vld [vmem:[#allocation2] sm:$0x7]
      %s743 = scalar_lea.vmem %s5, 12
      %744 = vst [vmem:[%s743] sm:$0x7] %v742
      %v745 = vld [vmem:[#allocation2 + $0x3] sm:$0x7]
      %s746 = scalar_lea.vmem %s6, 12
      %747 = vst [vmem:[%s746] sm:$0x7] %v745
    $region65: #{tpu_custom_call.1} parent=1 // pred_fallthru
      _
    %s748 = sadd.s32 %s64, 4
    %p749 = scmp.eq.s32.totalorder %s748, 0
    // Predicated region
    $region66: #{tpu_custom_call.1} parent=1 // pred_check
      %p750 = pneg %p749
    $region67: #{tpu_custom_call.1} parent=1 // pred_check_branch
      %752 = sbr.rel (%p750) target = $region69
    $region68: #{tpu_custom_call.1} parent=1 // pred_region
      %v753 = vld [vmem:[#allocation3] sm:$0x7]
      %754 = vst [vmem:[#allocation2] sm:$0x7] %v753
      %755 = vst [vmem:[#allocation2 + $0x3] sm:$0x7] %v753
      %756 = vst [vmem:[%s5] sm:$0x7] %v753
      %757 = vst [vmem:[%s6] sm:$0x7] %v753
    $region69: #{tpu_custom_call.1} parent=1 // pred_fallthru
      _
    %p758 = scmp.gt.s32.totalorder %s748, 0
    // Predicated region
    $region70: #{tpu_custom_call.1} parent=1 // pred_check
      %p759 = pneg %p758
    $region71: #{tpu_custom_call.1} parent=1 // pred_check_branch
      %761 = sbr.rel (%p759) target = $region73
    $region72: #{tpu_custom_call.1} parent=1 // pred_region
      %s762 = scalar_lea.vmem [#allocation5], 32
      %v763 = vld [vmem:[%s762] sm:$0xf]
      %v764 = vld [vmem:[%s762 + $0x4] sm:$0xf]
      %v765 = vld [vmem:[#allocation2] sm:$0x1]
      %v766 = vld [vmem:[#allocation2 + $0x1] sm:$0x1]
      %v767 = vld [vmem:[#allocation2 + $0x2] sm:$0x1]
      %v768 = vld [vmem:[#allocation2 + $0x3] sm:$0x1]
      %v769 = vld [vmem:[#allocation2 + $0x4] sm:$0x1]
      %v770 = vpack.c.bf16 %v769, %v769
      %v773 = vunpack.c.l.b16 %v763
      %v774 = vunpack.c.l.b16 %v764
      %v775 = vpack.c.b16 %v774, %v773
      %777 = vmatprep.subr.bf16.mxu0 0
      %778 = vmatpush1.bf16.xpose.msra.mxu0 0
      %779 = vmatprep.subr.bf16.mxu0 0
      %780 = vmatpush1.bf16.xpose.msra.mxu0 0
      %781 = vmatprep.subr.bf16.mxu0 0
      %782 = vmatpush1.bf16.xpose.msra.mxu0 0
      %783 = vmatprep.subr.bf16.mxu0 0
      %784 = vmatpush1.bf16.xpose.msra.mxu0 0
      %785 = vmatprep.subr.bf16.mxu0 0
      %786 = vmatpush1.bf16.xpose.msra.mxu0 0
      %787 = vmatprep.subr.bf16.mxu0 0
      %788 = vmatpush1.bf16.xpose.msra.mxu0 0
      %789 = vmatprep.subr.bf16.mxu0 0
      %790 = vmatpush1.bf16.xpose.msra.mxu0 0
      %791 = vmatprep.subr.bf16.mxu0 0
      %792 = vmatpush1.bf16.xpose.msra.mxu0 %v775
      %793 = vmatprep.subr.bf16.mxu0 0
      %794 = vmatpush2.bf16.xpose.msra.mxu0 0
      %795 = vmatprep.subr.bf16.mxu0 0
      %796 = vmatpush2.bf16.xpose.msra.mxu0 0
      %797 = vmatprep.subr.bf16.mxu0 0
      %798 = vmatpush2.bf16.xpose.msra.mxu0 0
      %799 = vmatprep.subr.bf16.mxu0 0
      %800 = vmatpush2.bf16.xpose.msra.mxu0 0
      %801 = vmatprep.subr.bf16.mxu0 0
      %802 = vmatpush2.bf16.xpose.msra.mxu0 0
      %803 = vmatprep.subr.bf16.mxu0 0
      %804 = vmatpush2.bf16.xpose.msra.mxu0 0
      %805 = vmatprep.subr.bf16.mxu0 0
      %806 = vmatpush2.bf16.xpose.msra.mxu0 0
      %807 = vmatprep.subr.bf16.mxu0 0
      %808 = vmatpush2.bf16.xpose.msra.mxu0 0
      %809 = vmatprep.mubr.bf16.mxu0 0
      %810 = vmatmul.mubr.bf16.gmra.mxu0 %v770
      %v811 = vpop.f32.mrf.mxu0
      %v812 = vadd.f32 0.0, %v811
      %v813 = vpop.f32.mrf.mxu0
      %v814 = vpop.f32.mrf.mxu0
      %v815 = vpop.f32.mrf.mxu0
      %816 = vdwg.mxu0
      %v817 = vpack.c.bf16 %v812, %v812
      %vm818 = vcmask 130048
      %v820 = vsel %vm818, %v817, 0
      %822 = vmatprep.subr.bf16.mxu0 0
      %823 = vmatpush1.bf16.msra.mxu0 0
      %824 = vmatprep.subr.bf16.mxu0 0
      %825 = vmatpush1.bf16.msra.mxu0 0
      %826 = vmatprep.subr.bf16.mxu0 0
      %827 = vmatpush1.bf16.msra.mxu0 0
      %828 = vmatprep.subr.bf16.mxu0 0
      %829 = vmatpush1.bf16.msra.mxu0 0
      %830 = vmatprep.subr.bf16.mxu0 0
      %831 = vmatpush1.bf16.msra.mxu0 0
      %832 = vmatprep.subr.bf16.mxu0 0
      %833 = vmatpush1.bf16.msra.mxu0 0
      %834 = vmatprep.subr.bf16.mxu0 0
      %835 = vmatpush1.bf16.msra.mxu0 0
      %836 = vmatprep.subr.bf16.mxu0 0
      %837 = vmatpush1.bf16.msra.mxu0 %v775
      %838 = vmatprep.subr.bf16.mxu0 0
      %839 = vmatpush2.bf16.msra.mxu0 0
      %840 = vmatprep.subr.bf16.mxu0 0
      %841 = vmatpush2.bf16.msra.mxu0 0
      %842 = vmatprep.subr.bf16.mxu0 0
      %843 = vmatpush2.bf16.msra.mxu0 0
      %844 = vmatprep.subr.bf16.mxu0 0
      %845 = vmatpush2.bf16.msra.mxu0 0
      %846 = vmatprep.subr.bf16.mxu0 0
      %847 = vmatpush2.bf16.msra.mxu0 0
      %848 = vmatprep.subr.bf16.mxu0 0
      %849 = vmatpush2.bf16.msra.mxu0 0
      %850 = vmatprep.subr.bf16.mxu0 0
      %851 = vmatpush2.bf16.msra.mxu0 0
      %852 = vmatprep.subr.bf16.mxu0 0
      %853 = vmatpush2.bf16.msra.mxu0 0
      %854 = vmatprep.mubr.bf16.mxu0 0
      %855 = vmatmul.mubr.bf16.gmra.mxu0 %v820
      %v856 = vpop.f32.mrf.mxu0
      %v857 = vadd.f32 0.0, %v856
      %v858 = vpop.f32.mrf.mxu0
      %v859 = vpop.f32.mrf.mxu0
      %v860 = vpop.f32.mrf.mxu0
      %861 = vdwg.mxu0
      %v862 = vmul.f32 %v62, %v857
      %v863 = vmul.f32 %v63, %v769
      %v864 = vsub.f32 %v765, %v862
      %v865 = vmax.f32 %v864, 0.0
      %v866 = vmin.f32 %v865, 1.0
      %v867 = vadd.f32 %v766, %v862
      %v868 = vsub.f32 %v867, %v863
      %v869 = vmax.f32 %v868, 0.0
      %v870 = vmin.f32 %v869, 1.0
      %v871 = vadd.f32 %v767, %v863
      %v872 = vmax.f32 %v871, 0.0
      %v873 = vmin.f32 %v872, 1.0
      %s874 = scalar_lea.vmem [#allocation7], 8
      %v875 = vld [vmem:[%s874] sm:$0x3]
      %vm876 = vcmp.gt.f32.partialorder %v768, 0.5
      %vm877 = vcmp.gt.f32.partialorder %v769, 0.5
      %vm878 = vcmp.lt.f32.partialorder %v875, %v870
      %vm879 = vmand %vm876, %vm878
      %vm880 = vcmp.lt.f32.partialorder %v875, %v873
      %vm881 = vmand %vm877, %vm880
      %vm882 = vcmp.lt.f32.partialorder %v875, 0.5
      %v883 = vsel %vm882, 1, 0
      %v884 = vrot.slane %v883, 1
      %vm885 = vcmp.ne.s32.totalorder %v884, 0
      %vm886 = vmand %vm881, %vm885
      %vm887 = vmxor %vm882, 1
      %v888 = vsel %vm887, 1, 0
      %v889 = vrot.slane %v888, 1
      %vm890 = vcmp.ne.s32.totalorder %v889, 0
      %vm891 = vmand %vm881, %vm890
      %vm892 = vmxor %vm881, 1
      %vm893 = vmand %vm877, %vm892
      %vm894 = vmxor %vm879, 1
      %vm895 = vmand %vm876, %vm894
      %vm896 = vmor %vm895, %vm891
      %vm897 = vmor %vm879, %vm893
      %vm898 = vmxor %vm876, 1
      %vm899 = vmxor %vm877, 1
      %vm900 = vmand %vm898, %vm899
      %vm901 = vmor %vm886, %vm900
      %902 = vst [vmem:[#allocation2] sm:$0x1] %v866
      %903 = vst [vmem:[#allocation2 + $0x1] sm:$0x1] %v870
      %904 = vst [vmem:[#allocation2 + $0x2] sm:$0x1] %v873
      %v905 = vsel %vm896, 1, 0
      %v906 = vcvt.s32.f32 %v905
      %907 = vst [vmem:[#allocation2 + $0x3] sm:$0x1] %v906
      %v908 = vsel %vm897, 1, 0
      %v909 = vcvt.s32.f32 %v908
      %910 = vst [vmem:[#allocation2 + $0x4] sm:$0x1] %v909
      %v911 = vsel %vm901, 1, 0
      %v912 = vcvt.s32.f32 %v911
      %913 = vst [vmem:[#allocation2 + $0x5] sm:$0x1] %v912
      %v914 = vld [vmem:[#allocation2] sm:$0x7]
      %s915 = scalar_lea.vmem %s5, 16
      %916 = vst [vmem:[%s915] sm:$0x7] %v914
      %v917 = vld [vmem:[#allocation2 + $0x3] sm:$0x7]
      %s918 = scalar_lea.vmem %s6, 16
      %919 = vst [vmem:[%s918] sm:$0x7] %v917
    $region73: #{tpu_custom_call.1} parent=1 // pred_fallthru
      _
    %s920 = sadd.s32 %s64, 5
    %p921 = scmp.eq.s32.totalorder %s920, 0
    // Predicated region
    $region74: #{tpu_custom_call.1} parent=1 // pred_check
      %p922 = pneg %p921
    $region75: #{tpu_custom_call.1} parent=1 // pred_check_branch
      %924 = sbr.rel (%p922) target = $region77
    $region76: #{tpu_custom_call.1} parent=1 // pred_region
      %v925 = vld [vmem:[#allocation3] sm:$0x7]
      %926 = vst [vmem:[#allocation2] sm:$0x7] %v925
      %927 = vst [vmem:[#allocation2 + $0x3] sm:$0x7] %v925
      %928 = vst [vmem:[%s5] sm:$0x7] %v925
      %929 = vst [vmem:[%s6] sm:$0x7] %v925
    $region77: #{tpu_custom_call.1} parent=1 // pred_fallthru
      _
    %p930 = scmp.gt.s32.totalorder %s920, 0
    // Predicated region
    $region78: #{tpu_custom_call.1} parent=1 // pred_check
      %p931 = pneg %p930
    $region79: #{tpu_custom_call.1} parent=1 // pred_check_branch
      %933 = sbr.rel (%p931) target = $region81
    $region80: #{tpu_custom_call.1} parent=1 // pred_region
      %s934 = scalar_lea.vmem [#allocation5], 40
      %v935 = vld [vmem:[%s934] sm:$0xf]
      %v936 = vld [vmem:[%s934 + $0x4] sm:$0xf]
      %v937 = vld [vmem:[#allocation2] sm:$0x1]
      %v938 = vld [vmem:[#allocation2 + $0x1] sm:$0x1]
      %v939 = vld [vmem:[#allocation2 + $0x2] sm:$0x1]
      %v940 = vld [vmem:[#allocation2 + $0x3] sm:$0x1]
      %v941 = vld [vmem:[#allocation2 + $0x4] sm:$0x1]
      %v942 = vpack.c.bf16 %v941, %v941
      %v945 = vunpack.c.l.b16 %v935
      %v946 = vunpack.c.l.b16 %v936
      %v947 = vpack.c.b16 %v946, %v945
      %949 = vmatprep.subr.bf16.mxu0 0
      %950 = vmatpush1.bf16.xpose.msra.mxu0 0
      %951 = vmatprep.subr.bf16.mxu0 0
      %952 = vmatpush1.bf16.xpose.msra.mxu0 0
      %953 = vmatprep.subr.bf16.mxu0 0
      %954 = vmatpush1.bf16.xpose.msra.mxu0 0
      %955 = vmatprep.subr.bf16.mxu0 0
      %956 = vmatpush1.bf16.xpose.msra.mxu0 0
      %957 = vmatprep.subr.bf16.mxu0 0
      %958 = vmatpush1.bf16.xpose.msra.mxu0 0
      %959 = vmatprep.subr.bf16.mxu0 0
      %960 = vmatpush1.bf16.xpose.msra.mxu0 0
      %961 = vmatprep.subr.bf16.mxu0 0
      %962 = vmatpush1.bf16.xpose.msra.mxu0 0
      %963 = vmatprep.subr.bf16.mxu0 0
      %964 = vmatpush1.bf16.xpose.msra.mxu0 %v947
      %965 = vmatprep.subr.bf16.mxu0 0
      %966 = vmatpush2.bf16.xpose.msra.mxu0 0
      %967 = vmatprep.subr.bf16.mxu0 0
      %968 = vmatpush2.bf16.xpose.msra.mxu0 0
      %969 = vmatprep.subr.bf16.mxu0 0
      %970 = vmatpush2.bf16.xpose.msra.mxu0 0
      %971 = vmatprep.subr.bf16.mxu0 0
      %972 = vmatpush2.bf16.xpose.msra.mxu0 0
      %973 = vmatprep.subr.bf16.mxu0 0
      %974 = vmatpush2.bf16.xpose.msra.mxu0 0
      %975 = vmatprep.subr.bf16.mxu0 0
      %976 = vmatpush2.bf16.xpose.msra.mxu0 0
      %977 = vmatprep.subr.bf16.mxu0 0
      %978 = vmatpush2.bf16.xpose.msra.mxu0 0
      %979 = vmatprep.subr.bf16.mxu0 0
      %980 = vmatpush2.bf16.xpose.msra.mxu0 0
      %981 = vmatprep.mubr.bf16.mxu0 0
      %982 = vmatmul.mubr.bf16.gmra.mxu0 %v942
      %v983 = vpop.f32.mrf.mxu0
      %v984 = vadd.f32 0.0, %v983
      %v985 = vpop.f32.mrf.mxu0
      %v986 = vpop.f32.mrf.mxu0
      %v987 = vpop.f32.mrf.mxu0
      %988 = vdwg.mxu0
      %v989 = vpack.c.bf16 %v984, %v984
      %vm990 = vcmask 130048
      %v992 = vsel %vm990, %v989, 0
      %994 = vmatprep.subr.bf16.mxu0 0
      %995 = vmatpush1.bf16.msra.mxu0 0
      %996 = vmatprep.subr.bf16.mxu0 0
      %997 = vmatpush1.bf16.msra.mxu0 0
      %998 = vmatprep.subr.bf16.mxu0 0
      %999 = vmatpush1.bf16.msra.mxu0 0
      %1000 = vmatprep.subr.bf16.mxu0 0
      %1001 = vmatpush1.bf16.msra.mxu0 0
      %1002 = vmatprep.subr.bf16.mxu0 0
      %1003 = vmatpush1.bf16.msra.mxu0 0
      %1004 = vmatprep.subr.bf16.mxu0 0
      %1005 = vmatpush1.bf16.msra.mxu0 0
      %1006 = vmatprep.subr.bf16.mxu0 0
      %1007 = vmatpush1.bf16.msra.mxu0 0
      %1008 = vmatprep.subr.bf16.mxu0 0
      %1009 = vmatpush1.bf16.msra.mxu0 %v947
      %1010 = vmatprep.subr.bf16.mxu0 0
      %1011 = vmatpush2.bf16.msra.mxu0 0
      %1012 = vmatprep.subr.bf16.mxu0 0
      %1013 = vmatpush2.bf16.msra.mxu0 0
      %1014 = vmatprep.subr.bf16.mxu0 0
      %1015 = vmatpush2.bf16.msra.mxu0 0
      %1016 = vmatprep.subr.bf16.mxu0 0
      %1017 = vmatpush2.bf16.msra.mxu0 0
      %1018 = vmatprep.subr.bf16.mxu0 0
      %1019 = vmatpush2.bf16.msra.mxu0 0
      %1020 = vmatprep.subr.bf16.mxu0 0
      %1021 = vmatpush2.bf16.msra.mxu0 0
      %1022 = vmatprep.subr.bf16.mxu0 0
      %1023 = vmatpush2.bf16.msra.mxu0 0
      %1024 = vmatprep.subr.bf16.mxu0 0
      %1025 = vmatpush2.bf16.msra.mxu0 0
      %1026 = vmatprep.mubr.bf16.mxu0 0
      %1027 = vmatmul.mubr.bf16.gmra.mxu0 %v992
      %v1028 = vpop.f32.mrf.mxu0
      %v1029 = vadd.f32 0.0, %v1028
      %v1030 = vpop.f32.mrf.mxu0
      %v1031 = vpop.f32.mrf.mxu0
      %v1032 = vpop.f32.mrf.mxu0
      %1033 = vdwg.mxu0
      %v1034 = vmul.f32 %v62, %v1029
      %v1035 = vmul.f32 %v63, %v941
      %v1036 = vsub.f32 %v937, %v1034
      %v1037 = vmax.f32 %v1036, 0.0
      %v1038 = vmin.f32 %v1037, 1.0
      %v1039 = vadd.f32 %v938, %v1034
      %v1040 = vsub.f32 %v1039, %v1035
      %v1041 = vmax.f32 %v1040, 0.0
      %v1042 = vmin.f32 %v1041, 1.0
      %v1043 = vadd.f32 %v939, %v1035
      %v1044 = vmax.f32 %v1043, 0.0
      %v1045 = vmin.f32 %v1044, 1.0
      %s1046 = scalar_lea.vmem [#allocation7], 10
      %v1047 = vld [vmem:[%s1046] sm:$0x3]
      %vm1048 = vcmp.gt.f32.partialorder %v940, 0.5
      %vm1049 = vcmp.gt.f32.partialorder %v941, 0.5
      %vm1050 = vcmp.lt.f32.partialorder %v1047, %v1042
      %vm1051 = vmand %vm1048, %vm1050
      %vm1052 = vcmp.lt.f32.partialorder %v1047, %v1045
      %vm1053 = vmand %vm1049, %vm1052
      %vm1054 = vcmp.lt.f32.partialorder %v1047, 0.5
      %v1055 = vsel %vm1054, 1, 0
      %v1056 = vrot.slane %v1055, 1
      %vm1057 = vcmp.ne.s32.totalorder %v1056, 0
      %vm1058 = vmand %vm1053, %vm1057
      %vm1059 = vmxor %vm1054, 1
      %v1060 = vsel %vm1059, 1, 0
      %v1061 = vrot.slane %v1060, 1
      %vm1062 = vcmp.ne.s32.totalorder %v1061, 0
      %vm1063 = vmand %vm1053, %vm1062
      %vm1064 = vmxor %vm1053, 1
      %vm1065 = vmand %vm1049, %vm1064
      %vm1066 = vmxor %vm1051, 1
      %vm1067 = vmand %vm1048, %vm1066
      %vm1068 = vmor %vm1067, %vm1063
      %vm1069 = vmor %vm1051, %vm1065
      %vm1070 = vmxor %vm1048, 1
      %vm1071 = vmxor %vm1049, 1
      %vm1072 = vmand %vm1070, %vm1071
      %vm1073 = vmor %vm1058, %vm1072
      %1074 = vst [vmem:[#allocation2] sm:$0x1] %v1038
      %1075 = vst [vmem:[#allocation2 + $0x1] sm:$0x1] %v1042
      %1076 = vst [vmem:[#allocation2 + $0x2] sm:$0x1] %v1045
      %v1077 = vsel %vm1068, 1, 0
      %v1078 = vcvt.s32.f32 %v1077
      %1079 = vst [vmem:[#allocation2 + $0x3] sm:$0x1] %v1078
      %v1080 = vsel %vm1069, 1, 0
      %v1081 = vcvt.s32.f32 %v1080
      %1082 = vst [vmem:[#allocation2 + $0x4] sm:$0x1] %v1081
      %v1083 = vsel %vm1073, 1, 0
      %v1084 = vcvt.s32.f32 %v1083
      %1085 = vst [vmem:[#allocation2 + $0x5] sm:$0x1] %v1084
      %v1086 = vld [vmem:[#allocation2] sm:$0x7]
      %s1087 = scalar_lea.vmem %s5, 20
      %1088 = vst [vmem:[%s1087] sm:$0x7] %v1086
      %v1089 = vld [vmem:[#allocation2 + $0x3] sm:$0x7]
      %s1090 = scalar_lea.vmem %s6, 20
      %1091 = vst [vmem:[%s1090] sm:$0x7] %v1089
    $region81: #{tpu_custom_call.1} parent=1 // pred_fallthru
      _
    %s1092 = sadd.s32 %s64, 6
    %p1093 = scmp.eq.s32.totalorder %s1092, 0
    // Predicated region
    $region82: #{tpu_custom_call.1} parent=1 // pred_check
      %p1094 = pneg %p1093
    $region83: #{tpu_custom_call.1} parent=1 // pred_check_branch
      %1096 = sbr.rel (%p1094) target = $region85
    $region84: #{tpu_custom_call.1} parent=1 // pred_region
      %v1097 = vld [vmem:[#allocation3] sm:$0x7]
      %1098 = vst [vmem:[#allocation2] sm:$0x7] %v1097
      %1099 = vst [vmem:[#allocation2 + $0x3] sm:$0x7] %v1097
      %1100 = vst [vmem:[%s5] sm:$0x7] %v1097
      %1101 = vst [vmem:[%s6] sm:$0x7] %v1097
    $region85: #{tpu_custom_call.1} parent=1 // pred_fallthru
      _
    %p1102 = scmp.gt.s32.totalorder %s1092, 0
    // Predicated region
    $region86: #{tpu_custom_call.1} parent=1 // pred_check
      %p1103 = pneg %p1102
    $region87: #{tpu_custom_call.1} parent=1 // pred_check_branch
      %1105 = sbr.rel (%p1103) target = $region89
    $region88: #{tpu_custom_call.1} parent=1 // pred_region
      %s1106 = scalar_lea.vmem [#allocation5], 48
      %v1107 = vld [vmem:[%s1106] sm:$0xf]
      %v1108 = vld [vmem:[%s1106 + $0x4] sm:$0xf]
      %v1109 = vld [vmem:[#allocation2] sm:$0x1]
      %v1110 = vld [vmem:[#allocation2 + $0x1] sm:$0x1]
      %v1111 = vld [vmem:[#allocation2 + $0x2] sm:$0x1]
      %v1112 = vld [vmem:[#allocation2 + $0x3] sm:$0x1]
      %v1113 = vld [vmem:[#allocation2 + $0x4] sm:$0x1]
      %v1114 = vpack.c.bf16 %v1113, %v1113
      %v1117 = vunpack.c.l.b16 %v1107
      %v1118 = vunpack.c.l.b16 %v1108
      %v1119 = vpack.c.b16 %v1118, %v1117
      %1121 = vmatprep.subr.bf16.mxu0 0
      %1122 = vmatpush1.bf16.xpose.msra.mxu0 0
      %1123 = vmatprep.subr.bf16.mxu0 0
      %1124 = vmatpush1.bf16.xpose.msra.mxu0 0
      %1125 = vmatprep.subr.bf16.mxu0 0
      %1126 = vmatpush1.bf16.xpose.msra.mxu0 0
      %1127 = vmatprep.subr.bf16.mxu0 0
      %1128 = vmatpush1.bf16.xpose.msra.mxu0 0
      %1129 = vmatprep.subr.bf16.mxu0 0
      %1130 = vmatpush1.bf16.xpose.msra.mxu0 0
      %1131 = vmatprep.subr.bf16.mxu0 0
      %1132 = vmatpush1.bf16.xpose.msra.mxu0 0
      %1133 = vmatprep.subr.bf16.mxu0 0
      %1134 = vmatpush1.bf16.xpose.msra.mxu0 0
      %1135 = vmatprep.subr.bf16.mxu0 0
      %1136 = vmatpush1.bf16.xpose.msra.mxu0 %v1119
      %1137 = vmatprep.subr.bf16.mxu0 0
      %1138 = vmatpush2.bf16.xpose.msra.mxu0 0
      %1139 = vmatprep.subr.bf16.mxu0 0
      %1140 = vmatpush2.bf16.xpose.msra.mxu0 0
      %1141 = vmatprep.subr.bf16.mxu0 0
      %1142 = vmatpush2.bf16.xpose.msra.mxu0 0
      %1143 = vmatprep.subr.bf16.mxu0 0
      %1144 = vmatpush2.bf16.xpose.msra.mxu0 0
      %1145 = vmatprep.subr.bf16.mxu0 0
      %1146 = vmatpush2.bf16.xpose.msra.mxu0 0
      %1147 = vmatprep.subr.bf16.mxu0 0
      %1148 = vmatpush2.bf16.xpose.msra.mxu0 0
      %1149 = vmatprep.subr.bf16.mxu0 0
      %1150 = vmatpush2.bf16.xpose.msra.mxu0 0
      %1151 = vmatprep.subr.bf16.mxu0 0
      %1152 = vmatpush2.bf16.xpose.msra.mxu0 0
      %1153 = vmatprep.mubr.bf16.mxu0 0
      %1154 = vmatmul.mubr.bf16.gmra.mxu0 %v1114
      %v1155 = vpop.f32.mrf.mxu0
      %v1156 = vadd.f32 0.0, %v1155
      %v1157 = vpop.f32.mrf.mxu0
      %v1158 = vpop.f32.mrf.mxu0
      %v1159 = vpop.f32.mrf.mxu0
      %1160 = vdwg.mxu0
      %v1161 = vpack.c.bf16 %v1156, %v1156
      %vm1162 = vcmask 130048
      %v1164 = vsel %vm1162, %v1161, 0
      %1166 = vmatprep.subr.bf16.mxu0 0
      %1167 = vmatpush1.bf16.msra.mxu0 0
      %1168 = vmatprep.subr.bf16.mxu0 0
      %1169 = vmatpush1.bf16.msra.mxu0 0
      %1170 = vmatprep.subr.bf16.mxu0 0
      %1171 = vmatpush1.bf16.msra.mxu0 0
      %1172 = vmatprep.subr.bf16.mxu0 0
      %1173 = vmatpush1.bf16.msra.mxu0 0
      %1174 = vmatprep.subr.bf16.mxu0 0
      %1175 = vmatpush1.bf16.msra.mxu0 0
      %1176 = vmatprep.subr.bf16.mxu0 0
      %1177 = vmatpush1.bf16.msra.mxu0 0
      %1178 = vmatprep.subr.bf16.mxu0 0
      %1179 = vmatpush1.bf16.msra.mxu0 0
      %1180 = vmatprep.subr.bf16.mxu0 0
      %1181 = vmatpush1.bf16.msra.mxu0 %v1119
      %1182 = vmatprep.subr.bf16.mxu0 0
      %1183 = vmatpush2.bf16.msra.mxu0 0
      %1184 = vmatprep.subr.bf16.mxu0 0
      %1185 = vmatpush2.bf16.msra.mxu0 0
      %1186 = vmatprep.subr.bf16.mxu0 0
      %1187 = vmatpush2.bf16.msra.mxu0 0
      %1188 = vmatprep.subr.bf16.mxu0 0
      %1189 = vmatpush2.bf16.msra.mxu0 0
      %1190 = vmatprep.subr.bf16.mxu0 0
      %1191 = vmatpush2.bf16.msra.mxu0 0
      %1192 = vmatprep.subr.bf16.mxu0 0
      %1193 = vmatpush2.bf16.msra.mxu0 0
      %1194 = vmatprep.subr.bf16.mxu0 0
      %1195 = vmatpush2.bf16.msra.mxu0 0
      %1196 = vmatprep.subr.bf16.mxu0 0
      %1197 = vmatpush2.bf16.msra.mxu0 0
      %1198 = vmatprep.mubr.bf16.mxu0 0
      %1199 = vmatmul.mubr.bf16.gmra.mxu0 %v1164
      %v1200 = vpop.f32.mrf.mxu0
      %v1201 = vadd.f32 0.0, %v1200
      %v1202 = vpop.f32.mrf.mxu0
      %v1203 = vpop.f32.mrf.mxu0
      %v1204 = vpop.f32.mrf.mxu0
      %1205 = vdwg.mxu0
      %v1206 = vmul.f32 %v62, %v1201
      %v1207 = vmul.f32 %v63, %v1113
      %v1208 = vsub.f32 %v1109, %v1206
      %v1209 = vmax.f32 %v1208, 0.0
      %v1210 = vmin.f32 %v1209, 1.0
      %v1211 = vadd.f32 %v1110, %v1206
      %v1212 = vsub.f32 %v1211, %v1207
      %v1213 = vmax.f32 %v1212, 0.0
      %v1214 = vmin.f32 %v1213, 1.0
      %v1215 = vadd.f32 %v1111, %v1207
      %v1216 = vmax.f32 %v1215, 0.0
      %v1217 = vmin.f32 %v1216, 1.0
      %s1218 = scalar_lea.vmem [#allocation7], 12
      %v1219 = vld [vmem:[%s1218] sm:$0x3]
      %vm1220 = vcmp.gt.f32.partialorder %v1112, 0.5
      %vm1221 = vcmp.gt.f32.partialorder %v1113, 0.5
      %vm1222 = vcmp.lt.f32.partialorder %v1219, %v1214
      %vm1223 = vmand %vm1220, %vm1222
      %vm1224 = vcmp.lt.f32.partialorder %v1219, %v1217
      %vm1225 = vmand %vm1221, %vm1224
      %vm1226 = vcmp.lt.f32.partialorder %v1219, 0.5
      %v1227 = vsel %vm1226, 1, 0
      %v1228 = vrot.slane %v1227, 1
      %vm1229 = vcmp.ne.s32.totalorder %v1228, 0
      %vm1230 = vmand %vm1225, %vm1229
      %vm1231 = vmxor %vm1226, 1
      %v1232 = vsel %vm1231, 1, 0
      %v1233 = vrot.slane %v1232, 1
      %vm1234 = vcmp.ne.s32.totalorder %v1233, 0
      %vm1235 = vmand %vm1225, %vm1234
      %vm1236 = vmxor %vm1225, 1
      %vm1237 = vmand %vm1221, %vm1236
      %vm1238 = vmxor %vm1223, 1
      %vm1239 = vmand %vm1220, %vm1238
      %vm1240 = vmor %vm1239, %vm1235
      %vm1241 = vmor %vm1223, %vm1237
      %vm1242 = vmxor %vm1220, 1
      %vm1243 = vmxor %vm1221, 1
      %vm1244 = vmand %vm1242, %vm1243
      %vm1245 = vmor %vm1230, %vm1244
      %1246 = vst [vmem:[#allocation2] sm:$0x1] %v1210
      %1247 = vst [vmem:[#allocation2 + $0x1] sm:$0x1] %v1214
      %1248 = vst [vmem:[#allocation2 + $0x2] sm:$0x1] %v1217
      %v1249 = vsel %vm1240, 1, 0
      %v1250 = vcvt.s32.f32 %v1249
      %1251 = vst [vmem:[#allocation2 + $0x3] sm:$0x1] %v1250
      %v1252 = vsel %vm1241, 1, 0
      %v1253 = vcvt.s32.f32 %v1252
      %1254 = vst [vmem:[#allocation2 + $0x4] sm:$0x1] %v1253
      %v1255 = vsel %vm1245, 1, 0
      %v1256 = vcvt.s32.f32 %v1255
      %1257 = vst [vmem:[#allocation2 + $0x5] sm:$0x1] %v1256
      %v1258 = vld [vmem:[#allocation2] sm:$0x7]
      %s1259 = scalar_lea.vmem %s5, 24
      %1260 = vst [vmem:[%s1259] sm:$0x7] %v1258
      %v1261 = vld [vmem:[#allocation2 + $0x3] sm:$0x7]
      %s1262 = scalar_lea.vmem %s6, 24
      %1263 = vst [vmem:[%s1262] sm:$0x7] %v1261
    $region89: #{tpu_custom_call.1} parent=1 // pred_fallthru
      _
    %s1264 = sadd.s32 %s64, 7
    %p1265 = scmp.eq.s32.totalorder %s1264, 0
    // Predicated region
    $region90: #{tpu_custom_call.1} parent=1 // pred_check
      %p1266 = pneg %p1265
    $region91: #{tpu_custom_call.1} parent=1 // pred_check_branch
      %1268 = sbr.rel (%p1266) target = $region93
    $region92: #{tpu_custom_call.1} parent=1 // pred_region
      %v1269 = vld [vmem:[#allocation3] sm:$0x7]
      %1270 = vst [vmem:[#allocation2] sm:$0x7] %v1269
      %1271 = vst [vmem:[#allocation2 + $0x3] sm:$0x7] %v1269
      %1272 = vst [vmem:[%s5] sm:$0x7] %v1269
      %1273 = vst [vmem:[%s6] sm:$0x7] %v1269
    $region93: #{tpu_custom_call.1} parent=1 // pred_fallthru
      _
    %p1274 = scmp.gt.s32.totalorder %s1264, 0
    // Predicated region
    $region94: #{tpu_custom_call.1} parent=1 // pred_check
      %p1275 = pneg %p1274
    $region95: #{tpu_custom_call.1} parent=1 // pred_check_branch
      %1277 = sbr.rel (%p1275) target = $region97
    $region96: #{tpu_custom_call.1} parent=1 // pred_region
      %s1278 = scalar_lea.vmem [#allocation5], 56
      %v1279 = vld [vmem:[%s1278] sm:$0xf]
      %v1280 = vld [vmem:[%s1278 + $0x4] sm:$0xf]
      %v1281 = vld [vmem:[#allocation2] sm:$0x1]
      %v1282 = vld [vmem:[#allocation2 + $0x1] sm:$0x1]
      %v1283 = vld [vmem:[#allocation2 + $0x2] sm:$0x1]
      %v1284 = vld [vmem:[#allocation2 + $0x3] sm:$0x1]
      %v1285 = vld [vmem:[#allocation2 + $0x4] sm:$0x1]
      %v1286 = vpack.c.bf16 %v1285, %v1285
      %v1289 = vunpack.c.l.b16 %v1279
      %v1290 = vunpack.c.l.b16 %v1280
      %v1291 = vpack.c.b16 %v1290, %v1289
      %1293 = vmatprep.subr.bf16.mxu0 0
      %1294 = vmatpush1.bf16.xpose.msra.mxu0 0
      %1295 = vmatprep.subr.bf16.mxu0 0
      %1296 = vmatpush1.bf16.xpose.msra.mxu0 0
      %1297 = vmatprep.subr.bf16.mxu0 0
      %1298 = vmatpush1.bf16.xpose.msra.mxu0 0
      %1299 = vmatprep.subr.bf16.mxu0 0
      %1300 = vmatpush1.bf16.xpose.msra.mxu0 0
      %1301 = vmatprep.subr.bf16.mxu0 0
      %1302 = vmatpush1.bf16.xpose.msra.mxu0 0
      %1303 = vmatprep.subr.bf16.mxu0 0
      %1304 = vmatpush1.bf16.xpose.msra.mxu0 0
      %1305 = vmatprep.subr.bf16.mxu0 0
      %1306 = vmatpush1.bf16.xpose.msra.mxu0 0
      %1307 = vmatprep.subr.bf16.mxu0 0
      %1308 = vmatpush1.bf16.xpose.msra.mxu0 %v1291
      %1309 = vmatprep.subr.bf16.mxu0 0
      %1310 = vmatpush2.bf16.xpose.msra.mxu0 0
      %1311 = vmatprep.subr.bf16.mxu0 0
      %1312 = vmatpush2.bf16.xpose.msra.mxu0 0
      %1313 = vmatprep.subr.bf16.mxu0 0
      %1314 = vmatpush2.bf16.xpose.msra.mxu0 0
      %1315 = vmatprep.subr.bf16.mxu0 0
      %1316 = vmatpush2.bf16.xpose.msra.mxu0 0
      %1317 = vmatprep.subr.bf16.mxu0 0
      %1318 = vmatpush2.bf16.xpose.msra.mxu0 0
      %1319 = vmatprep.subr.bf16.mxu0 0
      %1320 = vmatpush2.bf16.xpose.msra.mxu0 0
      %1321 = vmatprep.subr.bf16.mxu0 0
      %1322 = vmatpush2.bf16.xpose.msra.mxu0 0
      %1323 = vmatprep.subr.bf16.mxu0 0
      %1324 = vmatpush2.bf16.xpose.msra.mxu0 0
      %1325 = vmatprep.mubr.bf16.mxu0 0
      %1326 = vmatmul.mubr.bf16.gmra.mxu0 %v1286
      %v1327 = vpop.f32.mrf.mxu0
      %v1328 = vadd.f32 0.0, %v1327
      %v1329 = vpop.f32.mrf.mxu0
      %v1330 = vpop.f32.mrf.mxu0
      %v1331 = vpop.f32.mrf.mxu0
      %1332 = vdwg.mxu0
      %v1333 = vpack.c.bf16 %v1328, %v1328
      %vm1334 = vcmask 130048
      %v1336 = vsel %vm1334, %v1333, 0
      %1338 = vmatprep.subr.bf16.mxu0 0
      %1339 = vmatpush1.bf16.msra.mxu0 0
      %1340 = vmatprep.subr.bf16.mxu0 0
      %1341 = vmatpush1.bf16.msra.mxu0 0
      %1342 = vmatprep.subr.bf16.mxu0 0
      %1343 = vmatpush1.bf16.msra.mxu0 0
      %1344 = vmatprep.subr.bf16.mxu0 0
      %1345 = vmatpush1.bf16.msra.mxu0 0
      %1346 = vmatprep.subr.bf16.mxu0 0
      %1347 = vmatpush1.bf16.msra.mxu0 0
      %1348 = vmatprep.subr.bf16.mxu0 0
      %1349 = vmatpush1.bf16.msra.mxu0 0
      %1350 = vmatprep.subr.bf16.mxu0 0
      %1351 = vmatpush1.bf16.msra.mxu0 0
      %1352 = vmatprep.subr.bf16.mxu0 0
      %1353 = vmatpush1.bf16.msra.mxu0 %v1291
      %1354 = vmatprep.subr.bf16.mxu0 0
      %1355 = vmatpush2.bf16.msra.mxu0 0
      %1356 = vmatprep.subr.bf16.mxu0 0
      %1357 = vmatpush2.bf16.msra.mxu0 0
      %1358 = vmatprep.subr.bf16.mxu0 0
      %1359 = vmatpush2.bf16.msra.mxu0 0
      %1360 = vmatprep.subr.bf16.mxu0 0
      %1361 = vmatpush2.bf16.msra.mxu0 0
      %1362 = vmatprep.subr.bf16.mxu0 0
      %1363 = vmatpush2.bf16.msra.mxu0 0
      %1364 = vmatprep.subr.bf16.mxu0 0
      %1365 = vmatpush2.bf16.msra.mxu0 0
      %1366 = vmatprep.subr.bf16.mxu0 0
      %1367 = vmatpush2.bf16.msra.mxu0 0
      %1368 = vmatprep.subr.bf16.mxu0 0
      %1369 = vmatpush2.bf16.msra.mxu0 0
      %1370 = vmatprep.mubr.bf16.mxu0 0
      %1371 = vmatmul.mubr.bf16.gmra.mxu0 %v1336
      %v1372 = vpop.f32.mrf.mxu0
      %v1373 = vadd.f32 0.0, %v1372
      %v1374 = vpop.f32.mrf.mxu0
      %v1375 = vpop.f32.mrf.mxu0
      %v1376 = vpop.f32.mrf.mxu0
      %1377 = vdwg.mxu0
      %v1378 = vmul.f32 %v62, %v1373
      %v1379 = vmul.f32 %v63, %v1285
      %v1380 = vsub.f32 %v1281, %v1378
      %v1381 = vmax.f32 %v1380, 0.0
      %v1382 = vmin.f32 %v1381, 1.0
      %v1383 = vadd.f32 %v1282, %v1378
      %v1384 = vsub.f32 %v1383, %v1379
      %v1385 = vmax.f32 %v1384, 0.0
      %v1386 = vmin.f32 %v1385, 1.0
      %v1387 = vadd.f32 %v1283, %v1379
      %v1388 = vmax.f32 %v1387, 0.0
      %v1389 = vmin.f32 %v1388, 1.0
      %s1390 = scalar_lea.vmem [#allocation7], 14
      %v1391 = vld [vmem:[%s1390] sm:$0x3]
      %vm1392 = vcmp.gt.f32.partialorder %v1284, 0.5
      %vm1393 = vcmp.gt.f32.partialorder %v1285, 0.5
      %vm1394 = vcmp.lt.f32.partialorder %v1391, %v1386
      %vm1395 = vmand %vm1392, %vm1394
      %vm1396 = vcmp.lt.f32.partialorder %v1391, %v1389
      %vm1397 = vmand %vm1393, %vm1396
      %vm1398 = vcmp.lt.f32.partialorder %v1391, 0.5
      %v1399 = vsel %vm1398, 1, 0
      %v1400 = vrot.slane %v1399, 1
      %vm1401 = vcmp.ne.s32.totalorder %v1400, 0
      %vm1402 = vmand %vm1397, %vm1401
      %vm1403 = vmxor %vm1398, 1
      %v1404 = vsel %vm1403, 1, 0
      %v1405 = vrot.slane %v1404, 1
      %vm1406 = vcmp.ne.s32.totalorder %v1405, 0
      %vm1407 = vmand %vm1397, %vm1406
      %vm1408 = vmxor %vm1397, 1
      %vm1409 = vmand %vm1393, %vm1408
      %vm1410 = vmxor %vm1395, 1
      %vm1411 = vmand %vm1392, %vm1410
      %vm1412 = vmor %vm1411, %vm1407
      %vm1413 = vmor %vm1395, %vm1409
      %vm1414 = vmxor %vm1392, 1
      %vm1415 = vmxor %vm1393, 1
      %vm1416 = vmand %vm1414, %vm1415
      %vm1417 = vmor %vm1402, %vm1416
      %1418 = vst [vmem:[#allocation2] sm:$0x1] %v1382
      %1419 = vst [vmem:[#allocation2 + $0x1] sm:$0x1] %v1386
      %1420 = vst [vmem:[#allocation2 + $0x2] sm:$0x1] %v1389
      %v1421 = vsel %vm1412, 1, 0
      %v1422 = vcvt.s32.f32 %v1421
      %1423 = vst [vmem:[#allocation2 + $0x3] sm:$0x1] %v1422
      %v1424 = vsel %vm1413, 1, 0
      %v1425 = vcvt.s32.f32 %v1424
      %1426 = vst [vmem:[#allocation2 + $0x4] sm:$0x1] %v1425
      %v1427 = vsel %vm1417, 1, 0
      %v1428 = vcvt.s32.f32 %v1427
      %1429 = vst [vmem:[#allocation2 + $0x5] sm:$0x1] %v1428
      %v1430 = vld [vmem:[#allocation2] sm:$0x7]
      %s1431 = scalar_lea.vmem %s5, 28
      %1432 = vst [vmem:[%s1431] sm:$0x7] %v1430
      %v1433 = vld [vmem:[#allocation2 + $0x3] sm:$0x7]
      %s1434 = scalar_lea.vmem %s6, 28
      %1435 = vst [vmem:[%s1434] sm:$0x7] %v1433
    $region97: #{tpu_custom_call.1} parent=1 // pred_fallthru
      _
    // Predicated region
    $region98: #{tpu_custom_call.1} parent=1 // pred_check
      _
    $region99: #{tpu_custom_call.1} parent=1 // pred_check_branch
      %1437 = sbr.rel (0) target = $region101
    $region100: #{tpu_custom_call.1} parent=1 // pred_region
      _
    $region101: #{tpu_custom_call.1} parent=1 // pred_fallthru
      _
    // Predicated region
    $region102: #{tpu_custom_call.1} parent=1 // pred_check
      _
    $region103: #{tpu_custom_call.1} parent=1 // pred_check_branch
      %1439 = sbr.rel (0) target = $region105
    $region104: #{tpu_custom_call.1} parent=1 // pred_region
      _
    $region105: #{tpu_custom_call.1} parent=1 // pred_fallthru
      _
    // Predicated region
    $region106: #{tpu_custom_call.1} parent=1 // pred_check
      _
    $region107: #{tpu_custom_call.1} parent=1 // pred_check_branch
      %1441 = sbr.rel (0) target = $region109
    $region108: #{tpu_custom_call.1} parent=1 // pred_region
      _
    $region109: #{tpu_custom_call.1} parent=1 // pred_fallthru
      _
    // Predicated region
    $region110: #{tpu_custom_call.1} parent=1 // pred_check
      _
    $region111: #{tpu_custom_call.1} parent=1 // pred_check_branch
      %1443 = sbr.rel (0) target = $region113
    $region112: #{tpu_custom_call.1} parent=1 // pred_region
      _
    $region113: #{tpu_custom_call.1} parent=1 // pred_fallthru
      _
    %1444 = vsyncpa [#allocation4], 1
    %1445 = vsyncpa [#allocation6], 1

</llo_original>
